<compile_context>
chip_gen: v7x
topology: tpu7x:2x2x1
jax: 0.10.0
libtpu: 0.0.40
codegen_flags: <defaults>
</compile_context>

<pallas_src>
import numpy as np
import jax
import jax.numpy as jnp
from jax import lax
from jax.experimental import pallas as pl
from jax.experimental.pallas import tpu as pltpu

EPS = 1e-5
LANE = 128


# ----------------------------------------------------------------------------- kernel
def _make_skconv_kernel(M, B, Cp, Ho, Wo, tap_tables):
    """Fused SKConv kernel, single program over the whole (small) batch.

    Ref order (inputs, output, scratch):
      x_ph   (B, s*s, Hs, Ws, Cp)          phase planes of the padded input
      w_cat[m] (Km*Km*Cp, Cp)              tap-concatenated dense conv weights
      (bn_scale, bn_shift)[m]  (1, Cp)     BN affine with conv bias folded in
      fc_w (Cp, dp), fc_b (1, dp)          squeeze FC
      att_w (dp, M*Cp), att_b (1, M*Cp)    fused per-branch attention heads
      out (B*Ho*Wo, Cp)
      feas_scratch (M, B*Ho*Wo, Cp) f32    per-branch activations (VMEM)
    """
    P = Ho * Wo
    R = B * P  # total output rows (row index = b*P + oh*Wo + ow)

    def kernel(*refs):
        x_ref = refs[0]
        w_refs = refs[1:1 + M]
        bn_refs = refs[1 + M:1 + 3 * M]
        fcw_ref, fcb_ref, aw_ref, ab_ref, out_ref, feas_ref = refs[1 + 3 * M:]

        # ---- pass 1: per-branch conv as ONE tap-concatenated matmul, + BN(eval)
        #      affine (conv bias pre-folded) + ReLU, stored into VMEM scratch.
        for m in range(M):
            lhs_parts = []
            for (pp, qh, qw) in tap_tables[m]:
                chunk = x_ref[:, pp, qh:qh + Ho, qw:qw + Wo, :]   # (B, Ho, Wo, Cp)
                lhs_parts.append(chunk.reshape(R, Cp))
            lhs = jnp.concatenate(lhs_parts, axis=-1)              # (R, K*K*Cp)
            acc = jnp.dot(lhs, w_refs[m][...],
                          preferred_element_type=jnp.float32)      # (R, Cp) f32
            scale = bn_refs[2 * m][...]                            # (1, Cp)
            shift = bn_refs[2 * m + 1][...]                        # (1, Cp)
            feas_ref[m, ...] = jnp.maximum(acc * scale + shift, 0.0)

        # ---- pass 2: pooled squeeze (batched over B), attention, weighted sum.
        fea_U = feas_ref[0, ...]
        for m in range(1, M):
            fea_U = fea_U + feas_ref[m, ...]                       # (R, Cp)

        # global average pool per batch element -> (B, Cp)
        pooled = [jnp.sum(fea_U[b * P:(b + 1) * P, :], axis=0, keepdims=True)
                  for b in range(B)]
        fea_s = jnp.concatenate(pooled, axis=0) * (1.0 / float(P))

        # squeeze FC + fused attention heads, batched over B
        fea_z = jnp.dot(fea_s, fcw_ref[...],
                        preferred_element_type=jnp.float32) + fcb_ref[...]     # (B, dp)
        logits = jnp.dot(fea_z, aw_ref[...],
                         preferred_element_type=jnp.float32) + ab_ref[...]     # (B, M*Cp)

        # softmax over the branch dimension (exact reciprocal)
        lg = [logits[:, m * Cp:(m + 1) * Cp] for m in range(M)]
        lmax = lg[0]
        for m in range(1, M):
            lmax = jnp.maximum(lmax, lg[m])
        exps = [jnp.exp(v - lmax) for v in lg]
        denom = exps[0]
        for m in range(1, M):
            denom = denom + exps[m]
        atts = [e / denom for e in exps]                           # (B, Cp) each

        # fea_v = sum_m feas_m * att_m (per-batch row broadcast over P rows),
        # assembled into one (R, Cp) block and stored with a single lane-dense store.
        rows = []
        for b in range(B):
            acc = feas_ref[0, b * P:(b + 1) * P, :] * atts[0][b:b + 1, :]
            for m in range(1, M):
                acc = acc + feas_ref[m, b * P:(b + 1) * P, :] * atts[m][b:b + 1, :]
            rows.append(acc)
        out_ref[...] = jnp.concatenate(rows, axis=0)

    return kernel


# ----------------------------------------------------------------------------- wrapper
def skconv_forward(x, params, *, M, G, stride, mm_dtype=jnp.bfloat16):
    B, C, H, W = x.shape
    s = stride
    Ho = (H - 1) // s + 1          # identical for every branch
    Wo = (W - 1) // s + 1
    P = Ho * Wo
    R = B * P

    Cp = -(-C // LANE) * LANE                      # lane-padded channel dim
    d = params["fc_w"].shape[0]
    dp = -(-d // LANE) * LANE

    # --- one NHWC transpose + ONE pad (conv halo, phase alignment, lane pad),
    #     then a pure re-layout into s*s phase planes (no im2col duplication).
    Ppad = M                                        # max over branches of pad_m = 1 + m
    Hp, Wp = H + 2 * Ppad, W + 2 * Ppad
    Hs, Ws = -(-Hp // s), -(-Wp // s)
    xh = jnp.transpose(x, (0, 2, 3, 1))                              # (B, H, W, C)
    xh = jnp.pad(xh, ((0, 0),
                      (Ppad, Ppad + Hs * s - Hp),
                      (Ppad, Ppad + Ws * s - Wp),
                      (0, Cp - C)))                                  # (B, Hs*s, Ws*s, Cp)
    xph = xh.reshape(B, Hs, s, Ws, s, Cp)
    xph = jnp.transpose(xph, (0, 2, 4, 1, 3, 5)).reshape(B, s * s, Hs, Ws, Cp)
    xph = xph.astype(mm_dtype)

    # --- per-branch weights: block-diagonal dense embedding of the grouped conv
    #     (fine while C is tiny), tap-concatenated RHS, folded conv-bias / BN
    #     affine, and the tap table used inside the kernel.
    w_args, bn_args, tap_tables = [], [], []
    Cg = C // G
    for m in range(M):
        K = 3 + 2 * m
        pad_m = 1 + m
        off = Ppad - pad_m
        wg = params["conv_w"][m]                                     # (C, C//G, K, K)
        w = jnp.zeros((C, C, K, K), jnp.float32)
        for g in range(G):
            w = w.at[g * Cg:(g + 1) * Cg, g * Cg:(g + 1) * Cg].set(
                wg[g * Cg:(g + 1) * Cg])
        # (C_out, C_in, K, K) -> (K*K, C_in, C_out), tap index t = kh*K + kw;
        # zero-pad channels to Cp and stack taps along the contraction axis.
        w_taps = jnp.transpose(w, (2, 3, 1, 0)).reshape(K * K, C, C)
        w_pad = jnp.zeros((K * K, Cp, Cp), jnp.float32).at[:, :C, :C].set(w_taps)
        w_args.append(w_pad.reshape(K * K * Cp, Cp).astype(mm_dtype))

        scale = params["bn_gamma"][m] / jnp.sqrt(params["bn_var"][m] + EPS)
        shift = (params["bn_beta"][m]
                 + scale * (params["conv_b"][m] - params["bn_mean"][m]))
        bn_args += [jnp.zeros((1, Cp), jnp.float32).at[0, :C].set(scale),
                    jnp.zeros((1, Cp), jnp.float32).at[0, :C].set(shift)]

        taps = []
        for kh in range(K):
            for kw in range(K):
                r, c = off + kh, off + kw
                taps.append(((r % s) * s + (c % s), r // s, c // s))
        tap_tables.append(tuple(taps))

    # squeeze FC + fused attention heads, lane-padded (padded rows/cols are zero,
    # so padded output channels stay exactly zero and are cropped on the host).
    fc_w = jnp.zeros((Cp, dp), jnp.float32).at[:C, :d].set(
        jnp.transpose(params["fc_w"]))
    fc_b = jnp.zeros((1, dp), jnp.float32).at[0, :d].set(params["fc_b"])
    att_w = jnp.zeros((dp, M * Cp), jnp.float32)
    att_b = jnp.zeros((1, M * Cp), jnp.float32)
    for m in range(M):
        att_w = att_w.at[:d, m * Cp:m * Cp + C].set(jnp.transpose(params["fcs_w"][m]))
        att_b = att_b.at[0, m * Cp:m * Cp + C].set(params["fcs_b"][m])

    args = [xph] + w_args + bn_args + [fc_w, fc_b, att_w, att_b]

    # Single program (no grid): at these sizes grid steps are pure overhead on
    # single-TC v5e/v6e and give v7x nothing to pipeline.  Everything is VMEM
    # resident; per-branch activations live in a VMEM scratch buffer.
    vmem = pltpu.MemorySpace.VMEM
    out = pl.pallas_call(
        _make_skconv_kernel(M, B, Cp, Ho, Wo, tap_tables),
        out_shape=jax.ShapeDtypeStruct((R, Cp), jnp.float32),
        in_specs=[pl.BlockSpec(memory_space=vmem) for _ in args],
        out_specs=pl.BlockSpec(memory_space=vmem),
        scratch_shapes=[pltpu.VMEM((M, R, Cp), jnp.float32)],
    )(*args)

    # (B*Ho*Wo, Cp) -> crop lane padding -> (B, C, Ho, Wo) to match the module.
    out = out.reshape(B, Ho, Wo, Cp)[..., :C]
    return jnp.transpose(out, (0, 3, 1, 2))


# ----------------------------------------------------------------------------- pure-JAX reference
def skconv_reference(x, params, *, M, G, stride):
    B, C, H, W = x.shape
    feas = []
    for m in range(M):
        pad = 1 + m
        y = lax.conv_general_dilated(
            x, params["conv_w"][m],
            window_strides=(stride, stride),
            padding=((pad, pad), (pad, pad)),
            dimension_numbers=("NCHW", "OIHW", "NCHW"),
            feature_group_count=G)
        y = y + params["conv_b"][m][None, :, None, None]
        scale = params["bn_gamma"][m] / jnp.sqrt(params["bn_var"][m] + EPS)
        shift = params["bn_beta"][m] - params["bn_mean"][m] * scale
        y = y * scale[None, :, None, None] + shift[None, :, None, None]
        feas.append(jnp.maximum(y, 0.0))
    feas = jnp.stack(feas, axis=1)                     # (B, M, C, Ho, Wo)
    fea_U = feas.sum(axis=1)
    fea_s = fea_U.mean(axis=(2, 3))                    # adaptive pool -> 1x1 + squeeze
    fea_z = fea_s @ params["fc_w"].T + params["fc_b"]
    vecs = [fea_z @ params["fcs_w"][m].T + params["fcs_b"][m] for m in range(M)]
    att = jax.nn.softmax(jnp.stack(vecs, axis=1), axis=1)      # (B, M, C)
    return (feas * att[:, :, :, None, None]).sum(axis=1)


# ----------------------------------------------------------------------------- main
if __name__ == "__main__":
    # SKConv(feature_dim=8, WH=3, M=2, G=2, r=2, stride=2, L=32)
    B, C, WH = 2, 8, 3
    M, G, r, stride, L = 2, 2, 2, 2, 32
    d = max(int(C / r), L)

    key = jax.random.PRNGKey(0)
    keys = iter(jax.random.split(key, 32))
    nxt = lambda: next(keys)

    x = jax.random.normal(nxt(), (B, C, WH, WH), jnp.float32)

    conv_w, conv_b = [], []
    bn_gamma, bn_beta, bn_mean, bn_var = [], [], [], []
    for m in range(M):
        K = 3 + 2 * m
        conv_w.append(0.2 * jax.random.normal(nxt(), (C, C // G, K, K), jnp.float32))
        conv_b.append(0.1 * jax.random.normal(nxt(), (C,), jnp.float32))
        bn_gamma.append(1.0 + 0.1 * jax.random.normal(nxt(), (C,), jnp.float32))
        bn_beta.append(0.05 * jax.random.normal(nxt(), (C,), jnp.float32))
        bn_mean.append(0.1 * jax.random.normal(nxt(), (C,), jnp.float32))
        bn_var.append(0.5 + jnp.abs(jax.random.normal(nxt(), (C,), jnp.float32)))

    params = dict(
        conv_w=conv_w, conv_b=conv_b,
        bn_gamma=bn_gamma, bn_beta=bn_beta, bn_mean=bn_mean, bn_var=bn_var,
        fc_w=0.2 * jax.random.normal(nxt(), (d, C), jnp.float32),
        fc_b=0.1 * jax.random.normal(nxt(), (d,), jnp.float32),
        fcs_w=[0.2 * jax.random.normal(nxt(), (C, d), jnp.float32) for _ in range(M)],
        fcs_b=[0.1 * jax.random.normal(nxt(), (C,), jnp.float32) for _ in range(M)],
    )

    ref = jax.block_until_ready(skconv_reference(x, params, M=M, G=G, stride=stride))

    # accuracy gate 1: exact f32 operand path (exact softmax reciprocal).
    out_f32 = jax.block_until_ready(
        skconv_forward(x, params, M=M, G=G, stride=stride, mm_dtype=jnp.float32))
    assert out_f32.shape == ref.shape, (out_f32.shape, ref.shape)
    np.testing.assert_allclose(np.asarray(out_f32), np.asarray(ref),
                               rtol=2e-3, atol=2e-3)

    # accuracy gate 2: bf16 MXU-operand path (f32 accumulation / BN / softmax).
    out_bf16 = jax.block_until_ready(
        skconv_forward(x, params, M=M, G=G, stride=stride, mm_dtype=jnp.bfloat16))
    np.testing.assert_allclose(np.asarray(out_bf16), np.asarray(ref),
                               rtol=3e-2, atol=3e-2)

    print("KERNEL_OK")
</pallas_src>

<mosaic_0001>
module attributes {stable_mosaic.version = 11 : i64} {
  func.func @kernel(%arg0: memref<2x4x4x4x128xf32, #tpu.memory_space<vmem>>, %arg1: memref<1152x128xf32, #tpu.memory_space<vmem>>, %arg2: memref<3200x128xf32, #tpu.memory_space<vmem>>, %arg3: memref<1x128xf32, #tpu.memory_space<vmem>>, %arg4: memref<1x128xf32, #tpu.memory_space<vmem>>, %arg5: memref<1x128xf32, #tpu.memory_space<vmem>>, %arg6: memref<1x128xf32, #tpu.memory_space<vmem>>, %arg7: memref<128x128xf32, #tpu.memory_space<vmem>>, %arg8: memref<1x128xf32, #tpu.memory_space<vmem>>, %arg9: memref<128x256xf32, #tpu.memory_space<vmem>>, %arg10: memref<1x256xf32, #tpu.memory_space<vmem>>, %arg11: memref<8x128xf32, #tpu.memory_space<vmem>>, %arg12: memref<2x8x128xf32, #tpu.memory_space<vmem>>) attributes {dimension_semantics = [], scalar_prefetch = 0 : i64, scratch_operands = 1 : i64, tpu.core_type = #tpu.core_type<tc>} {
    %c0 = arith.constant 0 : index
    %c3 = arith.constant 3 : index
    %c0_0 = arith.constant 0 : index
    %c0_1 = arith.constant 0 : index
    %c0_2 = arith.constant 0 : index
    %0 = vector.load %arg0[%c0, %c3, %c0_0, %c0_1, %c0_2] : memref<2x4x4x4x128xf32, #tpu.memory_space<vmem>>, vector<2x1x2x2x128xf32>
    %1 = vector.shape_cast %0 : vector<2x1x2x2x128xf32> to vector<2x2x2x128xf32>
    %2 = vector.shape_cast %1 : vector<2x2x2x128xf32> to vector<8x128xf32>
    %c0_3 = arith.constant 0 : index
    %c2 = arith.constant 2 : index
    %c0_4 = arith.constant 0 : index
    %c1 = arith.constant 1 : index
    %c0_5 = arith.constant 0 : index
    %3 = vector.load %arg0[%c0_3, %c2, %c0_4, %c1, %c0_5] : memref<2x4x4x4x128xf32, #tpu.memory_space<vmem>>, vector<2x1x2x2x128xf32>
    %4 = vector.shape_cast %3 : vector<2x1x2x2x128xf32> to vector<2x2x2x128xf32>
    %5 = vector.shape_cast %4 : vector<2x2x2x128xf32> to vector<8x128xf32>
    %c0_6 = arith.constant 0 : index
    %c3_7 = arith.constant 3 : index
    %c0_8 = arith.constant 0 : index
    %c1_9 = arith.constant 1 : index
    %c0_10 = arith.constant 0 : index
    %6 = vector.load %arg0[%c0_6, %c3_7, %c0_8, %c1_9, %c0_10] : memref<2x4x4x4x128xf32, #tpu.memory_space<vmem>>, vector<2x1x2x2x128xf32>
    %7 = vector.shape_cast %6 : vector<2x1x2x2x128xf32> to vector<2x2x2x128xf32>
    %8 = vector.shape_cast %7 : vector<2x2x2x128xf32> to vector<8x128xf32>
    %c0_11 = arith.constant 0 : index
    %c1_12 = arith.constant 1 : index
    %c1_13 = arith.constant 1 : index
    %c0_14 = arith.constant 0 : index
    %c0_15 = arith.constant 0 : index
    %9 = vector.load %arg0[%c0_11, %c1_12, %c1_13, %c0_14, %c0_15] : memref<2x4x4x4x128xf32, #tpu.memory_space<vmem>>, vector<2x1x2x2x128xf32>
    %10 = vector.shape_cast %9 : vector<2x1x2x2x128xf32> to vector<2x2x2x128xf32>
    %11 = vector.shape_cast %10 : vector<2x2x2x128xf32> to vector<8x128xf32>
    %c0_16 = arith.constant 0 : index
    %c0_17 = arith.constant 0 : index
    %c1_18 = arith.constant 1 : index
    %c1_19 = arith.constant 1 : index
    %c0_20 = arith.constant 0 : index
    %12 = vector.load %arg0[%c0_16, %c0_17, %c1_18, %c1_19, %c0_20] : memref<2x4x4x4x128xf32, #tpu.memory_space<vmem>>, vector<2x1x2x2x128xf32>
    %13 = vector.shape_cast %12 : vector<2x1x2x2x128xf32> to vector<2x2x2x128xf32>
    %14 = vector.shape_cast %13 : vector<2x2x2x128xf32> to vector<8x128xf32>
    %c0_21 = arith.constant 0 : index
    %c1_22 = arith.constant 1 : index
    %c1_23 = arith.constant 1 : index
    %c1_24 = arith.constant 1 : index
    %c0_25 = arith.constant 0 : index
    %15 = vector.load %arg0[%c0_21, %c1_22, %c1_23, %c1_24, %c0_25] : memref<2x4x4x4x128xf32, #tpu.memory_space<vmem>>, vector<2x1x2x2x128xf32>
    %16 = vector.shape_cast %15 : vector<2x1x2x2x128xf32> to vector<2x2x2x128xf32>
    %17 = vector.shape_cast %16 : vector<2x2x2x128xf32> to vector<8x128xf32>
    %c0_26 = arith.constant 0 : index
    %c3_27 = arith.constant 3 : index
    %c1_28 = arith.constant 1 : index
    %c0_29 = arith.constant 0 : index
    %c0_30 = arith.constant 0 : index
    %18 = vector.load %arg0[%c0_26, %c3_27, %c1_28, %c0_29, %c0_30] : memref<2x4x4x4x128xf32, #tpu.memory_space<vmem>>, vector<2x1x2x2x128xf32>
    %19 = vector.shape_cast %18 : vector<2x1x2x2x128xf32> to vector<2x2x2x128xf32>
    %20 = vector.shape_cast %19 : vector<2x2x2x128xf32> to vector<8x128xf32>
    %c0_31 = arith.constant 0 : index
    %c2_32 = arith.constant 2 : index
    %c1_33 = arith.constant 1 : index
    %c1_34 = arith.constant 1 : index
    %c0_35 = arith.constant 0 : index
    %21 = vector.load %arg0[%c0_31, %c2_32, %c1_33, %c1_34, %c0_35] : memref<2x4x4x4x128xf32, #tpu.memory_space<vmem>>, vector<2x1x2x2x128xf32>
    %22 = vector.shape_cast %21 : vector<2x1x2x2x128xf32> to vector<2x2x2x128xf32>
    %23 = vector.shape_cast %22 : vector<2x2x2x128xf32> to vector<8x128xf32>
    %c0_36 = arith.constant 0 : index
    %c3_37 = arith.constant 3 : index
    %c1_38 = arith.constant 1 : index
    %c1_39 = arith.constant 1 : index
    %c0_40 = arith.constant 0 : index
    %24 = vector.load %arg0[%c0_36, %c3_37, %c1_38, %c1_39, %c0_40] : memref<2x4x4x4x128xf32, #tpu.memory_space<vmem>>, vector<2x1x2x2x128xf32>
    %25 = vector.shape_cast %24 : vector<2x1x2x2x128xf32> to vector<2x2x2x128xf32>
    %26 = vector.shape_cast %25 : vector<2x2x2x128xf32> to vector<8x128xf32>
    %27 = tpu.concatenate %2, %5, %8, %11, %14, %17, %20, %23, %26 in 1 : vector<8x128xf32>, vector<8x128xf32>, vector<8x128xf32>, vector<8x128xf32>, vector<8x128xf32>, vector<8x128xf32>, vector<8x128xf32>, vector<8x128xf32>, vector<8x128xf32> -> vector<8x1152xf32>
    %c0_41 = arith.constant 0 : index
    %c0_42 = arith.constant 0 : index
    %28 = vector.load %arg1[%c0_41, %c0_42] : memref<1152x128xf32, #tpu.memory_space<vmem>>, vector<1152x128xf32>
    %cst = arith.constant dense<0.000000e+00> : vector<8x128xf32>
    %29 = tpu.matmul %27, %28, %cst {dimension_numbers = #tpu.dot_dimension_numbers<[1], [0], [0], [1], [0, 0, 1, 1], [], []>} : vector<8x1152xf32>, vector<1152x128xf32>, vector<8x128xf32> -> vector<8x128xf32>
    %c0_43 = arith.constant 0 : index
    %c0_44 = arith.constant 0 : index
    %30 = vector.load %arg3[%c0_43, %c0_44] : memref<1x128xf32, #tpu.memory_space<vmem>>, vector<1x128xf32>
    %c0_45 = arith.constant 0 : index
    %c0_46 = arith.constant 0 : index
    %31 = vector.load %arg4[%c0_45, %c0_46] : memref<1x128xf32, #tpu.memory_space<vmem>>, vector<1x128xf32>
    %32 = vector.broadcast %30 : vector<1x128xf32> to vector<8x128xf32>
    %33 = arith.mulf %29, %32 : vector<8x128xf32>
    %34 = vector.broadcast %31 : vector<1x128xf32> to vector<8x128xf32>
    %35 = arith.addf %33, %34 : vector<8x128xf32>
    %cst_47 = arith.constant 0.000000e+00 : f32
    %36 = vector.broadcast %cst_47 : f32 to vector<8x128xf32>
    %37 = arith.maximumf %35, %36 : vector<8x128xf32>
    %c0_48 = arith.constant 0 : index
    %c0_49 = arith.constant 0 : index
    %c0_50 = arith.constant 0 : index
    %38 = vector.load %arg12[%c0_48, %c0_49, %c0_50] : memref<2x8x128xf32, #tpu.memory_space<vmem>>, vector<1x8x128xf32>
    %39 = vector.shape_cast %38 : vector<1x8x128xf32> to vector<8x128xf32>
    %40 = vector.shape_cast %37 : vector<8x128xf32> to vector<1x8x128xf32>
    tpu.vector_store %arg12[%c0_48, %c0_49, %c0_50], %40 {strides = array<i32>} : memref<2x8x128xf32, #tpu.memory_space<vmem>>, vector<1x8x128xf32>,
    %c0_51 = arith.constant 0 : index
    %c0_52 = arith.constant 0 : index
    %c0_53 = arith.constant 0 : index
    %c0_54 = arith.constant 0 : index
    %c0_55 = arith.constant 0 : index
    %41 = vector.load %arg0[%c0_51, %c0_52, %c0_53, %c0_54, %c0_55] : memref<2x4x4x4x128xf32, #tpu.memory_space<vmem>>, vector<2x1x2x2x128xf32>
    %42 = vector.shape_cast %41 : vector<2x1x2x2x128xf32> to vector<2x2x2x128xf32>
    %43 = vector.shape_cast %42 : vector<2x2x2x128xf32> to vector<8x128xf32>
    %c0_56 = arith.constant 0 : index
    %c1_57 = arith.constant 1 : index
    %c0_58 = arith.constant 0 : index
    %c0_59 = arith.constant 0 : index
    %c0_60 = arith.constant 0 : index
    %44 = vector.load %arg0[%c0_56, %c1_57, %c0_58, %c0_59, %c0_60] : memref<2x4x4x4x128xf32, #tpu.memory_space<vmem>>, vector<2x1x2x2x128xf32>
    %45 = vector.shape_cast %44 : vector<2x1x2x2x128xf32> to vector<2x2x2x128xf32>
    %46 = vector.shape_cast %45 : vector<2x2x2x128xf32> to vector<8x128xf32>
    %c0_61 = arith.constant 0 : index
    %c0_62 = arith.constant 0 : index
    %c0_63 = arith.constant 0 : index
    %c1_64 = arith.constant 1 : index
    %c0_65 = arith.constant 0 : index
    %47 = vector.load %arg0[%c0_61, %c0_62, %c0_63, %c1_64, %c0_65] : memref<2x4x4x4x128xf32, #tpu.memory_space<vmem>>, vector<2x1x2x2x128xf32>
    %48 = vector.shape_cast %47 : vector<2x1x2x2x128xf32> to vector<2x2x2x128xf32>
    %49 = vector.shape_cast %48 : vector<2x2x2x128xf32> to vector<8x128xf32>
    %c0_66 = arith.constant 0 : index
    %c1_67 = arith.constant 1 : index
    %c0_68 = arith.constant 0 : index
    %c1_69 = arith.constant 1 : index
    %c0_70 = arith.constant 0 : index
    %50 = vector.load %arg0[%c0_66, %c1_67, %c0_68, %c1_69, %c0_70] : memref<2x4x4x4x128xf32, #tpu.memory_space<vmem>>, vector<2x1x2x2x128xf32>
    %51 = vector.shape_cast %50 : vector<2x1x2x2x128xf32> to vector<2x2x2x128xf32>
    %52 = vector.shape_cast %51 : vector<2x2x2x128xf32> to vector<8x128xf32>
    %c0_71 = arith.constant 0 : index
    %c0_72 = arith.constant 0 : index
    %c0_73 = arith.constant 0 : index
    %c2_74 = arith.constant 2 : index
    %c0_75 = arith.constant 0 : index
    %53 = vector.load %arg0[%c0_71, %c0_72, %c0_73, %c2_74, %c0_75] : memref<2x4x4x4x128xf32, #tpu.memory_space<vmem>>, vector<2x1x2x2x128xf32>
    %54 = vector.shape_cast %53 : vector<2x1x2x2x128xf32> to vector<2x2x2x128xf32>
    %55 = vector.shape_cast %54 : vector<2x2x2x128xf32> to vector<8x128xf32>
    %c0_76 = arith.constant 0 : index
    %c2_77 = arith.constant 2 : index
    %c0_78 = arith.constant 0 : index
    %c0_79 = arith.constant 0 : index
    %c0_80 = arith.constant 0 : index
    %56 = vector.load %arg0[%c0_76, %c2_77, %c0_78, %c0_79, %c0_80] : memref<2x4x4x4x128xf32, #tpu.memory_space<vmem>>, vector<2x1x2x2x128xf32>
    %57 = vector.shape_cast %56 : vector<2x1x2x2x128xf32> to vector<2x2x2x128xf32>
    %58 = vector.shape_cast %57 : vector<2x2x2x128xf32> to vector<8x128xf32>
    %c0_81 = arith.constant 0 : index
    %c3_82 = arith.constant 3 : index
    %c0_83 = arith.constant 0 : index
    %c0_84 = arith.constant 0 : index
    %c0_85 = arith.constant 0 : index
    %59 = vector.load %arg0[%c0_81, %c3_82, %c0_83, %c0_84, %c0_85] : memref<2x4x4x4x128xf32, #tpu.memory_space<vmem>>, vector<2x1x2x2x128xf32>
    %60 = vector.shape_cast %59 : vector<2x1x2x2x128xf32> to vector<2x2x2x128xf32>
    %61 = vector.shape_cast %60 : vector<2x2x2x128xf32> to vector<8x128xf32>
    %c0_86 = arith.constant 0 : index
    %c2_87 = arith.constant 2 : index
    %c0_88 = arith.constant 0 : index
    %c1_89 = arith.constant 1 : index
    %c0_90 = arith.constant 0 : index
    %62 = vector.load %arg0[%c0_86, %c2_87, %c0_88, %c1_89, %c0_90] : memref<2x4x4x4x128xf32, #tpu.memory_space<vmem>>, vector<2x1x2x2x128xf32>
    %63 = vector.shape_cast %62 : vector<2x1x2x2x128xf32> to vector<2x2x2x128xf32>
    %64 = vector.shape_cast %63 : vector<2x2x2x128xf32> to vector<8x128xf32>
    %c0_91 = arith.constant 0 : index
    %c3_92 = arith.constant 3 : index
    %c0_93 = arith.constant 0 : index
    %c1_94 = arith.constant 1 : index
    %c0_95 = arith.constant 0 : index
    %65 = vector.load %arg0[%c0_91, %c3_92, %c0_93, %c1_94, %c0_95] : memref<2x4x4x4x128xf32, #tpu.memory_space<vmem>>, vector<2x1x2x2x128xf32>
    %66 = vector.shape_cast %65 : vector<2x1x2x2x128xf32> to vector<2x2x2x128xf32>
    %67 = vector.shape_cast %66 : vector<2x2x2x128xf32> to vector<8x128xf32>
    %c0_96 = arith.constant 0 : index
    %c2_97 = arith.constant 2 : index
    %c0_98 = arith.constant 0 : index
    %c2_99 = arith.constant 2 : index
    %c0_100 = arith.constant 0 : index
    %68 = vector.load %arg0[%c0_96, %c2_97, %c0_98, %c2_99, %c0_100] : memref<2x4x4x4x128xf32, #tpu.memory_space<vmem>>, vector<2x1x2x2x128xf32>
    %69 = vector.shape_cast %68 : vector<2x1x2x2x128xf32> to vector<2x2x2x128xf32>
    %70 = vector.shape_cast %69 : vector<2x2x2x128xf32> to vector<8x128xf32>
    %c0_101 = arith.constant 0 : index
    %c0_102 = arith.constant 0 : index
    %c1_103 = arith.constant 1 : index
    %c0_104 = arith.constant 0 : index
    %c0_105 = arith.constant 0 : index
    %71 = vector.load %arg0[%c0_101, %c0_102, %c1_103, %c0_104, %c0_105] : memref<2x4x4x4x128xf32, #tpu.memory_space<vmem>>, vector<2x1x2x2x128xf32>
    %72 = vector.shape_cast %71 : vector<2x1x2x2x128xf32> to vector<2x2x2x128xf32>
    %73 = vector.shape_cast %72 : vector<2x2x2x128xf32> to vector<8x128xf32>
    %c0_106 = arith.constant 0 : index
    %c1_107 = arith.constant 1 : index
    %c1_108 = arith.constant 1 : index
    %c0_109 = arith.constant 0 : index
    %c0_110 = arith.constant 0 : index
    %74 = vector.load %arg0[%c0_106, %c1_107, %c1_108, %c0_109, %c0_110] : memref<2x4x4x4x128xf32, #tpu.memory_space<vmem>>, vector<2x1x2x2x128xf32>
    %75 = vector.shape_cast %74 : vector<2x1x2x2x128xf32> to vector<2x2x2x128xf32>
    %76 = vector.shape_cast %75 : vector<2x2x2x128xf32> to vector<8x128xf32>
    %c0_111 = arith.constant 0 : index
    %c0_112 = arith.constant 0 : index
    %c1_113 = arith.constant 1 : index
    %c1_114 = arith.constant 1 : index
    %c0_115 = arith.constant 0 : index
    %77 = vector.load %arg0[%c0_111, %c0_112, %c1_113, %c1_114, %c0_115] : memref<2x4x4x4x128xf32, #tpu.memory_space<vmem>>, vector<2x1x2x2x128xf32>
    %78 = vector.shape_cast %77 : vector<2x1x2x2x128xf32> to vector<2x2x2x128xf32>
    %79 = vector.shape_cast %78 : vector<2x2x2x128xf32> to vector<8x128xf32>
    %c0_116 = arith.constant 0 : index
    %c1_117 = arith.constant 1 : index
    %c1_118 = arith.constant 1 : index
    %c1_119 = arith.constant 1 : index
    %c0_120 = arith.constant 0 : index
    %80 = vector.load %arg0[%c0_116, %c1_117, %c1_118, %c1_119, %c0_120] : memref<2x4x4x4x128xf32, #tpu.memory_space<vmem>>, vector<2x1x2x2x128xf32>
    %81 = vector.shape_cast %80 : vector<2x1x2x2x128xf32> to vector<2x2x2x128xf32>
    %82 = vector.shape_cast %81 : vector<2x2x2x128xf32> to vector<8x128xf32>
    %c0_121 = arith.constant 0 : index
    %c0_122 = arith.constant 0 : index
    %c1_123 = arith.constant 1 : index
    %c2_124 = arith.constant 2 : index
    %c0_125 = arith.constant 0 : index
    %83 = vector.load %arg0[%c0_121, %c0_122, %c1_123, %c2_124, %c0_125] : memref<2x4x4x4x128xf32, #tpu.memory_space<vmem>>, vector<2x1x2x2x128xf32>
    %84 = vector.shape_cast %83 : vector<2x1x2x2x128xf32> to vector<2x2x2x128xf32>
    %85 = vector.shape_cast %84 : vector<2x2x2x128xf32> to vector<8x128xf32>
    %c0_126 = arith.constant 0 : index
    %c2_127 = arith.constant 2 : index
    %c1_128 = arith.constant 1 : index
    %c0_129 = arith.constant 0 : index
    %c0_130 = arith.constant 0 : index
    %86 = vector.load %arg0[%c0_126, %c2_127, %c1_128, %c0_129, %c0_130] : memref<2x4x4x4x128xf32, #tpu.memory_space<vmem>>, vector<2x1x2x2x128xf32>
    %87 = vector.shape_cast %86 : vector<2x1x2x2x128xf32> to vector<2x2x2x128xf32>
    %88 = vector.shape_cast %87 : vector<2x2x2x128xf32> to vector<8x128xf32>
    %c0_131 = arith.constant 0 : index
    %c3_132 = arith.constant 3 : index
    %c1_133 = arith.constant 1 : index
    %c0_134 = arith.constant 0 : index
    %c0_135 = arith.constant 0 : index
    %89 = vector.load %arg0[%c0_131, %c3_132, %c1_133, %c0_134, %c0_135] : memref<2x4x4x4x128xf32, #tpu.memory_space<vmem>>, vector<2x1x2x2x128xf32>
    %90 = vector.shape_cast %89 : vector<2x1x2x2x128xf32> to vector<2x2x2x128xf32>
    %91 = vector.shape_cast %90 : vector<2x2x2x128xf32> to vector<8x128xf32>
    %c0_136 = arith.constant 0 : index
    %c2_137 = arith.constant 2 : index
    %c1_138 = arith.constant 1 : index
    %c1_139 = arith.constant 1 : index
    %c0_140 = arith.constant 0 : index
    %92 = vector.load %arg0[%c0_136, %c2_137, %c1_138, %c1_139, %c0_140] : memref<2x4x4x4x128xf32, #tpu.memory_space<vmem>>, vector<2x1x2x2x128xf32>
    %93 = vector.shape_cast %92 : vector<2x1x2x2x128xf32> to vector<2x2x2x128xf32>
    %94 = vector.shape_cast %93 : vector<2x2x2x128xf32> to vector<8x128xf32>
    %c0_141 = arith.constant 0 : index
    %c3_142 = arith.constant 3 : index
    %c1_143 = arith.constant 1 : index
    %c1_144 = arith.constant 1 : index
    %c0_145 = arith.constant 0 : index
    %95 = vector.load %arg0[%c0_141, %c3_142, %c1_143, %c1_144, %c0_145] : memref<2x4x4x4x128xf32, #tpu.memory_space<vmem>>, vector<2x1x2x2x128xf32>
    %96 = vector.shape_cast %95 : vector<2x1x2x2x128xf32> to vector<2x2x2x128xf32>
    %97 = vector.shape_cast %96 : vector<2x2x2x128xf32> to vector<8x128xf32>
    %c0_146 = arith.constant 0 : index
    %c2_147 = arith.constant 2 : index
    %c1_148 = arith.constant 1 : index
    %c2_149 = arith.constant 2 : index
    %c0_150 = arith.constant 0 : index
    %98 = vector.load %arg0[%c0_146, %c2_147, %c1_148, %c2_149, %c0_150] : memref<2x4x4x4x128xf32, #tpu.memory_space<vmem>>, vector<2x1x2x2x128xf32>
    %99 = vector.shape_cast %98 : vector<2x1x2x2x128xf32> to vector<2x2x2x128xf32>
    %100 = vector.shape_cast %99 : vector<2x2x2x128xf32> to vector<8x128xf32>
    %c0_151 = arith.constant 0 : index
    %c0_152 = arith.constant 0 : index
    %c2_153 = arith.constant 2 : index
    %c0_154 = arith.constant 0 : index
    %c0_155 = arith.constant 0 : index
    %101 = vector.load %arg0[%c0_151, %c0_152, %c2_153, %c0_154, %c0_155] : memref<2x4x4x4x128xf32, #tpu.memory_space<vmem>>, vector<2x1x2x2x128xf32>
    %102 = vector.shape_cast %101 : vector<2x1x2x2x128xf32> to vector<2x2x2x128xf32>
    %103 = vector.shape_cast %102 : vector<2x2x2x128xf32> to vector<8x128xf32>
    %c0_156 = arith.constant 0 : index
    %c1_157 = arith.constant 1 : index
    %c2_158 = arith.constant 2 : index
    %c0_159 = arith.constant 0 : index
    %c0_160 = arith.constant 0 : index
    %104 = vector.load %arg0[%c0_156, %c1_157, %c2_158, %c0_159, %c0_160] : memref<2x4x4x4x128xf32, #tpu.memory_space<vmem>>, vector<2x1x2x2x128xf32>
    %105 = vector.shape_cast %104 : vector<2x1x2x2x128xf32> to vector<2x2x2x128xf32>
    %106 = vector.shape_cast %105 : vector<2x2x2x128xf32> to vector<8x128xf32>
    %c0_161 = arith.constant 0 : index
    %c0_162 = arith.constant 0 : index
    %c2_163 = arith.constant 2 : index
    %c1_164 = arith.constant 1 : index
    %c0_165 = arith.constant 0 : index
    %107 = vector.load %arg0[%c0_161, %c0_162, %c2_163, %c1_164, %c0_165] : memref<2x4x4x4x128xf32, #tpu.memory_space<vmem>>, vector<2x1x2x2x128xf32>
    %108 = vector.shape_cast %107 : vector<2x1x2x2x128xf32> to vector<2x2x2x128xf32>
    %109 = vector.shape_cast %108 : vector<2x2x2x128xf32> to vector<8x128xf32>
    %c0_166 = arith.constant 0 : index
    %c1_167 = arith.constant 1 : index
    %c2_168 = arith.constant 2 : index
    %c1_169 = arith.constant 1 : index
    %c0_170 = arith.constant 0 : index
    %110 = vector.load %arg0[%c0_166, %c1_167, %c2_168, %c1_169, %c0_170] : memref<2x4x4x4x128xf32, #tpu.memory_space<vmem>>, vector<2x1x2x2x128xf32>
    %111 = vector.shape_cast %110 : vector<2x1x2x2x128xf32> to vector<2x2x2x128xf32>
    %112 = vector.shape_cast %111 : vector<2x2x2x128xf32> to vector<8x128xf32>
    %c0_171 = arith.constant 0 : index
    %c0_172 = arith.constant 0 : index
    %c2_173 = arith.constant 2 : index
    %c2_174 = arith.constant 2 : index
    %c0_175 = arith.constant 0 : index
    %113 = vector.load %arg0[%c0_171, %c0_172, %c2_173, %c2_174, %c0_175] : memref<2x4x4x4x128xf32, #tpu.memory_space<vmem>>, vector<2x1x2x2x128xf32>
    %114 = vector.shape_cast %113 : vector<2x1x2x2x128xf32> to vector<2x2x2x128xf32>
    %115 = vector.shape_cast %114 : vector<2x2x2x128xf32> to vector<8x128xf32>
    %116 = tpu.concatenate %43, %46, %49, %52, %55, %58, %61, %64, %67, %70, %73, %76, %79, %82, %85, %88 in 1 : vector<8x128xf32>, vector<8x128xf32>, vector<8x128xf32>, vector<8x128xf32>, vector<8x128xf32>, vector<8x128xf32>, vector<8x128xf32>, vector<8x128xf32>, vector<8x128xf32>, vector<8x128xf32>, vector<8x128xf32>, vector<8x128xf32>, vector<8x128xf32>, vector<8x128xf32>, vector<8x128xf32>, vector<8x128xf32> -> vector<8x2048xf32>
    %117 = tpu.concatenate %91, %94, %97, %100, %103, %106, %109, %112, %115 in 1 : vector<8x128xf32>, vector<8x128xf32>, vector<8x128xf32>, vector<8x128xf32>, vector<8x128xf32>, vector<8x128xf32>, vector<8x128xf32>, vector<8x128xf32>, vector<8x128xf32> -> vector<8x1152xf32>
    %118 = tpu.concatenate %116, %117 in 1 : vector<8x2048xf32>, vector<8x1152xf32> -> vector<8x3200xf32>
    %c0_176 = arith.constant 0 : index
    %c0_177 = arith.constant 0 : index
    %119 = vector.load %arg2[%c0_176, %c0_177] : memref<3200x128xf32, #tpu.memory_space<vmem>>, vector<3200x128xf32>
    %cst_178 = arith.constant dense<0.000000e+00> : vector<8x128xf32>
    %120 = tpu.matmul %118, %119, %cst_178 {dimension_numbers = #tpu.dot_dimension_numbers<[1], [0], [0], [1], [0, 0, 1, 1], [], []>} : vector<8x3200xf32>, vector<3200x128xf32>, vector<8x128xf32> -> vector<8x128xf32>
    %c0_179 = arith.constant 0 : index
    %c0_180 = arith.constant 0 : index
    %121 = vector.load %arg5[%c0_179, %c0_180] : memref<1x128xf32, #tpu.memory_space<vmem>>, vector<1x128xf32>
    %c0_181 = arith.constant 0 : index
    %c0_182 = arith.constant 0 : index
    %122 = vector.load %arg6[%c0_181, %c0_182] : memref<1x128xf32, #tpu.memory_space<vmem>>, vector<1x128xf32>
    %123 = vector.broadcast %121 : vector<1x128xf32> to vector<8x128xf32>
    %124 = arith.mulf %120, %123 : vector<8x128xf32>
    %125 = vector.broadcast %122 : vector<1x128xf32> to vector<8x128xf32>
    %126 = arith.addf %124, %125 : vector<8x128xf32>
    %cst_183 = arith.constant 0.000000e+00 : f32
    %127 = vector.broadcast %cst_183 : f32 to vector<8x128xf32>
    %128 = arith.maximumf %126, %127 : vector<8x128xf32>
    %c1_184 = arith.constant 1 : index
    %c0_185 = arith.constant 0 : index
    %c0_186 = arith.constant 0 : index
    %129 = vector.load %arg12[%c1_184, %c0_185, %c0_186] : memref<2x8x128xf32, #tpu.memory_space<vmem>>, vector<1x8x128xf32>
    %130 = vector.shape_cast %129 : vector<1x8x128xf32> to vector<8x128xf32>
    %131 = vector.shape_cast %128 : vector<8x128xf32> to vector<1x8x128xf32>
    tpu.vector_store %arg12[%c1_184, %c0_185, %c0_186], %131 {strides = array<i32>} : memref<2x8x128xf32, #tpu.memory_space<vmem>>, vector<1x8x128xf32>,
    %c0_187 = arith.constant 0 : index
    %c0_188 = arith.constant 0 : index
    %c0_189 = arith.constant 0 : index
    %132 = vector.load %arg12[%c0_187, %c0_188, %c0_189] : memref<2x8x128xf32, #tpu.memory_space<vmem>>, vector<1x8x128xf32>
    %133 = vector.shape_cast %132 : vector<1x8x128xf32> to vector<8x128xf32>
    %c1_190 = arith.constant 1 : index
    %c0_191 = arith.constant 0 : index
    %c0_192 = arith.constant 0 : index
    %134 = vector.load %arg12[%c1_190, %c0_191, %c0_192] : memref<2x8x128xf32, #tpu.memory_space<vmem>>, vector<1x8x128xf32>
    %135 = vector.shape_cast %134 : vector<1x8x128xf32> to vector<8x128xf32>
    %136 = arith.addf %133, %135 : vector<8x128xf32>
    %137 = vector.extract_strided_slice %136 {offsets = [0, 0], sizes = [4, 128], strides = [1, 1]} : vector<8x128xf32> to vector<4x128xf32>
    %cst_193 = arith.constant dense<0.000000e+00> : vector<128xf32>
    %138 = vector.multi_reduction <add>, %137, %cst_193 [0] : vector<4x128xf32> to vector<128xf32>
    %139 = vector.shape_cast %138 : vector<128xf32> to vector<1x128xf32>
    %140 = vector.extract_strided_slice %136 {offsets = [4, 0], sizes = [4, 128], strides = [1, 1]} : vector<8x128xf32> to vector<4x128xf32>
    %cst_194 = arith.constant dense<0.000000e+00> : vector<128xf32>
    %141 = vector.multi_reduction <add>, %140, %cst_194 [0] : vector<4x128xf32> to vector<128xf32>
    %142 = vector.shape_cast %141 : vector<128xf32> to vector<1x128xf32>
    %143 = tpu.concatenate %139, %142 in 0 : vector<1x128xf32>, vector<1x128xf32> -> vector<2x128xf32>
    %cst_195 = arith.constant 2.500000e-01 : f32
    %144 = vector.broadcast %cst_195 : f32 to vector<2x128xf32>
    %145 = arith.mulf %143, %144 : vector<2x128xf32>
    %c0_196 = arith.constant 0 : index
    %c0_197 = arith.constant 0 : index
    %146 = vector.load %arg7[%c0_196, %c0_197] : memref<128x128xf32, #tpu.memory_space<vmem>>, vector<128x128xf32>
    %cst_198 = arith.constant dense<0.000000e+00> : vector<2x128xf32>
    %147 = tpu.matmul %145, %146, %cst_198 {dimension_numbers = #tpu.dot_dimension_numbers<[1], [0], [0], [1], [0, 0, 1, 1], [], []>} : vector<2x128xf32>, vector<128x128xf32>, vector<2x128xf32> -> vector<2x128xf32>
    %c0_199 = arith.constant 0 : index
    %c0_200 = arith.constant 0 : index
    %148 = vector.load %arg8[%c0_199, %c0_200] : memref<1x128xf32, #tpu.memory_space<vmem>>, vector<1x128xf32>
    %149 = vector.broadcast %148 : vector<1x128xf32> to vector<2x128xf32>
    %150 = arith.addf %147, %149 : vector<2x128xf32>
    %c0_201 = arith.constant 0 : index
    %c0_202 = arith.constant 0 : index
    %151 = vector.load %arg9[%c0_201, %c0_202] : memref<128x256xf32, #tpu.memory_space<vmem>>, vector<128x256xf32>
    %cst_203 = arith.constant dense<0.000000e+00> : vector<2x256xf32>
    %152 = tpu.matmul %150, %151, %cst_203 {dimension_numbers = #tpu.dot_dimension_numbers<[1], [0], [0], [1], [0, 0, 1, 1], [], []>} : vector<2x128xf32>, vector<128x256xf32>, vector<2x256xf32> -> vector<2x256xf32>
    %c0_204 = arith.constant 0 : index
    %c0_205 = arith.constant 0 : index
    %153 = vector.load %arg10[%c0_204, %c0_205] : memref<1x256xf32, #tpu.memory_space<vmem>>, vector<1x256xf32>
    %154 = vector.broadcast %153 : vector<1x256xf32> to vector<2x256xf32>
    %155 = arith.addf %152, %154 : vector<2x256xf32>
    %156 = vector.extract_strided_slice %155 {offsets = [0, 0], sizes = [2, 128], strides = [1, 1]} : vector<2x256xf32> to vector<2x128xf32>
    %157 = vector.extract_strided_slice %155 {offsets = [0, 128], sizes = [2, 128], strides = [1, 1]} : vector<2x256xf32> to vector<2x128xf32>
    %158 = arith.maximumf %156, %157 : vector<2x128xf32>
    %159 = arith.subf %156, %158 : vector<2x128xf32>
    %160 = math.exp %159 : vector<2x128xf32>
    %161 = arith.subf %157, %158 : vector<2x128xf32>
    %162 = math.exp %161 : vector<2x128xf32>
    %163 = arith.addf %160, %162 : vector<2x128xf32>
    %164 = arith.divf %160, %163 : vector<2x128xf32>
    %165 = arith.divf %162, %163 : vector<2x128xf32>
    %c0_206 = arith.constant 0 : index
    %c0_207 = arith.constant 0 : index
    %c0_208 = arith.constant 0 : index
    %166 = vector.load %arg12[%c0_206, %c0_207, %c0_208] : memref<2x8x128xf32, #tpu.memory_space<vmem>>, vector<1x4x128xf32>
    %167 = vector.shape_cast %166 : vector<1x4x128xf32> to vector<4x128xf32>
    %168 = vector.extract_strided_slice %164 {offsets = [0, 0], sizes = [1, 128], strides = [1, 1]} : vector<2x128xf32> to vector<1x128xf32>
    %169 = vector.broadcast %168 : vector<1x128xf32> to vector<4x128xf32>
    %170 = arith.mulf %167, %169 : vector<4x128xf32>
    %c1_209 = arith.constant 1 : index
    %c0_210 = arith.constant 0 : index
    %c0_211 = arith.constant 0 : index
    %171 = vector.load %arg12[%c1_209, %c0_210, %c0_211] : memref<2x8x128xf32, #tpu.memory_space<vmem>>, vector<1x4x128xf32>
    %172 = vector.shape_cast %171 : vector<1x4x128xf32> to vector<4x128xf32>
    %173 = vector.extract_strided_slice %165 {offsets = [0, 0], sizes = [1, 128], strides = [1, 1]} : vector<2x128xf32> to vector<1x128xf32>
    %174 = vector.broadcast %173 : vector<1x128xf32> to vector<4x128xf32>
    %175 = arith.mulf %172, %174 : vector<4x128xf32>
    %176 = arith.addf %170, %175 : vector<4x128xf32>
    %c0_212 = arith.constant 0 : index
    %c4 = arith.constant 4 : index
    %c0_213 = arith.constant 0 : index
    %177 = vector.load %arg12[%c0_212, %c4, %c0_213] : memref<2x8x128xf32, #tpu.memory_space<vmem>>, vector<1x4x128xf32>
    %178 = vector.shape_cast %177 : vector<1x4x128xf32> to vector<4x128xf32>
    %179 = vector.extract_strided_slice %164 {offsets = [1, 0], sizes = [1, 128], strides = [1, 1]} : vector<2x128xf32> to vector<1x128xf32>
    %180 = vector.broadcast %179 : vector<1x128xf32> to vector<4x128xf32>
    %181 = arith.mulf %178, %180 : vector<4x128xf32>
    %c1_214 = arith.constant 1 : index
    %c4_215 = arith.constant 4 : index
    %c0_216 = arith.constant 0 : index
    %182 = vector.load %arg12[%c1_214, %c4_215, %c0_216] : memref<2x8x128xf32, #tpu.memory_space<vmem>>, vector<1x4x128xf32>
    %183 = vector.shape_cast %182 : vector<1x4x128xf32> to vector<4x128xf32>
    %184 = vector.extract_strided_slice %165 {offsets = [1, 0], sizes = [1, 128], strides = [1, 1]} : vector<2x128xf32> to vector<1x128xf32>
    %185 = vector.broadcast %184 : vector<1x128xf32> to vector<4x128xf32>
    %186 = arith.mulf %183, %185 : vector<4x128xf32>
    %187 = arith.addf %181, %186 : vector<4x128xf32>
    %188 = tpu.concatenate %176, %187 in 0 : vector<4x128xf32>, vector<4x128xf32> -> vector<8x128xf32>
    %c0_217 = arith.constant 0 : index
    %c0_218 = arith.constant 0 : index
    %189 = vector.load %arg11[%c0_217, %c0_218] : memref<8x128xf32, #tpu.memory_space<vmem>>, vector<8x128xf32>
    tpu.vector_store %arg11[%c0_217, %c0_218], %188 {strides = array<i32>} : memref<8x128xf32, #tpu.memory_space<vmem>>, vector<8x128xf32>,
    return
  }
}

</mosaic_0001>

<llo_original>
// kernel: tpu_custom_call.1
$region0: #{tpu_custom_call.1}
  #allocation0 [shape = 'u32[]', space=smem, size = 0x4, offset = 0x4, fixed_abs, tag = 'smem constant byte address 0x4 - core index']
  #allocation1 [shape = 'u32[144,128]{1,0:T(1,128)}', space=vmem, size = 0x12000, scoped, tag = 'internal scratch']
  #allocation2 [shape = 'f32[2,8,128]{2,1,0:T(8,128)}', space=vmem, size = 0x2000, scoped, tag = 'scratch operand']
  %s0 = inlined_call_operand.hbm [shape: f32[2,4,4,4,128], index: 0, kind: input, shape index: {}]
  %s1 = inlined_call_operand.hbm [shape: f32[1152,128], index: 1, kind: input, shape index: {}]
  %s2 = inlined_call_operand.hbm [shape: f32[3200,128], index: 2, kind: input, shape index: {}]
  %s3 = inlined_call_operand.hbm [shape: f32[1,128], index: 3, kind: input, shape index: {}]
  %s4 = inlined_call_operand.hbm [shape: f32[1,128], index: 4, kind: input, shape index: {}]
  %s5 = inlined_call_operand.hbm [shape: f32[1,128], index: 5, kind: input, shape index: {}]
  %s6 = inlined_call_operand.hbm [shape: f32[1,128], index: 6, kind: input, shape index: {}]
  %s7 = inlined_call_operand.hbm [shape: f32[128,128], index: 7, kind: input, shape index: {}]
  %s8 = inlined_call_operand.hbm [shape: f32[1,128], index: 8, kind: input, shape index: {}]
  %s9 = inlined_call_operand.hbm [shape: f32[128,256], index: 9, kind: input, shape index: {}]
  %s10 = inlined_call_operand.hbm [shape: f32[1,256], index: 10, kind: input, shape index: {}]
  %s11 = inlined_call_operand.hbm [shape: f32[8,128], index: 11, kind: output, shape index: {}]
  %s12 = sld [smem:[#allocation0]]
  $region98: #{tpu_custom_call.1} parent=0
    _
  %s14 = ssub.s32 1, %s12
  %s15 = scalar_select 0, %s14, %s12
  $region1: #{tpu_custom_call.1} parent=0
    #allocation3 [shape = 'u8[65536]{0}', space=vmem, size = 0x10000, scoped, tag = 'input window, operand 0, single buffered']
    #allocation4 [shape = 's32[1]{0}', space=sflag, size = 0x4, scoped, tag = 'scoped memory for tpu_custom_call.1']
    #allocation5 [shape = 's32[1]{0}', space=sflag, size = 0x4, scoped, tag = 'scoped memory for tpu_custom_call.1']
    #allocation6 [shape = 'u8[589824]{0}', space=vmem, size = 0x90000, scoped, tag = 'input window, operand 1, single buffered']
    #allocation7 [shape = 's32[1]{0}', space=sflag, size = 0x4, scoped, tag = 'scoped memory for tpu_custom_call.1']
    #allocation8 [shape = 'u8[1638400]{0}', space=vmem, size = 0x190000, scoped, tag = 'input window, operand 2, single buffered']
    #allocation9 [shape = 'u8[512]{0}', space=vmem, size = 0x400, scoped, tag = 'input window, operand 3, single buffered']
    #allocation10 [shape = 's32[1]{0}', space=sflag, size = 0x4, scoped, tag = 'scoped memory for tpu_custom_call.1']
    #allocation11 [shape = 'u8[512]{0}', space=vmem, size = 0x400, scoped, tag = 'input window, operand 4, single buffered']
    #allocation12 [shape = 'u8[512]{0}', space=vmem, size = 0x400, scoped, tag = 'input window, operand 5, single buffered']
    #allocation13 [shape = 's32[1]{0}', space=sflag, size = 0x4, scoped, tag = 'scoped memory for tpu_custom_call.1']
    #allocation14 [shape = 'u8[512]{0}', space=vmem, size = 0x400, scoped, tag = 'input window, operand 6, single buffered']
    #allocation15 [shape = 'u8[65536]{0}', space=vmem, size = 0x10000, scoped, tag = 'input window, operand 7, single buffered']
    #allocation16 [shape = 's32[1]{0}', space=sflag, size = 0x4, scoped, tag = 'scoped memory for tpu_custom_call.1']
    #allocation17 [shape = 'u8[512]{0}', space=vmem, size = 0x400, scoped, tag = 'input window, operand 8, single buffered']
    #allocation18 [shape = 'u8[131072]{0}', space=vmem, size = 0x20000, scoped, tag = 'input window, operand 9, single buffered']
    #allocation19 [shape = 's32[1]{0}', space=sflag, size = 0x4, scoped, tag = 'scoped memory for tpu_custom_call.1']
    #allocation20 [shape = 'u8[1024]{0}', space=vmem, size = 0x400, scoped, tag = 'input window, operand 10, single buffered']
    #allocation21 [shape = 'u8[4096]{0}', space=vmem, size = 0x1000, scoped, tag = 'output window, operand 0, single buffered']
    %16 = vsyncpa [#allocation4], 0
    %17 = vsyncpa [#allocation7], 0
    %18 = vsyncpa [#allocation10], 0
    %19 = vsyncpa [#allocation13], 0
    %20 = vsyncpa [#allocation16], 0
    %21 = vsyncpa [#allocation19], 0
    %22 = vsyncpa [#allocation5], 0
    // Predicated region
    $region2: #{tpu_custom_call.1} parent=1 // pred_check
      _
    $region3: #{tpu_custom_call.1} parent=1 // pred_check_branch
      %24 = sbr.rel (0) target = $region5
    $region4: #{tpu_custom_call.1} parent=1 // pred_region
      %s26 = ssub.s32 2048, 2048
      %27 = vsyncadd [#allocation4], %s26
      %s28 = sshll.u32 [#allocation3], 4
      %s29 = int_to_ptr.vmem [resolvable:$true] %s28
      %34 = dma.hbm_to_vmem [thread:$0]  %s0, 2048, %s29, [#allocation4], 64, 64, 4
    $region5: #{tpu_custom_call.1} parent=1 // pred_fallthru
      _
    // Predicated region
    $region6: #{tpu_custom_call.1} parent=1 // pred_check
      _
    $region7: #{tpu_custom_call.1} parent=1 // pred_check_branch
      %36 = sbr.rel (0) target = $region9
    $region8: #{tpu_custom_call.1} parent=1 // pred_region
      %s38 = ssub.s32 18432, 18432
      %39 = vsyncadd [#allocation7], %s38
      %s40 = sshll.u32 [#allocation6], 4
      %s41 = int_to_ptr.vmem [resolvable:$true] %s40
      %46 = dma.hbm_to_vmem [thread:$0]  %s1, 18432, %s41, [#allocation7], 128, 128, 8
    $region9: #{tpu_custom_call.1} parent=1 // pred_fallthru
      _
    // Predicated region
    $region10: #{tpu_custom_call.1} parent=1 // pred_check
      _
    $region11: #{tpu_custom_call.1} parent=1 // pred_check_branch
      %48 = sbr.rel (0) target = $region13
    $region12: #{tpu_custom_call.1} parent=1 // pred_region
      %s50 = ssub.s32 51200, 51200
      %51 = vsyncadd [#allocation7], %s50
      %s52 = sshll.u32 [#allocation8], 4
      %s53 = int_to_ptr.vmem [resolvable:$true] %s52
      %58 = dma.hbm_to_vmem [thread:$0]  %s2, 51200, %s53, [#allocation7], 128, 128, 8
    $region13: #{tpu_custom_call.1} parent=1 // pred_fallthru
      _
    // Predicated region
    $region14: #{tpu_custom_call.1} parent=1 // pred_check
      _
    $region15: #{tpu_custom_call.1} parent=1 // pred_check_branch
      %60 = sbr.rel (0) target = $region17
    $region16: #{tpu_custom_call.1} parent=1 // pred_region
      %s62 = ssub.s32 16, 16
      %63 = vsyncadd [#allocation10], %s62
      %s65 = sshll.u32 [#allocation9], 4
      %s66 = int_to_ptr.vmem [resolvable:$true] %s65
      %68 = dma.hbm_to_vmem [thread:$0]  %s3, 16, %s66, [#allocation10]
    $region17: #{tpu_custom_call.1} parent=1 // pred_fallthru
      _
    // Predicated region
    $region18: #{tpu_custom_call.1} parent=1 // pred_check
      _
    $region19: #{tpu_custom_call.1} parent=1 // pred_check_branch
      %70 = sbr.rel (0) target = $region21
    $region20: #{tpu_custom_call.1} parent=1 // pred_region
      %s72 = ssub.s32 16, 16
      %73 = vsyncadd [#allocation10], %s72
      %s75 = sshll.u32 [#allocation11], 4
      %s76 = int_to_ptr.vmem [resolvable:$true] %s75
      %78 = dma.hbm_to_vmem [thread:$0]  %s4, 16, %s76, [#allocation10]
    $region21: #{tpu_custom_call.1} parent=1 // pred_fallthru
      _
    // Predicated region
    $region22: #{tpu_custom_call.1} parent=1 // pred_check
      _
    $region23: #{tpu_custom_call.1} parent=1 // pred_check_branch
      %80 = sbr.rel (0) target = $region25
    $region24: #{tpu_custom_call.1} parent=1 // pred_region
      %s82 = ssub.s32 16, 16
      %83 = vsyncadd [#allocation13], %s82
      %s85 = sshll.u32 [#allocation12], 4
      %s86 = int_to_ptr.vmem [resolvable:$true] %s85
      %88 = dma.hbm_to_vmem [thread:$0]  %s5, 16, %s86, [#allocation13]
    $region25: #{tpu_custom_call.1} parent=1 // pred_fallthru
      _
    // Predicated region
    $region26: #{tpu_custom_call.1} parent=1 // pred_check
      _
    $region27: #{tpu_custom_call.1} parent=1 // pred_check_branch
      %90 = sbr.rel (0) target = $region29
    $region28: #{tpu_custom_call.1} parent=1 // pred_region
      %s92 = ssub.s32 16, 16
      %93 = vsyncadd [#allocation13], %s92
      %s95 = sshll.u32 [#allocation14], 4
      %s96 = int_to_ptr.vmem [resolvable:$true] %s95
      %98 = dma.hbm_to_vmem [thread:$0]  %s6, 16, %s96, [#allocation13]
    $region29: #{tpu_custom_call.1} parent=1 // pred_fallthru
      _
    // Predicated region
    $region30: #{tpu_custom_call.1} parent=1 // pred_check
      _
    $region31: #{tpu_custom_call.1} parent=1 // pred_check_branch
      %100 = sbr.rel (0) target = $region33
    $region32: #{tpu_custom_call.1} parent=1 // pred_region
      %s102 = ssub.s32 2048, 2048
      %103 = vsyncadd [#allocation16], %s102
      %s104 = sshll.u32 [#allocation15], 4
      %s105 = int_to_ptr.vmem [resolvable:$true] %s104
      %110 = dma.hbm_to_vmem [thread:$0]  %s7, 2048, %s105, [#allocation16], 128, 128, 8
    $region33: #{tpu_custom_call.1} parent=1 // pred_fallthru
      _
    // Predicated region
    $region34: #{tpu_custom_call.1} parent=1 // pred_check
      _
    $region35: #{tpu_custom_call.1} parent=1 // pred_check_branch
      %112 = sbr.rel (0) target = $region37
    $region36: #{tpu_custom_call.1} parent=1 // pred_region
      %s114 = ssub.s32 16, 16
      %115 = vsyncadd [#allocation16], %s114
      %s117 = sshll.u32 [#allocation17], 4
      %s118 = int_to_ptr.vmem [resolvable:$true] %s117
      %120 = dma.hbm_to_vmem [thread:$0]  %s8, 16, %s118, [#allocation16]
    $region37: #{tpu_custom_call.1} parent=1 // pred_fallthru
      _
    // Predicated region
    $region38: #{tpu_custom_call.1} parent=1 // pred_check
      _
    $region39: #{tpu_custom_call.1} parent=1 // pred_check_branch
      %122 = sbr.rel (0) target = $region41
    $region40: #{tpu_custom_call.1} parent=1 // pred_region
      %s124 = ssub.s32 4096, 4096
      %125 = vsyncadd [#allocation19], %s124
      %s126 = sshll.u32 [#allocation18], 4
      %s127 = int_to_ptr.vmem [resolvable:$true] %s126
      %132 = dma.hbm_to_vmem [thread:$0]  %s9, 4096, %s127, [#allocation19], 256, 256, 16
    $region41: #{tpu_custom_call.1} parent=1 // pred_fallthru
      _
    // Predicated region
    $region42: #{tpu_custom_call.1} parent=1 // pred_check
      _
    $region43: #{tpu_custom_call.1} parent=1 // pred_check_branch
      %134 = sbr.rel (0) target = $region45
    $region44: #{tpu_custom_call.1} parent=1 // pred_region
      %s136 = ssub.s32 32, 32
      %137 = vsyncadd [#allocation19], %s136
      %s139 = sshll.u32 [#allocation20], 4
      %s140 = int_to_ptr.vmem [resolvable:$true] %s139
      %142 = dma.hbm_to_vmem [thread:$0]  %s10, 32, %s140, [#allocation19]
    $region45: #{tpu_custom_call.1} parent=1 // pred_fallthru
      _
    // Predicated region
    $region46: #{tpu_custom_call.1} parent=1 // pred_check
      _
    $region47: #{tpu_custom_call.1} parent=1 // pred_check_branch
      %144 = sbr.rel (0) target = $region49
    $region48: #{tpu_custom_call.1} parent=1 // pred_region
      %145 = dma.done [#allocation4], 2048
    $region49: #{tpu_custom_call.1} parent=1 // pred_fallthru
      _
    // Predicated region
    $region50: #{tpu_custom_call.1} parent=1 // pred_check
      _
    $region51: #{tpu_custom_call.1} parent=1 // pred_check_branch
      %147 = sbr.rel (0) target = $region53
    $region52: #{tpu_custom_call.1} parent=1 // pred_region
      %148 = dma.done [#allocation7], 18432
    $region53: #{tpu_custom_call.1} parent=1 // pred_fallthru
      _
    // Predicated region
    $region54: #{tpu_custom_call.1} parent=1 // pred_check
      _
    $region55: #{tpu_custom_call.1} parent=1 // pred_check_branch
      %150 = sbr.rel (0) target = $region57
    $region56: #{tpu_custom_call.1} parent=1 // pred_region
      %151 = dma.done [#allocation7], 51200
    $region57: #{tpu_custom_call.1} parent=1 // pred_fallthru
      _
    // Predicated region
    $region58: #{tpu_custom_call.1} parent=1 // pred_check
      _
    $region59: #{tpu_custom_call.1} parent=1 // pred_check_branch
      %153 = sbr.rel (0) target = $region61
    $region60: #{tpu_custom_call.1} parent=1 // pred_region
      %154 = dma.done [#allocation10], 16
    $region61: #{tpu_custom_call.1} parent=1 // pred_fallthru
      _
    // Predicated region
    $region62: #{tpu_custom_call.1} parent=1 // pred_check
      _
    $region63: #{tpu_custom_call.1} parent=1 // pred_check_branch
      %156 = sbr.rel (0) target = $region65
    $region64: #{tpu_custom_call.1} parent=1 // pred_region
      %157 = dma.done [#allocation10], 16
    $region65: #{tpu_custom_call.1} parent=1 // pred_fallthru
      _
    // Predicated region
    $region66: #{tpu_custom_call.1} parent=1 // pred_check
      _
    $region67: #{tpu_custom_call.1} parent=1 // pred_check_branch
      %159 = sbr.rel (0) target = $region69
    $region68: #{tpu_custom_call.1} parent=1 // pred_region
      %160 = dma.done [#allocation13], 16
    $region69: #{tpu_custom_call.1} parent=1 // pred_fallthru
      _
    // Predicated region
    $region70: #{tpu_custom_call.1} parent=1 // pred_check
      _
    $region71: #{tpu_custom_call.1} parent=1 // pred_check_branch
      %162 = sbr.rel (0) target = $region73
    $region72: #{tpu_custom_call.1} parent=1 // pred_region
      %163 = dma.done [#allocation13], 16
    $region73: #{tpu_custom_call.1} parent=1 // pred_fallthru
      _
    // Predicated region
    $region74: #{tpu_custom_call.1} parent=1 // pred_check
      _
    $region75: #{tpu_custom_call.1} parent=1 // pred_check_branch
      %165 = sbr.rel (0) target = $region77
    $region76: #{tpu_custom_call.1} parent=1 // pred_region
      %166 = dma.done [#allocation16], 2048
    $region77: #{tpu_custom_call.1} parent=1 // pred_fallthru
      _
    // Predicated region
    $region78: #{tpu_custom_call.1} parent=1 // pred_check
      _
    $region79: #{tpu_custom_call.1} parent=1 // pred_check_branch
      %168 = sbr.rel (0) target = $region81
    $region80: #{tpu_custom_call.1} parent=1 // pred_region
      %169 = dma.done [#allocation16], 16
    $region81: #{tpu_custom_call.1} parent=1 // pred_fallthru
      _
    // Predicated region
    $region82: #{tpu_custom_call.1} parent=1 // pred_check
      _
    $region83: #{tpu_custom_call.1} parent=1 // pred_check_branch
      %171 = sbr.rel (0) target = $region85
    $region84: #{tpu_custom_call.1} parent=1 // pred_region
      %172 = dma.done [#allocation19], 4096
    $region85: #{tpu_custom_call.1} parent=1 // pred_fallthru
      _
    // Predicated region
    $region86: #{tpu_custom_call.1} parent=1 // pred_check
      _
    $region87: #{tpu_custom_call.1} parent=1 // pred_check_branch
      %174 = sbr.rel (0) target = $region89
    $region88: #{tpu_custom_call.1} parent=1 // pred_region
      %175 = dma.done [#allocation19], 32
    $region89: #{tpu_custom_call.1} parent=1 // pred_fallthru
      _
    %s176 = scalar_lea.vmem [#allocation3], 48
    %v177 = vld [vmem:[%s176] sm:$0x3]
    %v178 = vld [vmem:[%s176 + $0x4] sm:$0x3]
    %v179 = vld [vmem:[%s176 + $0x40] sm:$0x3]
    %v180 = vld [vmem:[%s176 + $0x44] sm:$0x3]
    %s181 = scalar_lea.vmem [#allocation3], 32
    %v182 = vld [vmem:[%s181 + $0x1] sm:$0x3]
    %v183 = vld [vmem:[%s181 + $0x5] sm:$0x3]
    %v184 = vld [vmem:[%s181 + $0x41] sm:$0x3]
    %v185 = vld [vmem:[%s181 + $0x45] sm:$0x3]
    %v186 = vld [vmem:[%s176 + $0x1] sm:$0x3]
    %v187 = vld [vmem:[%s176 + $0x5] sm:$0x3]
    %v188 = vld [vmem:[%s176 + $0x41] sm:$0x3]
    %v189 = vld [vmem:[%s176 + $0x45] sm:$0x3]
    %s190 = scalar_lea.vmem [#allocation3], 20
    %v191 = vld [vmem:[%s190] sm:$0x3]
    %v192 = vld [vmem:[%s190 + $0x4] sm:$0x3]
    %v193 = vld [vmem:[%s190 + $0x40] sm:$0x3]
    %v194 = vld [vmem:[%s190 + $0x44] sm:$0x3]
    %s195 = scalar_lea.vmem [#allocation3], 4
    %v196 = vld [vmem:[%s195 + $0x1] sm:$0x3]
    %v197 = vld [vmem:[%s195 + $0x5] sm:$0x3]
    %v198 = vld [vmem:[%s195 + $0x41] sm:$0x3]
    %v199 = vld [vmem:[%s195 + $0x45] sm:$0x3]
    %v200 = vld [vmem:[%s190 + $0x1] sm:$0x3]
    %v201 = vld [vmem:[%s190 + $0x5] sm:$0x3]
    %v202 = vld [vmem:[%s190 + $0x41] sm:$0x3]
    %v203 = vld [vmem:[%s190 + $0x45] sm:$0x3]
    %s204 = scalar_lea.vmem [#allocation3], 52
    %v205 = vld [vmem:[%s204] sm:$0x3]
    %v206 = vld [vmem:[%s204 + $0x4] sm:$0x3]
    %v207 = vld [vmem:[%s204 + $0x40] sm:$0x3]
    %v208 = vld [vmem:[%s204 + $0x44] sm:$0x3]
    %s209 = scalar_lea.vmem [#allocation3], 36
    %v210 = vld [vmem:[%s209 + $0x1] sm:$0x3]
    %v211 = vld [vmem:[%s209 + $0x5] sm:$0x3]
    %v212 = vld [vmem:[%s209 + $0x41] sm:$0x3]
    %v213 = vld [vmem:[%s209 + $0x45] sm:$0x3]
    %v214 = vld [vmem:[%s204 + $0x1] sm:$0x3]
    %v215 = vld [vmem:[%s204 + $0x5] sm:$0x3]
    %v216 = vld [vmem:[%s204 + $0x41] sm:$0x3]
    %v217 = vld [vmem:[%s204 + $0x45] sm:$0x3]
    %v222 = vcombine.low %v177, %v178
    %v223 = vcombine.low %v179, %v180
    %v225 = vunpack.c.l.s4 1983009808
    %v226 = vunpack.c.0.s8 %v225
    %v227 = vlaneseq
    %v228 = vshrl.u32 %v227, 7
    %v229 = vsub.s32 %v226, %v228
    %v230 = vrot.slane %v222, %v229
    %v232 = vunpack.c.l.s4 1983009808
    %v233 = vunpack.c.0.s8 %v232
    %v234 = vlaneseq
    %v235 = vshrl.u32 %v234, 7
    %v236 = vsub.s32 %v233, %v235
    %v237 = vrot.slane %v223, %v236
    %v238 = vcombine.low %v230, %v237
    %v244 = vcombine.low %v182, %v183
    %v245 = vcombine.low %v184, %v185
    %v247 = vunpack.c.l.s4 1983009808
    %v248 = vunpack.c.0.s8 %v247
    %v249 = vlaneseq
    %v250 = vshrl.u32 %v249, 7
    %v251 = vsub.s32 %v248, %v250
    %v252 = vrot.slane %v244, %v251
    %v254 = vunpack.c.l.s4 1983009808
    %v255 = vunpack.c.0.s8 %v254
    %v256 = vlaneseq
    %v257 = vshrl.u32 %v256, 7
    %v258 = vsub.s32 %v255, %v257
    %v259 = vrot.slane %v245, %v258
    %v260 = vcombine.low %v252, %v259
    %v266 = vcombine.low %v186, %v187
    %v267 = vcombine.low %v188, %v189
    %v269 = vunpack.c.l.s4 1983009808
    %v270 = vunpack.c.0.s8 %v269
    %v271 = vlaneseq
    %v272 = vshrl.u32 %v271, 7
    %v273 = vsub.s32 %v270, %v272
    %v274 = vrot.slane %v266, %v273
    %v276 = vunpack.c.l.s4 1983009808
    %v277 = vunpack.c.0.s8 %v276
    %v278 = vlaneseq
    %v279 = vshrl.u32 %v278, 7
    %v280 = vsub.s32 %v277, %v279
    %v281 = vrot.slane %v267, %v280
    %v282 = vcombine.low %v274, %v281
    %v288 = vcombine.low %v191, %v192
    %v289 = vcombine.low %v193, %v194
    %v291 = vunpack.c.l.s4 1983009808
    %v292 = vunpack.c.0.s8 %v291
    %v293 = vlaneseq
    %v294 = vshrl.u32 %v293, 7
    %v295 = vsub.s32 %v292, %v294
    %v296 = vrot.slane %v288, %v295
    %v298 = vunpack.c.l.s4 1983009808
    %v299 = vunpack.c.0.s8 %v298
    %v300 = vlaneseq
    %v301 = vshrl.u32 %v300, 7
    %v302 = vsub.s32 %v299, %v301
    %v303 = vrot.slane %v289, %v302
    %v304 = vcombine.low %v296, %v303
    %v310 = vcombine.low %v196, %v197
    %v311 = vcombine.low %v198, %v199
    %v313 = vunpack.c.l.s4 1983009808
    %v314 = vunpack.c.0.s8 %v313
    %v315 = vlaneseq
    %v316 = vshrl.u32 %v315, 7
    %v317 = vsub.s32 %v314, %v316
    %v318 = vrot.slane %v310, %v317
    %v320 = vunpack.c.l.s4 1983009808
    %v321 = vunpack.c.0.s8 %v320
    %v322 = vlaneseq
    %v323 = vshrl.u32 %v322, 7
    %v324 = vsub.s32 %v321, %v323
    %v325 = vrot.slane %v311, %v324
    %v326 = vcombine.low %v318, %v325
    %v332 = vcombine.low %v200, %v201
    %v333 = vcombine.low %v202, %v203
    %v335 = vunpack.c.l.s4 1983009808
    %v336 = vunpack.c.0.s8 %v335
    %v337 = vlaneseq
    %v338 = vshrl.u32 %v337, 7
    %v339 = vsub.s32 %v336, %v338
    %v340 = vrot.slane %v332, %v339
    %v342 = vunpack.c.l.s4 1983009808
    %v343 = vunpack.c.0.s8 %v342
    %v344 = vlaneseq
    %v345 = vshrl.u32 %v344, 7
    %v346 = vsub.s32 %v343, %v345
    %v347 = vrot.slane %v333, %v346
    %v348 = vcombine.low %v340, %v347
    %v354 = vcombine.low %v205, %v206
    %v355 = vcombine.low %v207, %v208
    %v357 = vunpack.c.l.s4 1983009808
    %v358 = vunpack.c.0.s8 %v357
    %v359 = vlaneseq
    %v360 = vshrl.u32 %v359, 7
    %v361 = vsub.s32 %v358, %v360
    %v362 = vrot.slane %v354, %v361
    %v364 = vunpack.c.l.s4 1983009808
    %v365 = vunpack.c.0.s8 %v364
    %v366 = vlaneseq
    %v367 = vshrl.u32 %v366, 7
    %v368 = vsub.s32 %v365, %v367
    %v369 = vrot.slane %v355, %v368
    %v370 = vcombine.low %v362, %v369
    %v376 = vcombine.low %v210, %v211
    %v377 = vcombine.low %v212, %v213
    %v379 = vunpack.c.l.s4 1983009808
    %v380 = vunpack.c.0.s8 %v379
    %v381 = vlaneseq
    %v382 = vshrl.u32 %v381, 7
    %v383 = vsub.s32 %v380, %v382
    %v384 = vrot.slane %v376, %v383
    %v386 = vunpack.c.l.s4 1983009808
    %v387 = vunpack.c.0.s8 %v386
    %v388 = vlaneseq
    %v389 = vshrl.u32 %v388, 7
    %v390 = vsub.s32 %v387, %v389
    %v391 = vrot.slane %v377, %v390
    %v392 = vcombine.low %v384, %v391
    %v398 = vcombine.low %v214, %v215
    %v399 = vcombine.low %v216, %v217
    %v401 = vunpack.c.l.s4 1983009808
    %v402 = vunpack.c.0.s8 %v401
    %v403 = vlaneseq
    %v404 = vshrl.u32 %v403, 7
    %v405 = vsub.s32 %v402, %v404
    %v406 = vrot.slane %v398, %v405
    %v408 = vunpack.c.l.s4 1983009808
    %v409 = vunpack.c.0.s8 %v408
    %v410 = vlaneseq
    %v411 = vshrl.u32 %v410, 7
    %v412 = vsub.s32 %v409, %v411
    %v413 = vrot.slane %v399, %v412
    %v414 = vcombine.low %v406, %v413
    %v416 = vld [vmem:[#allocation6] sm:$0xff]
    %v417 = vld [vmem:[#allocation6 + $0x8] sm:$0xff]
    %v418 = vld [vmem:[#allocation6 + $0x10] sm:$0xff]
    %v419 = vld [vmem:[#allocation6 + $0x18] sm:$0xff]
    %v420 = vld [vmem:[#allocation6 + $0x20] sm:$0xff]
    %v421 = vld [vmem:[#allocation6 + $0x28] sm:$0xff]
    %v422 = vld [vmem:[#allocation6 + $0x30] sm:$0xff]
    %v423 = vld [vmem:[#allocation6 + $0x38] sm:$0xff]
    %v424 = vld [vmem:[#allocation6 + $0x40] sm:$0xff]
    %v425 = vld [vmem:[#allocation6 + $0x48] sm:$0xff]
    %v426 = vld [vmem:[#allocation6 + $0x50] sm:$0xff]
    %v427 = vld [vmem:[#allocation6 + $0x58] sm:$0xff]
    %v428 = vld [vmem:[#allocation6 + $0x60] sm:$0xff]
    %v429 = vld [vmem:[#allocation6 + $0x68] sm:$0xff]
    %v430 = vld [vmem:[#allocation6 + $0x70] sm:$0xff]
    %v431 = vld [vmem:[#allocation6 + $0x78] sm:$0xff]
    %v432 = vld [vmem:[#allocation6 + $0x80] sm:$0xff]
    %v433 = vld [vmem:[#allocation6 + $0x88] sm:$0xff]
    %v434 = vld [vmem:[#allocation6 + $0x90] sm:$0xff]
    %v435 = vld [vmem:[#allocation6 + $0x98] sm:$0xff]
    %v436 = vld [vmem:[#allocation6 + $0xa0] sm:$0xff]
    %v437 = vld [vmem:[#allocation6 + $0xa8] sm:$0xff]
    %v438 = vld [vmem:[#allocation6 + $0xb0] sm:$0xff]
    %v439 = vld [vmem:[#allocation6 + $0xb8] sm:$0xff]
    %v440 = vld [vmem:[#allocation6 + $0xc0] sm:$0xff]
    %v441 = vld [vmem:[#allocation6 + $0xc8] sm:$0xff]
    %v442 = vld [vmem:[#allocation6 + $0xd0] sm:$0xff]
    %v443 = vld [vmem:[#allocation6 + $0xd8] sm:$0xff]
    %v444 = vld [vmem:[#allocation6 + $0xe0] sm:$0xff]
    %v445 = vld [vmem:[#allocation6 + $0xe8] sm:$0xff]
    %v446 = vld [vmem:[#allocation6 + $0xf0] sm:$0xff]
    %v447 = vld [vmem:[#allocation6 + $0xf8] sm:$0xff]
    %v448 = vld [vmem:[#allocation6 + $0x100] sm:$0xff]
    %v449 = vld [vmem:[#allocation6 + $0x108] sm:$0xff]
    %v450 = vld [vmem:[#allocation6 + $0x110] sm:$0xff]
    %v451 = vld [vmem:[#allocation6 + $0x118] sm:$0xff]
    %v452 = vld [vmem:[#allocation6 + $0x120] sm:$0xff]
    %v453 = vld [vmem:[#allocation6 + $0x128] sm:$0xff]
    %v454 = vld [vmem:[#allocation6 + $0x130] sm:$0xff]
    %v455 = vld [vmem:[#allocation6 + $0x138] sm:$0xff]
    %v456 = vld [vmem:[#allocation6 + $0x140] sm:$0xff]
    %v457 = vld [vmem:[#allocation6 + $0x148] sm:$0xff]
    %v458 = vld [vmem:[#allocation6 + $0x150] sm:$0xff]
    %v459 = vld [vmem:[#allocation6 + $0x158] sm:$0xff]
    %v460 = vld [vmem:[#allocation6 + $0x160] sm:$0xff]
    %v461 = vld [vmem:[#allocation6 + $0x168] sm:$0xff]
    %v462 = vld [vmem:[#allocation6 + $0x170] sm:$0xff]
    %v463 = vld [vmem:[#allocation6 + $0x178] sm:$0xff]
    %v464 = vld [vmem:[#allocation6 + $0x180] sm:$0xff]
    %v465 = vld [vmem:[#allocation6 + $0x188] sm:$0xff]
    %v466 = vld [vmem:[#allocation6 + $0x190] sm:$0xff]
    %v467 = vld [vmem:[#allocation6 + $0x198] sm:$0xff]
    %v468 = vld [vmem:[#allocation6 + $0x1a0] sm:$0xff]
    %v469 = vld [vmem:[#allocation6 + $0x1a8] sm:$0xff]
    %v470 = vld [vmem:[#allocation6 + $0x1b0] sm:$0xff]
    %v471 = vld [vmem:[#allocation6 + $0x1b8] sm:$0xff]
    %v472 = vld [vmem:[#allocation6 + $0x1c0] sm:$0xff]
    %v473 = vld [vmem:[#allocation6 + $0x1c8] sm:$0xff]
    %v474 = vld [vmem:[#allocation6 + $0x1d0] sm:$0xff]
    %v475 = vld [vmem:[#allocation6 + $0x1d8] sm:$0xff]
    %v476 = vld [vmem:[#allocation6 + $0x1e0] sm:$0xff]
    %v477 = vld [vmem:[#allocation6 + $0x1e8] sm:$0xff]
    %v478 = vld [vmem:[#allocation6 + $0x1f0] sm:$0xff]
    %v479 = vld [vmem:[#allocation6 + $0x1f8] sm:$0xff]
    %v480 = vld [vmem:[#allocation6 + $0x200] sm:$0xff]
    %v481 = vld [vmem:[#allocation6 + $0x208] sm:$0xff]
    %v482 = vld [vmem:[#allocation6 + $0x210] sm:$0xff]
    %v483 = vld [vmem:[#allocation6 + $0x218] sm:$0xff]
    %v484 = vld [vmem:[#allocation6 + $0x220] sm:$0xff]
    %v485 = vld [vmem:[#allocation6 + $0x228] sm:$0xff]
    %v486 = vld [vmem:[#allocation6 + $0x230] sm:$0xff]
    %v487 = vld [vmem:[#allocation6 + $0x238] sm:$0xff]
    %v488 = vld [vmem:[#allocation6 + $0x240] sm:$0xff]
    %v489 = vld [vmem:[#allocation6 + $0x248] sm:$0xff]
    %v490 = vld [vmem:[#allocation6 + $0x250] sm:$0xff]
    %v491 = vld [vmem:[#allocation6 + $0x258] sm:$0xff]
    %v492 = vld [vmem:[#allocation6 + $0x260] sm:$0xff]
    %v493 = vld [vmem:[#allocation6 + $0x268] sm:$0xff]
    %v494 = vld [vmem:[#allocation6 + $0x270] sm:$0xff]
    %v495 = vld [vmem:[#allocation6 + $0x278] sm:$0xff]
    %v496 = vld [vmem:[#allocation6 + $0x280] sm:$0xff]
    %v497 = vld [vmem:[#allocation6 + $0x288] sm:$0xff]
    %v498 = vld [vmem:[#allocation6 + $0x290] sm:$0xff]
    %v499 = vld [vmem:[#allocation6 + $0x298] sm:$0xff]
    %v500 = vld [vmem:[#allocation6 + $0x2a0] sm:$0xff]
    %v501 = vld [vmem:[#allocation6 + $0x2a8] sm:$0xff]
    %v502 = vld [vmem:[#allocation6 + $0x2b0] sm:$0xff]
    %v503 = vld [vmem:[#allocation6 + $0x2b8] sm:$0xff]
    %v504 = vld [vmem:[#allocation6 + $0x2c0] sm:$0xff]
    %v505 = vld [vmem:[#allocation6 + $0x2c8] sm:$0xff]
    %v506 = vld [vmem:[#allocation6 + $0x2d0] sm:$0xff]
    %v507 = vld [vmem:[#allocation6 + $0x2d8] sm:$0xff]
    %v508 = vld [vmem:[#allocation6 + $0x2e0] sm:$0xff]
    %v509 = vld [vmem:[#allocation6 + $0x2e8] sm:$0xff]
    %v510 = vld [vmem:[#allocation6 + $0x2f0] sm:$0xff]
    %v511 = vld [vmem:[#allocation6 + $0x2f8] sm:$0xff]
    %v512 = vld [vmem:[#allocation6 + $0x300] sm:$0xff]
    %v513 = vld [vmem:[#allocation6 + $0x308] sm:$0xff]
    %v514 = vld [vmem:[#allocation6 + $0x310] sm:$0xff]
    %v515 = vld [vmem:[#allocation6 + $0x318] sm:$0xff]
    %v516 = vld [vmem:[#allocation6 + $0x320] sm:$0xff]
    %v517 = vld [vmem:[#allocation6 + $0x328] sm:$0xff]
    %v518 = vld [vmem:[#allocation6 + $0x330] sm:$0xff]
    %v519 = vld [vmem:[#allocation6 + $0x338] sm:$0xff]
    %v520 = vld [vmem:[#allocation6 + $0x340] sm:$0xff]
    %v521 = vld [vmem:[#allocation6 + $0x348] sm:$0xff]
    %v522 = vld [vmem:[#allocation6 + $0x350] sm:$0xff]
    %v523 = vld [vmem:[#allocation6 + $0x358] sm:$0xff]
    %v524 = vld [vmem:[#allocation6 + $0x360] sm:$0xff]
    %v525 = vld [vmem:[#allocation6 + $0x368] sm:$0xff]
    %v526 = vld [vmem:[#allocation6 + $0x370] sm:$0xff]
    %v527 = vld [vmem:[#allocation6 + $0x378] sm:$0xff]
    %v528 = vld [vmem:[#allocation6 + $0x380] sm:$0xff]
    %v529 = vld [vmem:[#allocation6 + $0x388] sm:$0xff]
    %v530 = vld [vmem:[#allocation6 + $0x390] sm:$0xff]
    %v531 = vld [vmem:[#allocation6 + $0x398] sm:$0xff]
    %v532 = vld [vmem:[#allocation6 + $0x3a0] sm:$0xff]
    %v533 = vld [vmem:[#allocation6 + $0x3a8] sm:$0xff]
    %v534 = vld [vmem:[#allocation6 + $0x3b0] sm:$0xff]
    %v535 = vld [vmem:[#allocation6 + $0x3b8] sm:$0xff]
    %v536 = vld [vmem:[#allocation6 + $0x3c0] sm:$0xff]
    %v537 = vld [vmem:[#allocation6 + $0x3c8] sm:$0xff]
    %v538 = vld [vmem:[#allocation6 + $0x3d0] sm:$0xff]
    %v539 = vld [vmem:[#allocation6 + $0x3d8] sm:$0xff]
    %v540 = vld [vmem:[#allocation6 + $0x3e0] sm:$0xff]
    %v541 = vld [vmem:[#allocation6 + $0x3e8] sm:$0xff]
    %v542 = vld [vmem:[#allocation6 + $0x3f0] sm:$0xff]
    %v543 = vld [vmem:[#allocation6 + $0x3f8] sm:$0xff]
    %v544 = vld [vmem:[#allocation6 + $0x400] sm:$0xff]
    %v545 = vld [vmem:[#allocation6 + $0x408] sm:$0xff]
    %v546 = vld [vmem:[#allocation6 + $0x410] sm:$0xff]
    %v547 = vld [vmem:[#allocation6 + $0x418] sm:$0xff]
    %v548 = vld [vmem:[#allocation6 + $0x420] sm:$0xff]
    %v549 = vld [vmem:[#allocation6 + $0x428] sm:$0xff]
    %v550 = vld [vmem:[#allocation6 + $0x430] sm:$0xff]
    %v551 = vld [vmem:[#allocation6 + $0x438] sm:$0xff]
    %v552 = vld [vmem:[#allocation6 + $0x440] sm:$0xff]
    %v553 = vld [vmem:[#allocation6 + $0x448] sm:$0xff]
    %v554 = vld [vmem:[#allocation6 + $0x450] sm:$0xff]
    %v555 = vld [vmem:[#allocation6 + $0x458] sm:$0xff]
    %v556 = vld [vmem:[#allocation6 + $0x460] sm:$0xff]
    %v557 = vld [vmem:[#allocation6 + $0x468] sm:$0xff]
    %v558 = vld [vmem:[#allocation6 + $0x470] sm:$0xff]
    %v559 = vld [vmem:[#allocation6 + $0x478] sm:$0xff]
    %560 = vmatprep.subr.mxu0 0.0
    %561 = vmatpush1.msra.mxu0 %v416
    %562 = vmatprep.subr.mxu0 0.0
    %563 = vmatpush1.msra.mxu0 %v417
    %564 = vmatprep.subr.mxu0 0.0
    %565 = vmatpush1.msra.mxu0 %v418
    %566 = vmatprep.subr.mxu0 0.0
    %567 = vmatpush1.msra.mxu0 %v419
    %568 = vmatprep.subr.mxu0 0.0
    %569 = vmatpush1.msra.mxu0 %v420
    %570 = vmatprep.subr.mxu0 0.0
    %571 = vmatpush1.msra.mxu0 %v421
    %572 = vmatprep.subr.mxu0 0.0
    %573 = vmatpush1.msra.mxu0 %v422
    %574 = vmatprep.subr.mxu0 0.0
    %575 = vmatpush1.msra.mxu0 %v423
    %576 = vmatprep.subr.mxu0 0.0
    %577 = vmatpush1.msra.mxu0 %v424
    %578 = vmatprep.subr.mxu0 0.0
    %579 = vmatpush1.msra.mxu0 %v425
    %580 = vmatprep.subr.mxu0 0.0
    %581 = vmatpush1.msra.mxu0 %v426
    %582 = vmatprep.subr.mxu0 0.0
    %583 = vmatpush1.msra.mxu0 %v427
    %584 = vmatprep.subr.mxu0 0.0
    %585 = vmatpush1.msra.mxu0 %v428
    %586 = vmatprep.subr.mxu0 0.0
    %587 = vmatpush1.msra.mxu0 %v429
    %588 = vmatprep.subr.mxu0 0.0
    %589 = vmatpush1.msra.mxu0 %v430
    %590 = vmatprep.subr.mxu0 0.0
    %591 = vmatpush1.msra.mxu0 %v431
    %592 = vmatprep.subr.mxu0 0.0
    %593 = vmatpush1.msra.mxu0 %v432
    %594 = vmatprep.subr.mxu0 0.0
    %595 = vmatpush1.msra.mxu0 %v433
    %596 = vmatprep.subr.mxu0 0.0
    %597 = vmatpush1.msra.mxu0 %v434
    %598 = vmatprep.subr.mxu0 0.0
    %599 = vmatpush1.msra.mxu0 %v435
    %600 = vmatprep.subr.mxu0 0.0
    %601 = vmatpush1.msra.mxu0 %v436
    %602 = vmatprep.subr.mxu0 0.0
    %603 = vmatpush1.msra.mxu0 %v437
    %604 = vmatprep.subr.mxu0 0.0
    %605 = vmatpush1.msra.mxu0 %v438
    %606 = vmatprep.subr.mxu0 0.0
    %607 = vmatpush1.msra.mxu0 %v439
    %608 = vmatprep.subr.mxu0 0.0
    %609 = vmatpush1.msra.mxu0 %v440
    %610 = vmatprep.subr.mxu0 0.0
    %611 = vmatpush1.msra.mxu0 %v441
    %612 = vmatprep.subr.mxu0 0.0
    %613 = vmatpush1.msra.mxu0 %v442
    %614 = vmatprep.subr.mxu0 0.0
    %615 = vmatpush1.msra.mxu0 %v443
    %616 = vmatprep.subr.mxu0 0.0
    %617 = vmatpush1.msra.mxu0 %v444
    %618 = vmatprep.subr.mxu0 0.0
    %619 = vmatpush1.msra.mxu0 %v445
    %620 = vmatprep.subr.mxu0 0.0
    %621 = vmatpush1.msra.mxu0 %v446
    %622 = vmatprep.subr.mxu0 0.0
    %623 = vmatpush1.msra.mxu0 %v447
    %624 = vmatprep.mubr.f32.mxu0 %v260
    %625 = vmatmul.mubr.f32.gmra.mrb[0].mxu0 %v238
    %v626 = vpop.f32.mrb[0].mxu0
    %v627 = vadd.f32 0.0, %v626
    %v628 = vpop.f32.mrb[0].mxu0
    %629 = vdwg.mxu0
    %630 = vmatprep.subr.mxu0 0.0
    %631 = vmatpush1.msra.mxu0 %v448
    %632 = vmatprep.subr.mxu0 0.0
    %633 = vmatpush1.msra.mxu0 %v449
    %634 = vmatprep.subr.mxu0 0.0
    %635 = vmatpush1.msra.mxu0 %v450
    %636 = vmatprep.subr.mxu0 0.0
    %637 = vmatpush1.msra.mxu0 %v451
    %638 = vmatprep.subr.mxu0 0.0
    %639 = vmatpush1.msra.mxu0 %v452
    %640 = vmatprep.subr.mxu0 0.0
    %641 = vmatpush1.msra.mxu0 %v453
    %642 = vmatprep.subr.mxu0 0.0
    %643 = vmatpush1.msra.mxu0 %v454
    %644 = vmatprep.subr.mxu0 0.0
    %645 = vmatpush1.msra.mxu0 %v455
    %646 = vmatprep.subr.mxu0 0.0
    %647 = vmatpush1.msra.mxu0 %v456
    %648 = vmatprep.subr.mxu0 0.0
    %649 = vmatpush1.msra.mxu0 %v457
    %650 = vmatprep.subr.mxu0 0.0
    %651 = vmatpush1.msra.mxu0 %v458
    %652 = vmatprep.subr.mxu0 0.0
    %653 = vmatpush1.msra.mxu0 %v459
    %654 = vmatprep.subr.mxu0 0.0
    %655 = vmatpush1.msra.mxu0 %v460
    %656 = vmatprep.subr.mxu0 0.0
    %657 = vmatpush1.msra.mxu0 %v461
    %658 = vmatprep.subr.mxu0 0.0
    %659 = vmatpush1.msra.mxu0 %v462
    %660 = vmatprep.subr.mxu0 0.0
    %661 = vmatpush1.msra.mxu0 %v463
    %662 = vmatprep.subr.mxu0 0.0
    %663 = vmatpush1.msra.mxu0 %v464
    %664 = vmatprep.subr.mxu0 0.0
    %665 = vmatpush1.msra.mxu0 %v465
    %666 = vmatprep.subr.mxu0 0.0
    %667 = vmatpush1.msra.mxu0 %v466
    %668 = vmatprep.subr.mxu0 0.0
    %669 = vmatpush1.msra.mxu0 %v467
    %670 = vmatprep.subr.mxu0 0.0
    %671 = vmatpush1.msra.mxu0 %v468
    %672 = vmatprep.subr.mxu0 0.0
    %673 = vmatpush1.msra.mxu0 %v469
    %674 = vmatprep.subr.mxu0 0.0
    %675 = vmatpush1.msra.mxu0 %v470
    %676 = vmatprep.subr.mxu0 0.0
    %677 = vmatpush1.msra.mxu0 %v471
    %678 = vmatprep.subr.mxu0 0.0
    %679 = vmatpush1.msra.mxu0 %v472
    %680 = vmatprep.subr.mxu0 0.0
    %681 = vmatpush1.msra.mxu0 %v473
    %682 = vmatprep.subr.mxu0 0.0
    %683 = vmatpush1.msra.mxu0 %v474
    %684 = vmatprep.subr.mxu0 0.0
    %685 = vmatpush1.msra.mxu0 %v475
    %686 = vmatprep.subr.mxu0 0.0
    %687 = vmatpush1.msra.mxu0 %v476
    %688 = vmatprep.subr.mxu0 0.0
    %689 = vmatpush1.msra.mxu0 %v477
    %690 = vmatprep.subr.mxu0 0.0
    %691 = vmatpush1.msra.mxu0 %v478
    %692 = vmatprep.subr.mxu0 0.0
    %693 = vmatpush1.msra.mxu0 %v479
    %694 = vmatprep.mubr.f32.mxu0 %v304
    %695 = vmatmul.mubr.f32.gmra.mrb[0].mxu0 %v282
    %v696 = vpop.f32.mrb[0].mxu0
    %v697 = vadd.f32 %v627, %v696
    %v698 = vpop.f32.mrb[0].mxu0
    %699 = vdwg.mxu0
    %700 = vmatprep.subr.mxu0 0.0
    %701 = vmatpush1.msra.mxu0 %v480
    %702 = vmatprep.subr.mxu0 0.0
    %703 = vmatpush1.msra.mxu0 %v481
    %704 = vmatprep.subr.mxu0 0.0
    %705 = vmatpush1.msra.mxu0 %v482
    %706 = vmatprep.subr.mxu0 0.0
    %707 = vmatpush1.msra.mxu0 %v483
    %708 = vmatprep.subr.mxu0 0.0
    %709 = vmatpush1.msra.mxu0 %v484
    %710 = vmatprep.subr.mxu0 0.0
    %711 = vmatpush1.msra.mxu0 %v485
    %712 = vmatprep.subr.mxu0 0.0
    %713 = vmatpush1.msra.mxu0 %v486
    %714 = vmatprep.subr.mxu0 0.0
    %715 = vmatpush1.msra.mxu0 %v487
    %716 = vmatprep.subr.mxu0 0.0
    %717 = vmatpush1.msra.mxu0 %v488
    %718 = vmatprep.subr.mxu0 0.0
    %719 = vmatpush1.msra.mxu0 %v489
    %720 = vmatprep.subr.mxu0 0.0
    %721 = vmatpush1.msra.mxu0 %v490
    %722 = vmatprep.subr.mxu0 0.0
    %723 = vmatpush1.msra.mxu0 %v491
    %724 = vmatprep.subr.mxu0 0.0
    %725 = vmatpush1.msra.mxu0 %v492
    %726 = vmatprep.subr.mxu0 0.0
    %727 = vmatpush1.msra.mxu0 %v493
    %728 = vmatprep.subr.mxu0 0.0
    %729 = vmatpush1.msra.mxu0 %v494
    %730 = vmatprep.subr.mxu0 0.0
    %731 = vmatpush1.msra.mxu0 %v495
    %732 = vmatprep.subr.mxu0 0.0
    %733 = vmatpush1.msra.mxu0 %v496
    %734 = vmatprep.subr.mxu0 0.0
    %735 = vmatpush1.msra.mxu0 %v497
    %736 = vmatprep.subr.mxu0 0.0
    %737 = vmatpush1.msra.mxu0 %v498
    %738 = vmatprep.subr.mxu0 0.0
    %739 = vmatpush1.msra.mxu0 %v499
    %740 = vmatprep.subr.mxu0 0.0
    %741 = vmatpush1.msra.mxu0 %v500
    %742 = vmatprep.subr.mxu0 0.0
    %743 = vmatpush1.msra.mxu0 %v501
    %744 = vmatprep.subr.mxu0 0.0
    %745 = vmatpush1.msra.mxu0 %v502
    %746 = vmatprep.subr.mxu0 0.0
    %747 = vmatpush1.msra.mxu0 %v503
    %748 = vmatprep.subr.mxu0 0.0
    %749 = vmatpush1.msra.mxu0 %v504
    %750 = vmatprep.subr.mxu0 0.0
    %751 = vmatpush1.msra.mxu0 %v505
    %752 = vmatprep.subr.mxu0 0.0
    %753 = vmatpush1.msra.mxu0 %v506
    %754 = vmatprep.subr.mxu0 0.0
    %755 = vmatpush1.msra.mxu0 %v507
    %756 = vmatprep.subr.mxu0 0.0
    %757 = vmatpush1.msra.mxu0 %v508
    %758 = vmatprep.subr.mxu0 0.0
    %759 = vmatpush1.msra.mxu0 %v509
    %760 = vmatprep.subr.mxu0 0.0
    %761 = vmatpush1.msra.mxu0 %v510
    %762 = vmatprep.subr.mxu0 0.0
    %763 = vmatpush1.msra.mxu0 %v511
    %764 = vmatprep.mubr.f32.mxu0 %v348
    %765 = vmatmul.mubr.f32.gmra.mrb[0].mxu0 %v326
    %v766 = vpop.f32.mrb[0].mxu0
    %v767 = vadd.f32 %v697, %v766
    %v768 = vpop.f32.mrb[0].mxu0
    %769 = vdwg.mxu0
    %770 = vmatprep.subr.mxu0 0.0
    %771 = vmatpush1.msra.mxu0 %v512
    %772 = vmatprep.subr.mxu0 0.0
    %773 = vmatpush1.msra.mxu0 %v513
    %774 = vmatprep.subr.mxu0 0.0
    %775 = vmatpush1.msra.mxu0 %v514
    %776 = vmatprep.subr.mxu0 0.0
    %777 = vmatpush1.msra.mxu0 %v515
    %778 = vmatprep.subr.mxu0 0.0
    %779 = vmatpush1.msra.mxu0 %v516
    %780 = vmatprep.subr.mxu0 0.0
    %781 = vmatpush1.msra.mxu0 %v517
    %782 = vmatprep.subr.mxu0 0.0
    %783 = vmatpush1.msra.mxu0 %v518
    %784 = vmatprep.subr.mxu0 0.0
    %785 = vmatpush1.msra.mxu0 %v519
    %786 = vmatprep.subr.mxu0 0.0
    %787 = vmatpush1.msra.mxu0 %v520
    %788 = vmatprep.subr.mxu0 0.0
    %789 = vmatpush1.msra.mxu0 %v521
    %790 = vmatprep.subr.mxu0 0.0
    %791 = vmatpush1.msra.mxu0 %v522
    %792 = vmatprep.subr.mxu0 0.0
    %793 = vmatpush1.msra.mxu0 %v523
    %794 = vmatprep.subr.mxu0 0.0
    %795 = vmatpush1.msra.mxu0 %v524
    %796 = vmatprep.subr.mxu0 0.0
    %797 = vmatpush1.msra.mxu0 %v525
    %798 = vmatprep.subr.mxu0 0.0
    %799 = vmatpush1.msra.mxu0 %v526
    %800 = vmatprep.subr.mxu0 0.0
    %801 = vmatpush1.msra.mxu0 %v527
    %802 = vmatprep.subr.mxu0 0.0
    %803 = vmatpush1.msra.mxu0 %v528
    %804 = vmatprep.subr.mxu0 0.0
    %805 = vmatpush1.msra.mxu0 %v529
    %806 = vmatprep.subr.mxu0 0.0
    %807 = vmatpush1.msra.mxu0 %v530
    %808 = vmatprep.subr.mxu0 0.0
    %809 = vmatpush1.msra.mxu0 %v531
    %810 = vmatprep.subr.mxu0 0.0
    %811 = vmatpush1.msra.mxu0 %v532
    %812 = vmatprep.subr.mxu0 0.0
    %813 = vmatpush1.msra.mxu0 %v533
    %814 = vmatprep.subr.mxu0 0.0
    %815 = vmatpush1.msra.mxu0 %v534
    %816 = vmatprep.subr.mxu0 0.0
    %817 = vmatpush1.msra.mxu0 %v535
    %818 = vmatprep.subr.mxu0 0.0
    %819 = vmatpush1.msra.mxu0 %v536
    %820 = vmatprep.subr.mxu0 0.0
    %821 = vmatpush1.msra.mxu0 %v537
    %822 = vmatprep.subr.mxu0 0.0
    %823 = vmatpush1.msra.mxu0 %v538
    %824 = vmatprep.subr.mxu0 0.0
    %825 = vmatpush1.msra.mxu0 %v539
    %826 = vmatprep.subr.mxu0 0.0
    %827 = vmatpush1.msra.mxu0 %v540
    %828 = vmatprep.subr.mxu0 0.0
    %829 = vmatpush1.msra.mxu0 %v541
    %830 = vmatprep.subr.mxu0 0.0
    %831 = vmatpush1.msra.mxu0 %v542
    %832 = vmatprep.subr.mxu0 0.0
    %833 = vmatpush1.msra.mxu0 %v543
    %834 = vmatprep.mubr.f32.mxu0 %v392
    %835 = vmatmul.mubr.f32.gmra.mrb[0].mxu0 %v370
    %v836 = vpop.f32.mrb[0].mxu0
    %v837 = vadd.f32 %v767, %v836
    %v838 = vpop.f32.mrb[0].mxu0
    %839 = vdwg.mxu0
    %840 = vmatprep.subr.mxu0 0.0
    %841 = vmatpush1.msra.mxu0 %v544
    %842 = vmatprep.subr.mxu0 0.0
    %843 = vmatpush1.msra.mxu0 %v545
    %844 = vmatprep.subr.mxu0 0.0
    %845 = vmatpush1.msra.mxu0 %v546
    %846 = vmatprep.subr.mxu0 0.0
    %847 = vmatpush1.msra.mxu0 %v547
    %848 = vmatprep.subr.mxu0 0.0
    %849 = vmatpush1.msra.mxu0 %v548
    %850 = vmatprep.subr.mxu0 0.0
    %851 = vmatpush1.msra.mxu0 %v549
    %852 = vmatprep.subr.mxu0 0.0
    %853 = vmatpush1.msra.mxu0 %v550
    %854 = vmatprep.subr.mxu0 0.0
    %855 = vmatpush1.msra.mxu0 %v551
    %856 = vmatprep.subr.mxu0 0.0
    %857 = vmatpush1.msra.mxu0 %v552
    %858 = vmatprep.subr.mxu0 0.0
    %859 = vmatpush1.msra.mxu0 %v553
    %860 = vmatprep.subr.mxu0 0.0
    %861 = vmatpush1.msra.mxu0 %v554
    %862 = vmatprep.subr.mxu0 0.0
    %863 = vmatpush1.msra.mxu0 %v555
    %864 = vmatprep.subr.mxu0 0.0
    %865 = vmatpush1.msra.mxu0 %v556
    %866 = vmatprep.subr.mxu0 0.0
    %867 = vmatpush1.msra.mxu0 %v557
    %868 = vmatprep.subr.mxu0 0.0
    %869 = vmatpush1.msra.mxu0 %v558
    %870 = vmatprep.subr.mxu0 0.0
    %871 = vmatpush1.msra.mxu0 %v559
    %872 = vmatprep.subr.mxu0 0.0
    %873 = vmatpush1.msra.mxu0 0.0
    %874 = vmatprep.subr.mxu0 0.0
    %875 = vmatpush1.msra.mxu0 0.0
    %876 = vmatprep.subr.mxu0 0.0
    %877 = vmatpush1.msra.mxu0 0.0
    %878 = vmatprep.subr.mxu0 0.0
    %879 = vmatpush1.msra.mxu0 0.0
    %880 = vmatprep.subr.mxu0 0.0
    %881 = vmatpush1.msra.mxu0 0.0
    %882 = vmatprep.subr.mxu0 0.0
    %883 = vmatpush1.msra.mxu0 0.0
    %884 = vmatprep.subr.mxu0 0.0
    %885 = vmatpush1.msra.mxu0 0.0
    %886 = vmatprep.subr.mxu0 0.0
    %887 = vmatpush1.msra.mxu0 0.0
    %888 = vmatprep.subr.mxu0 0.0
    %889 = vmatpush1.msra.mxu0 0.0
    %890 = vmatprep.subr.mxu0 0.0
    %891 = vmatpush1.msra.mxu0 0.0
    %892 = vmatprep.subr.mxu0 0.0
    %893 = vmatpush1.msra.mxu0 0.0
    %894 = vmatprep.subr.mxu0 0.0
    %895 = vmatpush1.msra.mxu0 0.0
    %896 = vmatprep.subr.mxu0 0.0
    %897 = vmatpush1.msra.mxu0 0.0
    %898 = vmatprep.subr.mxu0 0.0
    %899 = vmatpush1.msra.mxu0 0.0
    %900 = vmatprep.subr.mxu0 0.0
    %901 = vmatpush1.msra.mxu0 0.0
    %902 = vmatprep.subr.mxu0 0.0
    %903 = vmatpush1.msra.mxu0 0.0
    %904 = vmatprep.mubr.f32.mxu0 0.0
    %905 = vmatmul.mubr.f32.gmra.mrb[0].mxu0 %v414
    %v906 = vpop.f32.mrb[0].mxu0
    %v907 = vadd.f32 %v837, %v906
    %v908 = vpop.f32.mrb[0].mxu0
    %909 = vdwg.mxu0
    %v910 = vld [vmem:[#allocation9] sm:$0x1]
    %v911 = vld [vmem:[#allocation11] sm:$0x1]
    %v913 = vlaneseq
    %v914 = vshrl.u32 %v913, 7
    %v915 = vsub.s32 0, %v914
    %v916 = vrot.slane %v910, %v915
    %v918 = vmul.f32 %v907, %v916
    %v920 = vlaneseq
    %v921 = vshrl.u32 %v920, 7
    %v922 = vsub.s32 0, %v921
    %v923 = vrot.slane %v911, %v922
    %v925 = vadd.f32 %v918, %v923
    %v926 = vmax.f32 %v925, 0.0
    %927 = vst [vmem:[#allocation2] sm:$0xff] %v926
    %v928 = vld [vmem:[#allocation3] sm:$0x3]
    %v929 = vld [vmem:[#allocation3 + $0x4] sm:$0x3]
    %v930 = vld [vmem:[#allocation3 + $0x40] sm:$0x3]
    %v931 = vld [vmem:[#allocation3 + $0x44] sm:$0x3]
    %s932 = scalar_lea.vmem [#allocation3], 16
    %v933 = vld [vmem:[%s932] sm:$0x3]
    %v934 = vld [vmem:[%s932 + $0x4] sm:$0x3]
    %v935 = vld [vmem:[%s932 + $0x40] sm:$0x3]
    %v936 = vld [vmem:[%s932 + $0x44] sm:$0x3]
    %v937 = vld [vmem:[#allocation3 + $0x1] sm:$0x3]
    %v938 = vld [vmem:[#allocation3 + $0x5] sm:$0x3]
    %v939 = vld [vmem:[#allocation3 + $0x41] sm:$0x3]
    %v940 = vld [vmem:[#allocation3 + $0x45] sm:$0x3]
    %v941 = vld [vmem:[%s932 + $0x1] sm:$0x3]
    %v942 = vld [vmem:[%s932 + $0x5] sm:$0x3]
    %v943 = vld [vmem:[%s932 + $0x41] sm:$0x3]
    %v944 = vld [vmem:[%s932 + $0x45] sm:$0x3]
    %v945 = vld [vmem:[#allocation3 + $0x2] sm:$0x3]
    %v946 = vld [vmem:[#allocation3 + $0x6] sm:$0x3]
    %v947 = vld [vmem:[#allocation3 + $0x42] sm:$0x3]
    %v948 = vld [vmem:[#allocation3 + $0x46] sm:$0x3]
    %v949 = vld [vmem:[%s181] sm:$0x3]
    %v950 = vld [vmem:[%s181 + $0x4] sm:$0x3]
    %v951 = vld [vmem:[%s181 + $0x40] sm:$0x3]
    %v952 = vld [vmem:[%s181 + $0x44] sm:$0x3]
    %v953 = vld [vmem:[%s176] sm:$0x3]
    %v954 = vld [vmem:[%s176 + $0x4] sm:$0x3]
    %v955 = vld [vmem:[%s176 + $0x40] sm:$0x3]
    %v956 = vld [vmem:[%s176 + $0x44] sm:$0x3]
    %v957 = vld [vmem:[%s181 + $0x1] sm:$0x3]
    %v958 = vld [vmem:[%s181 + $0x5] sm:$0x3]
    %v959 = vld [vmem:[%s181 + $0x41] sm:$0x3]
    %v960 = vld [vmem:[%s181 + $0x45] sm:$0x3]
    %v961 = vld [vmem:[%s176 + $0x1] sm:$0x3]
    %v962 = vld [vmem:[%s176 + $0x5] sm:$0x3]
    %v963 = vld [vmem:[%s176 + $0x41] sm:$0x3]
    %v964 = vld [vmem:[%s176 + $0x45] sm:$0x3]
    %v965 = vld [vmem:[%s181 + $0x2] sm:$0x3]
    %v966 = vld [vmem:[%s181 + $0x6] sm:$0x3]
    %v967 = vld [vmem:[%s181 + $0x42] sm:$0x3]
    %v968 = vld [vmem:[%s181 + $0x46] sm:$0x3]
    %v969 = vld [vmem:[%s195] sm:$0x3]
    %v970 = vld [vmem:[%s195 + $0x4] sm:$0x3]
    %v971 = vld [vmem:[%s195 + $0x40] sm:$0x3]
    %v972 = vld [vmem:[%s195 + $0x44] sm:$0x3]
    %v973 = vld [vmem:[%s190] sm:$0x3]
    %v974 = vld [vmem:[%s190 + $0x4] sm:$0x3]
    %v975 = vld [vmem:[%s190 + $0x40] sm:$0x3]
    %v976 = vld [vmem:[%s190 + $0x44] sm:$0x3]
    %v977 = vld [vmem:[%s195 + $0x1] sm:$0x3]
    %v978 = vld [vmem:[%s195 + $0x5] sm:$0x3]
    %v979 = vld [vmem:[%s195 + $0x41] sm:$0x3]
    %v980 = vld [vmem:[%s195 + $0x45] sm:$0x3]
    %v981 = vld [vmem:[%s190 + $0x1] sm:$0x3]
    %v982 = vld [vmem:[%s190 + $0x5] sm:$0x3]
    %v983 = vld [vmem:[%s190 + $0x41] sm:$0x3]
    %v984 = vld [vmem:[%s190 + $0x45] sm:$0x3]
    %v985 = vld [vmem:[%s195 + $0x2] sm:$0x3]
    %v986 = vld [vmem:[%s195 + $0x6] sm:$0x3]
    %v987 = vld [vmem:[%s195 + $0x42] sm:$0x3]
    %v988 = vld [vmem:[%s195 + $0x46] sm:$0x3]
    %v989 = vld [vmem:[%s209] sm:$0x3]
    %v990 = vld [vmem:[%s209 + $0x4] sm:$0x3]
    %v991 = vld [vmem:[%s209 + $0x40] sm:$0x3]
    %v992 = vld [vmem:[%s209 + $0x44] sm:$0x3]
    %v993 = vld [vmem:[%s204] sm:$0x3]
    %v994 = vld [vmem:[%s204 + $0x4] sm:$0x3]
    %v995 = vld [vmem:[%s204 + $0x40] sm:$0x3]
    %v996 = vld [vmem:[%s204 + $0x44] sm:$0x3]
    %v997 = vld [vmem:[%s209 + $0x1] sm:$0x3]
    %v998 = vld [vmem:[%s209 + $0x5] sm:$0x3]
    %v999 = vld [vmem:[%s209 + $0x41] sm:$0x3]
    %v1000 = vld [vmem:[%s209 + $0x45] sm:$0x3]
    %v1001 = vld [vmem:[%s204 + $0x1] sm:$0x3]
    %v1002 = vld [vmem:[%s204 + $0x5] sm:$0x3]
    %v1003 = vld [vmem:[%s204 + $0x41] sm:$0x3]
    %v1004 = vld [vmem:[%s204 + $0x45] sm:$0x3]
    %v1005 = vld [vmem:[%s209 + $0x2] sm:$0x3]
    %v1006 = vld [vmem:[%s209 + $0x6] sm:$0x3]
    %v1007 = vld [vmem:[%s209 + $0x42] sm:$0x3]
    %v1008 = vld [vmem:[%s209 + $0x46] sm:$0x3]
    %s1009 = scalar_lea.vmem [#allocation3], 8
    %v1010 = vld [vmem:[%s1009] sm:$0x3]
    %v1011 = vld [vmem:[%s1009 + $0x4] sm:$0x3]
    %v1012 = vld [vmem:[%s1009 + $0x40] sm:$0x3]
    %v1013 = vld [vmem:[%s1009 + $0x44] sm:$0x3]
    %s1014 = scalar_lea.vmem [#allocation3], 24
    %v1015 = vld [vmem:[%s1014] sm:$0x3]
    %v1016 = vld [vmem:[%s1014 + $0x4] sm:$0x3]
    %v1017 = vld [vmem:[%s1014 + $0x40] sm:$0x3]
    %v1018 = vld [vmem:[%s1014 + $0x44] sm:$0x3]
    %v1019 = vld [vmem:[%s1009 + $0x1] sm:$0x3]
    %v1020 = vld [vmem:[%s1009 + $0x5] sm:$0x3]
    %v1021 = vld [vmem:[%s1009 + $0x41] sm:$0x3]
    %v1022 = vld [vmem:[%s1009 + $0x45] sm:$0x3]
    %v1023 = vld [vmem:[%s1014 + $0x1] sm:$0x3]
    %v1024 = vld [vmem:[%s1014 + $0x5] sm:$0x3]
    %v1025 = vld [vmem:[%s1014 + $0x41] sm:$0x3]
    %v1026 = vld [vmem:[%s1014 + $0x45] sm:$0x3]
    %v1027 = vld [vmem:[%s1009 + $0x2] sm:$0x3]
    %v1028 = vld [vmem:[%s1009 + $0x6] sm:$0x3]
    %v1029 = vld [vmem:[%s1009 + $0x42] sm:$0x3]
    %v1030 = vld [vmem:[%s1009 + $0x46] sm:$0x3]
    %v1035 = vcombine.low %v928, %v929
    %v1036 = vcombine.low %v930, %v931
    %v1038 = vunpack.c.l.s4 1983009808
    %v1039 = vunpack.c.0.s8 %v1038
    %v1040 = vlaneseq
    %v1041 = vshrl.u32 %v1040, 7
    %v1042 = vsub.s32 %v1039, %v1041
    %v1043 = vrot.slane %v1035, %v1042
    %v1045 = vunpack.c.l.s4 1983009808
    %v1046 = vunpack.c.0.s8 %v1045
    %v1047 = vlaneseq
    %v1048 = vshrl.u32 %v1047, 7
    %v1049 = vsub.s32 %v1046, %v1048
    %v1050 = vrot.slane %v1036, %v1049
    %v1051 = vcombine.low %v1043, %v1050
    %v1057 = vcombine.low %v933, %v934
    %v1058 = vcombine.low %v935, %v936
    %v1060 = vunpack.c.l.s4 1983009808
    %v1061 = vunpack.c.0.s8 %v1060
    %v1062 = vlaneseq
    %v1063 = vshrl.u32 %v1062, 7
    %v1064 = vsub.s32 %v1061, %v1063
    %v1065 = vrot.slane %v1057, %v1064
    %v1067 = vunpack.c.l.s4 1983009808
    %v1068 = vunpack.c.0.s8 %v1067
    %v1069 = vlaneseq
    %v1070 = vshrl.u32 %v1069, 7
    %v1071 = vsub.s32 %v1068, %v1070
    %v1072 = vrot.slane %v1058, %v1071
    %v1073 = vcombine.low %v1065, %v1072
    %v1079 = vcombine.low %v937, %v938
    %v1080 = vcombine.low %v939, %v940
    %v1082 = vunpack.c.l.s4 1983009808
    %v1083 = vunpack.c.0.s8 %v1082
    %v1084 = vlaneseq
    %v1085 = vshrl.u32 %v1084, 7
    %v1086 = vsub.s32 %v1083, %v1085
    %v1087 = vrot.slane %v1079, %v1086
    %v1089 = vunpack.c.l.s4 1983009808
    %v1090 = vunpack.c.0.s8 %v1089
    %v1091 = vlaneseq
    %v1092 = vshrl.u32 %v1091, 7
    %v1093 = vsub.s32 %v1090, %v1092
    %v1094 = vrot.slane %v1080, %v1093
    %v1095 = vcombine.low %v1087, %v1094
    %v1101 = vcombine.low %v941, %v942
    %v1102 = vcombine.low %v943, %v944
    %v1104 = vunpack.c.l.s4 1983009808
    %v1105 = vunpack.c.0.s8 %v1104
    %v1106 = vlaneseq
    %v1107 = vshrl.u32 %v1106, 7
    %v1108 = vsub.s32 %v1105, %v1107
    %v1109 = vrot.slane %v1101, %v1108
    %v1111 = vunpack.c.l.s4 1983009808
    %v1112 = vunpack.c.0.s8 %v1111
    %v1113 = vlaneseq
    %v1114 = vshrl.u32 %v1113, 7
    %v1115 = vsub.s32 %v1112, %v1114
    %v1116 = vrot.slane %v1102, %v1115
    %v1117 = vcombine.low %v1109, %v1116
    %v1123 = vcombine.low %v945, %v946
    %v1124 = vcombine.low %v947, %v948
    %v1126 = vunpack.c.l.s4 1983009808
    %v1127 = vunpack.c.0.s8 %v1126
    %v1128 = vlaneseq
    %v1129 = vshrl.u32 %v1128, 7
    %v1130 = vsub.s32 %v1127, %v1129
    %v1131 = vrot.slane %v1123, %v1130
    %v1133 = vunpack.c.l.s4 1983009808
    %v1134 = vunpack.c.0.s8 %v1133
    %v1135 = vlaneseq
    %v1136 = vshrl.u32 %v1135, 7
    %v1137 = vsub.s32 %v1134, %v1136
    %v1138 = vrot.slane %v1124, %v1137
    %v1139 = vcombine.low %v1131, %v1138
    %v1145 = vcombine.low %v949, %v950
    %v1146 = vcombine.low %v951, %v952
    %v1148 = vunpack.c.l.s4 1983009808
    %v1149 = vunpack.c.0.s8 %v1148
    %v1150 = vlaneseq
    %v1151 = vshrl.u32 %v1150, 7
    %v1152 = vsub.s32 %v1149, %v1151
    %v1153 = vrot.slane %v1145, %v1152
    %v1155 = vunpack.c.l.s4 1983009808
    %v1156 = vunpack.c.0.s8 %v1155
    %v1157 = vlaneseq
    %v1158 = vshrl.u32 %v1157, 7
    %v1159 = vsub.s32 %v1156, %v1158
    %v1160 = vrot.slane %v1146, %v1159
    %v1161 = vcombine.low %v1153, %v1160
    %v1167 = vcombine.low %v953, %v954
    %v1168 = vcombine.low %v955, %v956
    %v1170 = vunpack.c.l.s4 1983009808
    %v1171 = vunpack.c.0.s8 %v1170
    %v1172 = vlaneseq
    %v1173 = vshrl.u32 %v1172, 7
    %v1174 = vsub.s32 %v1171, %v1173
    %v1175 = vrot.slane %v1167, %v1174
    %v1177 = vunpack.c.l.s4 1983009808
    %v1178 = vunpack.c.0.s8 %v1177
    %v1179 = vlaneseq
    %v1180 = vshrl.u32 %v1179, 7
    %v1181 = vsub.s32 %v1178, %v1180
    %v1182 = vrot.slane %v1168, %v1181
    %v1183 = vcombine.low %v1175, %v1182
    %v1189 = vcombine.low %v957, %v958
    %v1190 = vcombine.low %v959, %v960
    %v1192 = vunpack.c.l.s4 1983009808
    %v1193 = vunpack.c.0.s8 %v1192
    %v1194 = vlaneseq
    %v1195 = vshrl.u32 %v1194, 7
    %v1196 = vsub.s32 %v1193, %v1195
    %v1197 = vrot.slane %v1189, %v1196
    %v1199 = vunpack.c.l.s4 1983009808
    %v1200 = vunpack.c.0.s8 %v1199
    %v1201 = vlaneseq
    %v1202 = vshrl.u32 %v1201, 7
    %v1203 = vsub.s32 %v1200, %v1202
    %v1204 = vrot.slane %v1190, %v1203
    %v1205 = vcombine.low %v1197, %v1204
    %v1211 = vcombine.low %v961, %v962
    %v1212 = vcombine.low %v963, %v964
    %v1214 = vunpack.c.l.s4 1983009808
    %v1215 = vunpack.c.0.s8 %v1214
    %v1216 = vlaneseq
    %v1217 = vshrl.u32 %v1216, 7
    %v1218 = vsub.s32 %v1215, %v1217
    %v1219 = vrot.slane %v1211, %v1218
    %v1221 = vunpack.c.l.s4 1983009808
    %v1222 = vunpack.c.0.s8 %v1221
    %v1223 = vlaneseq
    %v1224 = vshrl.u32 %v1223, 7
    %v1225 = vsub.s32 %v1222, %v1224
    %v1226 = vrot.slane %v1212, %v1225
    %v1227 = vcombine.low %v1219, %v1226
    %v1233 = vcombine.low %v965, %v966
    %v1234 = vcombine.low %v967, %v968
    %v1236 = vunpack.c.l.s4 1983009808
    %v1237 = vunpack.c.0.s8 %v1236
    %v1238 = vlaneseq
    %v1239 = vshrl.u32 %v1238, 7
    %v1240 = vsub.s32 %v1237, %v1239
    %v1241 = vrot.slane %v1233, %v1240
    %v1243 = vunpack.c.l.s4 1983009808
    %v1244 = vunpack.c.0.s8 %v1243
    %v1245 = vlaneseq
    %v1246 = vshrl.u32 %v1245, 7
    %v1247 = vsub.s32 %v1244, %v1246
    %v1248 = vrot.slane %v1234, %v1247
    %v1249 = vcombine.low %v1241, %v1248
    %v1255 = vcombine.low %v969, %v970
    %v1256 = vcombine.low %v971, %v972
    %v1258 = vunpack.c.l.s4 1983009808
    %v1259 = vunpack.c.0.s8 %v1258
    %v1260 = vlaneseq
    %v1261 = vshrl.u32 %v1260, 7
    %v1262 = vsub.s32 %v1259, %v1261
    %v1263 = vrot.slane %v1255, %v1262
    %v1265 = vunpack.c.l.s4 1983009808
    %v1266 = vunpack.c.0.s8 %v1265
    %v1267 = vlaneseq
    %v1268 = vshrl.u32 %v1267, 7
    %v1269 = vsub.s32 %v1266, %v1268
    %v1270 = vrot.slane %v1256, %v1269
    %v1271 = vcombine.low %v1263, %v1270
    %v1277 = vcombine.low %v973, %v974
    %v1278 = vcombine.low %v975, %v976
    %v1280 = vunpack.c.l.s4 1983009808
    %v1281 = vunpack.c.0.s8 %v1280
    %v1282 = vlaneseq
    %v1283 = vshrl.u32 %v1282, 7
    %v1284 = vsub.s32 %v1281, %v1283
    %v1285 = vrot.slane %v1277, %v1284
    %v1287 = vunpack.c.l.s4 1983009808
    %v1288 = vunpack.c.0.s8 %v1287
    %v1289 = vlaneseq
    %v1290 = vshrl.u32 %v1289, 7
    %v1291 = vsub.s32 %v1288, %v1290
    %v1292 = vrot.slane %v1278, %v1291
    %v1293 = vcombine.low %v1285, %v1292
    %v1299 = vcombine.low %v977, %v978
    %v1300 = vcombine.low %v979, %v980
    %v1302 = vunpack.c.l.s4 1983009808
    %v1303 = vunpack.c.0.s8 %v1302
    %v1304 = vlaneseq
    %v1305 = vshrl.u32 %v1304, 7
    %v1306 = vsub.s32 %v1303, %v1305
    %v1307 = vrot.slane %v1299, %v1306
    %v1309 = vunpack.c.l.s4 1983009808
    %v1310 = vunpack.c.0.s8 %v1309
    %v1311 = vlaneseq
    %v1312 = vshrl.u32 %v1311, 7
    %v1313 = vsub.s32 %v1310, %v1312
    %v1314 = vrot.slane %v1300, %v1313
    %v1315 = vcombine.low %v1307, %v1314
    %v1321 = vcombine.low %v981, %v982
    %v1322 = vcombine.low %v983, %v984
    %v1324 = vunpack.c.l.s4 1983009808
    %v1325 = vunpack.c.0.s8 %v1324
    %v1326 = vlaneseq
    %v1327 = vshrl.u32 %v1326, 7
    %v1328 = vsub.s32 %v1325, %v1327
    %v1329 = vrot.slane %v1321, %v1328
    %v1331 = vunpack.c.l.s4 1983009808
    %v1332 = vunpack.c.0.s8 %v1331
    %v1333 = vlaneseq
    %v1334 = vshrl.u32 %v1333, 7
    %v1335 = vsub.s32 %v1332, %v1334
    %v1336 = vrot.slane %v1322, %v1335
    %v1337 = vcombine.low %v1329, %v1336
    %v1343 = vcombine.low %v985, %v986
    %v1344 = vcombine.low %v987, %v988
    %v1346 = vunpack.c.l.s4 1983009808
    %v1347 = vunpack.c.0.s8 %v1346
    %v1348 = vlaneseq
    %v1349 = vshrl.u32 %v1348, 7
    %v1350 = vsub.s32 %v1347, %v1349
    %v1351 = vrot.slane %v1343, %v1350
    %v1353 = vunpack.c.l.s4 1983009808
    %v1354 = vunpack.c.0.s8 %v1353
    %v1355 = vlaneseq
    %v1356 = vshrl.u32 %v1355, 7
    %v1357 = vsub.s32 %v1354, %v1356
    %v1358 = vrot.slane %v1344, %v1357
    %v1359 = vcombine.low %v1351, %v1358
    %v1365 = vcombine.low %v989, %v990
    %v1366 = vcombine.low %v991, %v992
    %v1368 = vunpack.c.l.s4 1983009808
    %v1369 = vunpack.c.0.s8 %v1368
    %v1370 = vlaneseq
    %v1371 = vshrl.u32 %v1370, 7
    %v1372 = vsub.s32 %v1369, %v1371
    %v1373 = vrot.slane %v1365, %v1372
    %v1375 = vunpack.c.l.s4 1983009808
    %v1376 = vunpack.c.0.s8 %v1375
    %v1377 = vlaneseq
    %v1378 = vshrl.u32 %v1377, 7
    %v1379 = vsub.s32 %v1376, %v1378
    %v1380 = vrot.slane %v1366, %v1379
    %v1381 = vcombine.low %v1373, %v1380
    %v1387 = vcombine.low %v993, %v994
    %v1388 = vcombine.low %v995, %v996
    %v1390 = vunpack.c.l.s4 1983009808
    %v1391 = vunpack.c.0.s8 %v1390
    %v1392 = vlaneseq
    %v1393 = vshrl.u32 %v1392, 7
    %v1394 = vsub.s32 %v1391, %v1393
    %v1395 = vrot.slane %v1387, %v1394
    %v1397 = vunpack.c.l.s4 1983009808
    %v1398 = vunpack.c.0.s8 %v1397
    %v1399 = vlaneseq
    %v1400 = vshrl.u32 %v1399, 7
    %v1401 = vsub.s32 %v1398, %v1400
    %v1402 = vrot.slane %v1388, %v1401
    %v1403 = vcombine.low %v1395, %v1402
    %v1409 = vcombine.low %v997, %v998
    %v1410 = vcombine.low %v999, %v1000
    %v1412 = vunpack.c.l.s4 1983009808
    %v1413 = vunpack.c.0.s8 %v1412
    %v1414 = vlaneseq
    %v1415 = vshrl.u32 %v1414, 7
    %v1416 = vsub.s32 %v1413, %v1415
    %v1417 = vrot.slane %v1409, %v1416
    %v1419 = vunpack.c.l.s4 1983009808
    %v1420 = vunpack.c.0.s8 %v1419
    %v1421 = vlaneseq
    %v1422 = vshrl.u32 %v1421, 7
    %v1423 = vsub.s32 %v1420, %v1422
    %v1424 = vrot.slane %v1410, %v1423
    %v1425 = vcombine.low %v1417, %v1424
    %v1431 = vcombine.low %v1001, %v1002
    %v1432 = vcombine.low %v1003, %v1004
    %v1434 = vunpack.c.l.s4 1983009808
    %v1435 = vunpack.c.0.s8 %v1434
    %v1436 = vlaneseq
    %v1437 = vshrl.u32 %v1436, 7
    %v1438 = vsub.s32 %v1435, %v1437
    %v1439 = vrot.slane %v1431, %v1438
    %v1441 = vunpack.c.l.s4 1983009808
    %v1442 = vunpack.c.0.s8 %v1441
    %v1443 = vlaneseq
    %v1444 = vshrl.u32 %v1443, 7
    %v1445 = vsub.s32 %v1442, %v1444
    %v1446 = vrot.slane %v1432, %v1445
    %v1447 = vcombine.low %v1439, %v1446
    %v1453 = vcombine.low %v1005, %v1006
    %v1454 = vcombine.low %v1007, %v1008
    %v1456 = vunpack.c.l.s4 1983009808
    %v1457 = vunpack.c.0.s8 %v1456
    %v1458 = vlaneseq
    %v1459 = vshrl.u32 %v1458, 7
    %v1460 = vsub.s32 %v1457, %v1459
    %v1461 = vrot.slane %v1453, %v1460
    %v1463 = vunpack.c.l.s4 1983009808
    %v1464 = vunpack.c.0.s8 %v1463
    %v1465 = vlaneseq
    %v1466 = vshrl.u32 %v1465, 7
    %v1467 = vsub.s32 %v1464, %v1466
    %v1468 = vrot.slane %v1454, %v1467
    %v1469 = vcombine.low %v1461, %v1468
    %v1475 = vcombine.low %v1010, %v1011
    %v1476 = vcombine.low %v1012, %v1013
    %v1478 = vunpack.c.l.s4 1983009808
    %v1479 = vunpack.c.0.s8 %v1478
    %v1480 = vlaneseq
    %v1481 = vshrl.u32 %v1480, 7
    %v1482 = vsub.s32 %v1479, %v1481
    %v1483 = vrot.slane %v1475, %v1482
    %v1485 = vunpack.c.l.s4 1983009808
    %v1486 = vunpack.c.0.s8 %v1485
    %v1487 = vlaneseq
    %v1488 = vshrl.u32 %v1487, 7
    %v1489 = vsub.s32 %v1486, %v1488
    %v1490 = vrot.slane %v1476, %v1489
    %v1491 = vcombine.low %v1483, %v1490
    %v1497 = vcombine.low %v1015, %v1016
    %v1498 = vcombine.low %v1017, %v1018
    %v1500 = vunpack.c.l.s4 1983009808
    %v1501 = vunpack.c.0.s8 %v1500
    %v1502 = vlaneseq
    %v1503 = vshrl.u32 %v1502, 7
    %v1504 = vsub.s32 %v1501, %v1503
    %v1505 = vrot.slane %v1497, %v1504
    %v1507 = vunpack.c.l.s4 1983009808
    %v1508 = vunpack.c.0.s8 %v1507
    %v1509 = vlaneseq
    %v1510 = vshrl.u32 %v1509, 7
    %v1511 = vsub.s32 %v1508, %v1510
    %v1512 = vrot.slane %v1498, %v1511
    %v1513 = vcombine.low %v1505, %v1512
    %v1519 = vcombine.low %v1019, %v1020
    %v1520 = vcombine.low %v1021, %v1022
    %v1522 = vunpack.c.l.s4 1983009808
    %v1523 = vunpack.c.0.s8 %v1522
    %v1524 = vlaneseq
    %v1525 = vshrl.u32 %v1524, 7
    %v1526 = vsub.s32 %v1523, %v1525
    %v1527 = vrot.slane %v1519, %v1526
    %v1529 = vunpack.c.l.s4 1983009808
    %v1530 = vunpack.c.0.s8 %v1529
    %v1531 = vlaneseq
    %v1532 = vshrl.u32 %v1531, 7
    %v1533 = vsub.s32 %v1530, %v1532
    %v1534 = vrot.slane %v1520, %v1533
    %v1535 = vcombine.low %v1527, %v1534
    %v1541 = vcombine.low %v1023, %v1024
    %v1542 = vcombine.low %v1025, %v1026
    %v1544 = vunpack.c.l.s4 1983009808
    %v1545 = vunpack.c.0.s8 %v1544
    %v1546 = vlaneseq
    %v1547 = vshrl.u32 %v1546, 7
    %v1548 = vsub.s32 %v1545, %v1547
    %v1549 = vrot.slane %v1541, %v1548
    %v1551 = vunpack.c.l.s4 1983009808
    %v1552 = vunpack.c.0.s8 %v1551
    %v1553 = vlaneseq
    %v1554 = vshrl.u32 %v1553, 7
    %v1555 = vsub.s32 %v1552, %v1554
    %v1556 = vrot.slane %v1542, %v1555
    %v1557 = vcombine.low %v1549, %v1556
    %v1563 = vcombine.low %v1027, %v1028
    %v1564 = vcombine.low %v1029, %v1030
    %v1566 = vunpack.c.l.s4 1983009808
    %v1567 = vunpack.c.0.s8 %v1566
    %v1568 = vlaneseq
    %v1569 = vshrl.u32 %v1568, 7
    %v1570 = vsub.s32 %v1567, %v1569
    %v1571 = vrot.slane %v1563, %v1570
    %v1573 = vunpack.c.l.s4 1983009808
    %v1574 = vunpack.c.0.s8 %v1573
    %v1575 = vlaneseq
    %v1576 = vshrl.u32 %v1575, 7
    %v1577 = vsub.s32 %v1574, %v1576
    %v1578 = vrot.slane %v1564, %v1577
    %v1579 = vcombine.low %v1571, %v1578
    %v1581 = vld [vmem:[#allocation8] sm:$0xff]
    %v1582 = vld [vmem:[#allocation8 + $0x8] sm:$0xff]
    %v1583 = vld [vmem:[#allocation8 + $0x10] sm:$0xff]
    %v1584 = vld [vmem:[#allocation8 + $0x18] sm:$0xff]
    %v1585 = vld [vmem:[#allocation8 + $0x20] sm:$0xff]
    %v1586 = vld [vmem:[#allocation8 + $0x28] sm:$0xff]
    %v1587 = vld [vmem:[#allocation8 + $0x30] sm:$0xff]
    %v1588 = vld [vmem:[#allocation8 + $0x38] sm:$0xff]
    %v1589 = vld [vmem:[#allocation8 + $0x40] sm:$0xff]
    %v1590 = vld [vmem:[#allocation8 + $0x48] sm:$0xff]
    %v1591 = vld [vmem:[#allocation8 + $0x50] sm:$0xff]
    %v1592 = vld [vmem:[#allocation8 + $0x58] sm:$0xff]
    %v1593 = vld [vmem:[#allocation8 + $0x60] sm:$0xff]
    %v1594 = vld [vmem:[#allocation8 + $0x68] sm:$0xff]
    %v1595 = vld [vmem:[#allocation8 + $0x70] sm:$0xff]
    %v1596 = vld [vmem:[#allocation8 + $0x78] sm:$0xff]
    %v1597 = vld [vmem:[#allocation8 + $0x80] sm:$0xff]
    %v1598 = vld [vmem:[#allocation8 + $0x88] sm:$0xff]
    %v1599 = vld [vmem:[#allocation8 + $0x90] sm:$0xff]
    %v1600 = vld [vmem:[#allocation8 + $0x98] sm:$0xff]
    %v1601 = vld [vmem:[#allocation8 + $0xa0] sm:$0xff]
    %v1602 = vld [vmem:[#allocation8 + $0xa8] sm:$0xff]
    %v1603 = vld [vmem:[#allocation8 + $0xb0] sm:$0xff]
    %v1604 = vld [vmem:[#allocation8 + $0xb8] sm:$0xff]
    %v1605 = vld [vmem:[#allocation8 + $0xc0] sm:$0xff]
    %v1606 = vld [vmem:[#allocation8 + $0xc8] sm:$0xff]
    %v1607 = vld [vmem:[#allocation8 + $0xd0] sm:$0xff]
    %v1608 = vld [vmem:[#allocation8 + $0xd8] sm:$0xff]
    %v1609 = vld [vmem:[#allocation8 + $0xe0] sm:$0xff]
    %v1610 = vld [vmem:[#allocation8 + $0xe8] sm:$0xff]
    %v1611 = vld [vmem:[#allocation8 + $0xf0] sm:$0xff]
    %v1612 = vld [vmem:[#allocation8 + $0xf8] sm:$0xff]
    %v1613 = vld [vmem:[#allocation8 + $0x100] sm:$0xff]
    %v1614 = vld [vmem:[#allocation8 + $0x108] sm:$0xff]
    %v1615 = vld [vmem:[#allocation8 + $0x110] sm:$0xff]
    %v1616 = vld [vmem:[#allocation8 + $0x118] sm:$0xff]
    %v1617 = vld [vmem:[#allocation8 + $0x120] sm:$0xff]
    %v1618 = vld [vmem:[#allocation8 + $0x128] sm:$0xff]
    %v1619 = vld [vmem:[#allocation8 + $0x130] sm:$0xff]
    %v1620 = vld [vmem:[#allocation8 + $0x138] sm:$0xff]
    %v1621 = vld [vmem:[#allocation8 + $0x140] sm:$0xff]
    %v1622 = vld [vmem:[#allocation8 + $0x148] sm:$0xff]
    %v1623 = vld [vmem:[#allocation8 + $0x150] sm:$0xff]
    %v1624 = vld [vmem:[#allocation8 + $0x158] sm:$0xff]
    %v1625 = vld [vmem:[#allocation8 + $0x160] sm:$0xff]
    %v1626 = vld [vmem:[#allocation8 + $0x168] sm:$0xff]
    %v1627 = vld [vmem:[#allocation8 + $0x170] sm:$0xff]
    %v1628 = vld [vmem:[#allocation8 + $0x178] sm:$0xff]
    %v1629 = vld [vmem:[#allocation8 + $0x180] sm:$0xff]
    %v1630 = vld [vmem:[#allocation8 + $0x188] sm:$0xff]
    %v1631 = vld [vmem:[#allocation8 + $0x190] sm:$0xff]
    %v1632 = vld [vmem:[#allocation8 + $0x198] sm:$0xff]
    %v1633 = vld [vmem:[#allocation8 + $0x1a0] sm:$0xff]
    %v1634 = vld [vmem:[#allocation8 + $0x1a8] sm:$0xff]
    %v1635 = vld [vmem:[#allocation8 + $0x1b0] sm:$0xff]
    %v1636 = vld [vmem:[#allocation8 + $0x1b8] sm:$0xff]
    %v1637 = vld [vmem:[#allocation8 + $0x1c0] sm:$0xff]
    %v1638 = vld [vmem:[#allocation8 + $0x1c8] sm:$0xff]
    %v1639 = vld [vmem:[#allocation8 + $0x1d0] sm:$0xff]
    %v1640 = vld [vmem:[#allocation8 + $0x1d8] sm:$0xff]
    %v1641 = vld [vmem:[#allocation8 + $0x1e0] sm:$0xff]
    %v1642 = vld [vmem:[#allocation8 + $0x1e8] sm:$0xff]
    %v1643 = vld [vmem:[#allocation8 + $0x1f0] sm:$0xff]
    %v1644 = vld [vmem:[#allocation8 + $0x1f8] sm:$0xff]
    %v1645 = vld [vmem:[#allocation8 + $0x200] sm:$0xff]
    %v1646 = vld [vmem:[#allocation8 + $0x208] sm:$0xff]
    %v1647 = vld [vmem:[#allocation8 + $0x210] sm:$0xff]
    %v1648 = vld [vmem:[#allocation8 + $0x218] sm:$0xff]
    %v1649 = vld [vmem:[#allocation8 + $0x220] sm:$0xff]
    %v1650 = vld [vmem:[#allocation8 + $0x228] sm:$0xff]
    %v1651 = vld [vmem:[#allocation8 + $0x230] sm:$0xff]
    %v1652 = vld [vmem:[#allocation8 + $0x238] sm:$0xff]
    %v1653 = vld [vmem:[#allocation8 + $0x240] sm:$0xff]
    %v1654 = vld [vmem:[#allocation8 + $0x248] sm:$0xff]
    %v1655 = vld [vmem:[#allocation8 + $0x250] sm:$0xff]
    %v1656 = vld [vmem:[#allocation8 + $0x258] sm:$0xff]
    %v1657 = vld [vmem:[#allocation8 + $0x260] sm:$0xff]
    %v1658 = vld [vmem:[#allocation8 + $0x268] sm:$0xff]
    %v1659 = vld [vmem:[#allocation8 + $0x270] sm:$0xff]
    %v1660 = vld [vmem:[#allocation8 + $0x278] sm:$0xff]
    %v1661 = vld [vmem:[#allocation8 + $0x280] sm:$0xff]
    %v1662 = vld [vmem:[#allocation8 + $0x288] sm:$0xff]
    %v1663 = vld [vmem:[#allocation8 + $0x290] sm:$0xff]
    %v1664 = vld [vmem:[#allocation8 + $0x298] sm:$0xff]
    %v1665 = vld [vmem:[#allocation8 + $0x2a0] sm:$0xff]
    %v1666 = vld [vmem:[#allocation8 + $0x2a8] sm:$0xff]
    %v1667 = vld [vmem:[#allocation8 + $0x2b0] sm:$0xff]
    %v1668 = vld [vmem:[#allocation8 + $0x2b8] sm:$0xff]
    %v1669 = vld [vmem:[#allocation8 + $0x2c0] sm:$0xff]
    %v1670 = vld [vmem:[#allocation8 + $0x2c8] sm:$0xff]
    %v1671 = vld [vmem:[#allocation8 + $0x2d0] sm:$0xff]
    %v1672 = vld [vmem:[#allocation8 + $0x2d8] sm:$0xff]
    %v1673 = vld [vmem:[#allocation8 + $0x2e0] sm:$0xff]
    %v1674 = vld [vmem:[#allocation8 + $0x2e8] sm:$0xff]
    %v1675 = vld [vmem:[#allocation8 + $0x2f0] sm:$0xff]
    %v1676 = vld [vmem:[#allocation8 + $0x2f8] sm:$0xff]
    %v1677 = vld [vmem:[#allocation8 + $0x300] sm:$0xff]
    %v1678 = vld [vmem:[#allocation8 + $0x308] sm:$0xff]
    %v1679 = vld [vmem:[#allocation8 + $0x310] sm:$0xff]
    %v1680 = vld [vmem:[#allocation8 + $0x318] sm:$0xff]
    %v1681 = vld [vmem:[#allocation8 + $0x320] sm:$0xff]
    %v1682 = vld [vmem:[#allocation8 + $0x328] sm:$0xff]
    %v1683 = vld [vmem:[#allocation8 + $0x330] sm:$0xff]
    %v1684 = vld [vmem:[#allocation8 + $0x338] sm:$0xff]
    %v1685 = vld [vmem:[#allocation8 + $0x340] sm:$0xff]
    %v1686 = vld [vmem:[#allocation8 + $0x348] sm:$0xff]
    %v1687 = vld [vmem:[#allocation8 + $0x350] sm:$0xff]
    %v1688 = vld [vmem:[#allocation8 + $0x358] sm:$0xff]
    %v1689 = vld [vmem:[#allocation8 + $0x360] sm:$0xff]
    %v1690 = vld [vmem:[#allocation8 + $0x368] sm:$0xff]
    %v1691 = vld [vmem:[#allocation8 + $0x370] sm:$0xff]
    %v1692 = vld [vmem:[#allocation8 + $0x378] sm:$0xff]
    %v1693 = vld [vmem:[#allocation8 + $0x380] sm:$0xff]
    %v1694 = vld [vmem:[#allocation8 + $0x388] sm:$0xff]
    %v1695 = vld [vmem:[#allocation8 + $0x390] sm:$0xff]
    %v1696 = vld [vmem:[#allocation8 + $0x398] sm:$0xff]
    %v1697 = vld [vmem:[#allocation8 + $0x3a0] sm:$0xff]
    %v1698 = vld [vmem:[#allocation8 + $0x3a8] sm:$0xff]
    %v1699 = vld [vmem:[#allocation8 + $0x3b0] sm:$0xff]
    %v1700 = vld [vmem:[#allocation8 + $0x3b8] sm:$0xff]
    %v1701 = vld [vmem:[#allocation8 + $0x3c0] sm:$0xff]
    %v1702 = vld [vmem:[#allocation8 + $0x3c8] sm:$0xff]
    %v1703 = vld [vmem:[#allocation8 + $0x3d0] sm:$0xff]
    %v1704 = vld [vmem:[#allocation8 + $0x3d8] sm:$0xff]
    %v1705 = vld [vmem:[#allocation8 + $0x3e0] sm:$0xff]
    %v1706 = vld [vmem:[#allocation8 + $0x3e8] sm:$0xff]
    %v1707 = vld [vmem:[#allocation8 + $0x3f0] sm:$0xff]
    %v1708 = vld [vmem:[#allocation8 + $0x3f8] sm:$0xff]
    %v1709 = vld [vmem:[#allocation8 + $0x400] sm:$0xff]
    %v1710 = vld [vmem:[#allocation8 + $0x408] sm:$0xff]
    %v1711 = vld [vmem:[#allocation8 + $0x410] sm:$0xff]
    %v1712 = vld [vmem:[#allocation8 + $0x418] sm:$0xff]
    %v1713 = vld [vmem:[#allocation8 + $0x420] sm:$0xff]
    %v1714 = vld [vmem:[#allocation8 + $0x428] sm:$0xff]
    %v1715 = vld [vmem:[#allocation8 + $0x430] sm:$0xff]
    %v1716 = vld [vmem:[#allocation8 + $0x438] sm:$0xff]
    %v1717 = vld [vmem:[#allocation8 + $0x440] sm:$0xff]
    %v1718 = vld [vmem:[#allocation8 + $0x448] sm:$0xff]
    %v1719 = vld [vmem:[#allocation8 + $0x450] sm:$0xff]
    %v1720 = vld [vmem:[#allocation8 + $0x458] sm:$0xff]
    %v1721 = vld [vmem:[#allocation8 + $0x460] sm:$0xff]
    %v1722 = vld [vmem:[#allocation8 + $0x468] sm:$0xff]
    %v1723 = vld [vmem:[#allocation8 + $0x470] sm:$0xff]
    %v1724 = vld [vmem:[#allocation8 + $0x478] sm:$0xff]
    %v1725 = vld [vmem:[#allocation8 + $0x480] sm:$0xff]
    %v1726 = vld [vmem:[#allocation8 + $0x488] sm:$0xff]
    %v1727 = vld [vmem:[#allocation8 + $0x490] sm:$0xff]
    %v1728 = vld [vmem:[#allocation8 + $0x498] sm:$0xff]
    %v1729 = vld [vmem:[#allocation8 + $0x4a0] sm:$0xff]
    %v1730 = vld [vmem:[#allocation8 + $0x4a8] sm:$0xff]
    %v1731 = vld [vmem:[#allocation8 + $0x4b0] sm:$0xff]
    %v1732 = vld [vmem:[#allocation8 + $0x4b8] sm:$0xff]
    %v1733 = vld [vmem:[#allocation8 + $0x4c0] sm:$0xff]
    %v1734 = vld [vmem:[#allocation8 + $0x4c8] sm:$0xff]
    %v1735 = vld [vmem:[#allocation8 + $0x4d0] sm:$0xff]
    %v1736 = vld [vmem:[#allocation8 + $0x4d8] sm:$0xff]
    %v1737 = vld [vmem:[#allocation8 + $0x4e0] sm:$0xff]
    %v1738 = vld [vmem:[#allocation8 + $0x4e8] sm:$0xff]
    %v1739 = vld [vmem:[#allocation8 + $0x4f0] sm:$0xff]
    %v1740 = vld [vmem:[#allocation8 + $0x4f8] sm:$0xff]
    %v1741 = vld [vmem:[#allocation8 + $0x500] sm:$0xff]
    %v1742 = vld [vmem:[#allocation8 + $0x508] sm:$0xff]
    %v1743 = vld [vmem:[#allocation8 + $0x510] sm:$0xff]
    %v1744 = vld [vmem:[#allocation8 + $0x518] sm:$0xff]
    %v1745 = vld [vmem:[#allocation8 + $0x520] sm:$0xff]
    %v1746 = vld [vmem:[#allocation8 + $0x528] sm:$0xff]
    %v1747 = vld [vmem:[#allocation8 + $0x530] sm:$0xff]
    %v1748 = vld [vmem:[#allocation8 + $0x538] sm:$0xff]
    %v1749 = vld [vmem:[#allocation8 + $0x540] sm:$0xff]
    %v1750 = vld [vmem:[#allocation8 + $0x548] sm:$0xff]
    %v1751 = vld [vmem:[#allocation8 + $0x550] sm:$0xff]
    %v1752 = vld [vmem:[#allocation8 + $0x558] sm:$0xff]
    %v1753 = vld [vmem:[#allocation8 + $0x560] sm:$0xff]
    %v1754 = vld [vmem:[#allocation8 + $0x568] sm:$0xff]
    %v1755 = vld [vmem:[#allocation8 + $0x570] sm:$0xff]
    %v1756 = vld [vmem:[#allocation8 + $0x578] sm:$0xff]
    %v1757 = vld [vmem:[#allocation8 + $0x580] sm:$0xff]
    %v1758 = vld [vmem:[#allocation8 + $0x588] sm:$0xff]
    %v1759 = vld [vmem:[#allocation8 + $0x590] sm:$0xff]
    %v1760 = vld [vmem:[#allocation8 + $0x598] sm:$0xff]
    %v1761 = vld [vmem:[#allocation8 + $0x5a0] sm:$0xff]
    %v1762 = vld [vmem:[#allocation8 + $0x5a8] sm:$0xff]
    %v1763 = vld [vmem:[#allocation8 + $0x5b0] sm:$0xff]
    %v1764 = vld [vmem:[#allocation8 + $0x5b8] sm:$0xff]
    %v1765 = vld [vmem:[#allocation8 + $0x5c0] sm:$0xff]
    %v1766 = vld [vmem:[#allocation8 + $0x5c8] sm:$0xff]
    %v1767 = vld [vmem:[#allocation8 + $0x5d0] sm:$0xff]
    %v1768 = vld [vmem:[#allocation8 + $0x5d8] sm:$0xff]
    %v1769 = vld [vmem:[#allocation8 + $0x5e0] sm:$0xff]
    %v1770 = vld [vmem:[#allocation8 + $0x5e8] sm:$0xff]
    %v1771 = vld [vmem:[#allocation8 + $0x5f0] sm:$0xff]
    %v1772 = vld [vmem:[#allocation8 + $0x5f8] sm:$0xff]
    %v1773 = vld [vmem:[#allocation8 + $0x600] sm:$0xff]
    %v1774 = vld [vmem:[#allocation8 + $0x608] sm:$0xff]
    %v1775 = vld [vmem:[#allocation8 + $0x610] sm:$0xff]
    %v1776 = vld [vmem:[#allocation8 + $0x618] sm:$0xff]
    %v1777 = vld [vmem:[#allocation8 + $0x620] sm:$0xff]
    %v1778 = vld [vmem:[#allocation8 + $0x628] sm:$0xff]
    %v1779 = vld [vmem:[#allocation8 + $0x630] sm:$0xff]
    %v1780 = vld [vmem:[#allocation8 + $0x638] sm:$0xff]
    %v1781 = vld [vmem:[#allocation8 + $0x640] sm:$0xff]
    %v1782 = vld [vmem:[#allocation8 + $0x648] sm:$0xff]
    %v1783 = vld [vmem:[#allocation8 + $0x650] sm:$0xff]
    %v1784 = vld [vmem:[#allocation8 + $0x658] sm:$0xff]
    %v1785 = vld [vmem:[#allocation8 + $0x660] sm:$0xff]
    %v1786 = vld [vmem:[#allocation8 + $0x668] sm:$0xff]
    %v1787 = vld [vmem:[#allocation8 + $0x670] sm:$0xff]
    %v1788 = vld [vmem:[#allocation8 + $0x678] sm:$0xff]
    %v1789 = vld [vmem:[#allocation8 + $0x680] sm:$0xff]
    %v1790 = vld [vmem:[#allocation8 + $0x688] sm:$0xff]
    %v1791 = vld [vmem:[#allocation8 + $0x690] sm:$0xff]
    %v1792 = vld [vmem:[#allocation8 + $0x698] sm:$0xff]
    %v1793 = vld [vmem:[#allocation8 + $0x6a0] sm:$0xff]
    %v1794 = vld [vmem:[#allocation8 + $0x6a8] sm:$0xff]
    %v1795 = vld [vmem:[#allocation8 + $0x6b0] sm:$0xff]
    %v1796 = vld [vmem:[#allocation8 + $0x6b8] sm:$0xff]
    %v1797 = vld [vmem:[#allocation8 + $0x6c0] sm:$0xff]
    %v1798 = vld [vmem:[#allocation8 + $0x6c8] sm:$0xff]
    %v1799 = vld [vmem:[#allocation8 + $0x6d0] sm:$0xff]
    %v1800 = vld [vmem:[#allocation8 + $0x6d8] sm:$0xff]
    %v1801 = vld [vmem:[#allocation8 + $0x6e0] sm:$0xff]
    %v1802 = vld [vmem:[#allocation8 + $0x6e8] sm:$0xff]
    %v1803 = vld [vmem:[#allocation8 + $0x6f0] sm:$0xff]
    %v1804 = vld [vmem:[#allocation8 + $0x6f8] sm:$0xff]
    %v1805 = vld [vmem:[#allocation8 + $0x700] sm:$0xff]
    %v1806 = vld [vmem:[#allocation8 + $0x708] sm:$0xff]
    %v1807 = vld [vmem:[#allocation8 + $0x710] sm:$0xff]
    %v1808 = vld [vmem:[#allocation8 + $0x718] sm:$0xff]
    %v1809 = vld [vmem:[#allocation8 + $0x720] sm:$0xff]
    %v1810 = vld [vmem:[#allocation8 + $0x728] sm:$0xff]
    %v1811 = vld [vmem:[#allocation8 + $0x730] sm:$0xff]
    %v1812 = vld [vmem:[#allocation8 + $0x738] sm:$0xff]
    %v1813 = vld [vmem:[#allocation8 + $0x740] sm:$0xff]
    %v1814 = vld [vmem:[#allocation8 + $0x748] sm:$0xff]
    %v1815 = vld [vmem:[#allocation8 + $0x750] sm:$0xff]
    %v1816 = vld [vmem:[#allocation8 + $0x758] sm:$0xff]
    %v1817 = vld [vmem:[#allocation8 + $0x760] sm:$0xff]
    %v1818 = vld [vmem:[#allocation8 + $0x768] sm:$0xff]
    %v1819 = vld [vmem:[#allocation8 + $0x770] sm:$0xff]
    %v1820 = vld [vmem:[#allocation8 + $0x778] sm:$0xff]
    %v1821 = vld [vmem:[#allocation8 + $0x780] sm:$0xff]
    %v1822 = vld [vmem:[#allocation8 + $0x788] sm:$0xff]
    %v1823 = vld [vmem:[#allocation8 + $0x790] sm:$0xff]
    %v1824 = vld [vmem:[#allocation8 + $0x798] sm:$0xff]
    %v1825 = vld [vmem:[#allocation8 + $0x7a0] sm:$0xff]
    %v1826 = vld [vmem:[#allocation8 + $0x7a8] sm:$0xff]
    %v1827 = vld [vmem:[#allocation8 + $0x7b0] sm:$0xff]
    %v1828 = vld [vmem:[#allocation8 + $0x7b8] sm:$0xff]
    %v1829 = vld [vmem:[#allocation8 + $0x7c0] sm:$0xff]
    %v1830 = vld [vmem:[#allocation8 + $0x7c8] sm:$0xff]
    %v1831 = vld [vmem:[#allocation8 + $0x7d0] sm:$0xff]
    %v1832 = vld [vmem:[#allocation8 + $0x7d8] sm:$0xff]
    %v1833 = vld [vmem:[#allocation8 + $0x7e0] sm:$0xff]
    %v1834 = vld [vmem:[#allocation8 + $0x7e8] sm:$0xff]
    %v1835 = vld [vmem:[#allocation8 + $0x7f0] sm:$0xff]
    %v1836 = vld [vmem:[#allocation8 + $0x7f8] sm:$0xff]
    %v1837 = vld [vmem:[#allocation8 + $0x800] sm:$0xff]
    %v1838 = vld [vmem:[#allocation8 + $0x808] sm:$0xff]
    %v1839 = vld [vmem:[#allocation8 + $0x810] sm:$0xff]
    %v1840 = vld [vmem:[#allocation8 + $0x818] sm:$0xff]
    %v1841 = vld [vmem:[#allocation8 + $0x820] sm:$0xff]
    %v1842 = vld [vmem:[#allocation8 + $0x828] sm:$0xff]
    %v1843 = vld [vmem:[#allocation8 + $0x830] sm:$0xff]
    %v1844 = vld [vmem:[#allocation8 + $0x838] sm:$0xff]
    %v1845 = vld [vmem:[#allocation8 + $0x840] sm:$0xff]
    %v1846 = vld [vmem:[#allocation8 + $0x848] sm:$0xff]
    %v1847 = vld [vmem:[#allocation8 + $0x850] sm:$0xff]
    %v1848 = vld [vmem:[#allocation8 + $0x858] sm:$0xff]
    %v1849 = vld [vmem:[#allocation8 + $0x860] sm:$0xff]
    %v1850 = vld [vmem:[#allocation8 + $0x868] sm:$0xff]
    %v1851 = vld [vmem:[#allocation8 + $0x870] sm:$0xff]
    %v1852 = vld [vmem:[#allocation8 + $0x878] sm:$0xff]
    %v1853 = vld [vmem:[#allocation8 + $0x880] sm:$0xff]
    %v1854 = vld [vmem:[#allocation8 + $0x888] sm:$0xff]
    %v1855 = vld [vmem:[#allocation8 + $0x890] sm:$0xff]
    %v1856 = vld [vmem:[#allocation8 + $0x898] sm:$0xff]
    %v1857 = vld [vmem:[#allocation8 + $0x8a0] sm:$0xff]
    %v1858 = vld [vmem:[#allocation8 + $0x8a8] sm:$0xff]
    %v1859 = vld [vmem:[#allocation8 + $0x8b0] sm:$0xff]
    %v1860 = vld [vmem:[#allocation8 + $0x8b8] sm:$0xff]
    %v1861 = vld [vmem:[#allocation8 + $0x8c0] sm:$0xff]
    %v1862 = vld [vmem:[#allocation8 + $0x8c8] sm:$0xff]
    %v1863 = vld [vmem:[#allocation8 + $0x8d0] sm:$0xff]
    %v1864 = vld [vmem:[#allocation8 + $0x8d8] sm:$0xff]
    %v1865 = vld [vmem:[#allocation8 + $0x8e0] sm:$0xff]
    %v1866 = vld [vmem:[#allocation8 + $0x8e8] sm:$0xff]
    %v1867 = vld [vmem:[#allocation8 + $0x8f0] sm:$0xff]
    %v1868 = vld [vmem:[#allocation8 + $0x8f8] sm:$0xff]
    %v1869 = vld [vmem:[#allocation8 + $0x900] sm:$0xff]
    %v1870 = vld [vmem:[#allocation8 + $0x908] sm:$0xff]
    %v1871 = vld [vmem:[#allocation8 + $0x910] sm:$0xff]
    %v1872 = vld [vmem:[#allocation8 + $0x918] sm:$0xff]
    %v1873 = vld [vmem:[#allocation8 + $0x920] sm:$0xff]
    %v1874 = vld [vmem:[#allocation8 + $0x928] sm:$0xff]
    %v1875 = vld [vmem:[#allocation8 + $0x930] sm:$0xff]
    %v1876 = vld [vmem:[#allocation8 + $0x938] sm:$0xff]
    %v1877 = vld [vmem:[#allocation8 + $0x940] sm:$0xff]
    %v1878 = vld [vmem:[#allocation8 + $0x948] sm:$0xff]
    %v1879 = vld [vmem:[#allocation8 + $0x950] sm:$0xff]
    %v1880 = vld [vmem:[#allocation8 + $0x958] sm:$0xff]
    %v1881 = vld [vmem:[#allocation8 + $0x960] sm:$0xff]
    %v1882 = vld [vmem:[#allocation8 + $0x968] sm:$0xff]
    %v1883 = vld [vmem:[#allocation8 + $0x970] sm:$0xff]
    %v1884 = vld [vmem:[#allocation8 + $0x978] sm:$0xff]
    %v1885 = vld [vmem:[#allocation8 + $0x980] sm:$0xff]
    %v1886 = vld [vmem:[#allocation8 + $0x988] sm:$0xff]
    %v1887 = vld [vmem:[#allocation8 + $0x990] sm:$0xff]
    %v1888 = vld [vmem:[#allocation8 + $0x998] sm:$0xff]
    %v1889 = vld [vmem:[#allocation8 + $0x9a0] sm:$0xff]
    %v1890 = vld [vmem:[#allocation8 + $0x9a8] sm:$0xff]
    %v1891 = vld [vmem:[#allocation8 + $0x9b0] sm:$0xff]
    %v1892 = vld [vmem:[#allocation8 + $0x9b8] sm:$0xff]
    %v1893 = vld [vmem:[#allocation8 + $0x9c0] sm:$0xff]
    %v1894 = vld [vmem:[#allocation8 + $0x9c8] sm:$0xff]
    %v1895 = vld [vmem:[#allocation8 + $0x9d0] sm:$0xff]
    %v1896 = vld [vmem:[#allocation8 + $0x9d8] sm:$0xff]
    %v1897 = vld [vmem:[#allocation8 + $0x9e0] sm:$0xff]
    %v1898 = vld [vmem:[#allocation8 + $0x9e8] sm:$0xff]
    %v1899 = vld [vmem:[#allocation8 + $0x9f0] sm:$0xff]
    %v1900 = vld [vmem:[#allocation8 + $0x9f8] sm:$0xff]
    %v1901 = vld [vmem:[#allocation8 + $0xa00] sm:$0xff]
    %v1902 = vld [vmem:[#allocation8 + $0xa08] sm:$0xff]
    %v1903 = vld [vmem:[#allocation8 + $0xa10] sm:$0xff]
    %v1904 = vld [vmem:[#allocation8 + $0xa18] sm:$0xff]
    %v1905 = vld [vmem:[#allocation8 + $0xa20] sm:$0xff]
    %v1906 = vld [vmem:[#allocation8 + $0xa28] sm:$0xff]
    %v1907 = vld [vmem:[#allocation8 + $0xa30] sm:$0xff]
    %v1908 = vld [vmem:[#allocation8 + $0xa38] sm:$0xff]
    %v1909 = vld [vmem:[#allocation8 + $0xa40] sm:$0xff]
    %v1910 = vld [vmem:[#allocation8 + $0xa48] sm:$0xff]
    %v1911 = vld [vmem:[#allocation8 + $0xa50] sm:$0xff]
    %v1912 = vld [vmem:[#allocation8 + $0xa58] sm:$0xff]
    %v1913 = vld [vmem:[#allocation8 + $0xa60] sm:$0xff]
    %v1914 = vld [vmem:[#allocation8 + $0xa68] sm:$0xff]
    %v1915 = vld [vmem:[#allocation8 + $0xa70] sm:$0xff]
    %v1916 = vld [vmem:[#allocation8 + $0xa78] sm:$0xff]
    %v1917 = vld [vmem:[#allocation8 + $0xa80] sm:$0xff]
    %v1918 = vld [vmem:[#allocation8 + $0xa88] sm:$0xff]
    %v1919 = vld [vmem:[#allocation8 + $0xa90] sm:$0xff]
    %v1920 = vld [vmem:[#allocation8 + $0xa98] sm:$0xff]
    %v1921 = vld [vmem:[#allocation8 + $0xaa0] sm:$0xff]
    %v1922 = vld [vmem:[#allocation8 + $0xaa8] sm:$0xff]
    %v1923 = vld [vmem:[#allocation8 + $0xab0] sm:$0xff]
    %v1924 = vld [vmem:[#allocation8 + $0xab8] sm:$0xff]
    %v1925 = vld [vmem:[#allocation8 + $0xac0] sm:$0xff]
    %v1926 = vld [vmem:[#allocation8 + $0xac8] sm:$0xff]
    %v1927 = vld [vmem:[#allocation8 + $0xad0] sm:$0xff]
    %v1928 = vld [vmem:[#allocation8 + $0xad8] sm:$0xff]
    %v1929 = vld [vmem:[#allocation8 + $0xae0] sm:$0xff]
    %v1930 = vld [vmem:[#allocation8 + $0xae8] sm:$0xff]
    %v1931 = vld [vmem:[#allocation8 + $0xaf0] sm:$0xff]
    %v1932 = vld [vmem:[#allocation8 + $0xaf8] sm:$0xff]
    %v1933 = vld [vmem:[#allocation8 + $0xb00] sm:$0xff]
    %v1934 = vld [vmem:[#allocation8 + $0xb08] sm:$0xff]
    %v1935 = vld [vmem:[#allocation8 + $0xb10] sm:$0xff]
    %v1936 = vld [vmem:[#allocation8 + $0xb18] sm:$0xff]
    %v1937 = vld [vmem:[#allocation8 + $0xb20] sm:$0xff]
    %v1938 = vld [vmem:[#allocation8 + $0xb28] sm:$0xff]
    %v1939 = vld [vmem:[#allocation8 + $0xb30] sm:$0xff]
    %v1940 = vld [vmem:[#allocation8 + $0xb38] sm:$0xff]
    %v1941 = vld [vmem:[#allocation8 + $0xb40] sm:$0xff]
    %v1942 = vld [vmem:[#allocation8 + $0xb48] sm:$0xff]
    %v1943 = vld [vmem:[#allocation8 + $0xb50] sm:$0xff]
    %v1944 = vld [vmem:[#allocation8 + $0xb58] sm:$0xff]
    %v1945 = vld [vmem:[#allocation8 + $0xb60] sm:$0xff]
    %v1946 = vld [vmem:[#allocation8 + $0xb68] sm:$0xff]
    %v1947 = vld [vmem:[#allocation8 + $0xb70] sm:$0xff]
    %v1948 = vld [vmem:[#allocation8 + $0xb78] sm:$0xff]
    %v1949 = vld [vmem:[#allocation8 + $0xb80] sm:$0xff]
    %v1950 = vld [vmem:[#allocation8 + $0xb88] sm:$0xff]
    %v1951 = vld [vmem:[#allocation8 + $0xb90] sm:$0xff]
    %v1952 = vld [vmem:[#allocation8 + $0xb98] sm:$0xff]
    %v1953 = vld [vmem:[#allocation8 + $0xba0] sm:$0xff]
    %v1954 = vld [vmem:[#allocation8 + $0xba8] sm:$0xff]
    %v1955 = vld [vmem:[#allocation8 + $0xbb0] sm:$0xff]
    %v1956 = vld [vmem:[#allocation8 + $0xbb8] sm:$0xff]
    %v1957 = vld [vmem:[#allocation8 + $0xbc0] sm:$0xff]
    %v1958 = vld [vmem:[#allocation8 + $0xbc8] sm:$0xff]
    %v1959 = vld [vmem:[#allocation8 + $0xbd0] sm:$0xff]
    %v1960 = vld [vmem:[#allocation8 + $0xbd8] sm:$0xff]
    %v1961 = vld [vmem:[#allocation8 + $0xbe0] sm:$0xff]
    %v1962 = vld [vmem:[#allocation8 + $0xbe8] sm:$0xff]
    %v1963 = vld [vmem:[#allocation8 + $0xbf0] sm:$0xff]
    %v1964 = vld [vmem:[#allocation8 + $0xbf8] sm:$0xff]
    %v1965 = vld [vmem:[#allocation8 + $0xc00] sm:$0xff]
    %v1966 = vld [vmem:[#allocation8 + $0xc08] sm:$0xff]
    %v1967 = vld [vmem:[#allocation8 + $0xc10] sm:$0xff]
    %v1968 = vld [vmem:[#allocation8 + $0xc18] sm:$0xff]
    %v1969 = vld [vmem:[#allocation8 + $0xc20] sm:$0xff]
    %v1970 = vld [vmem:[#allocation8 + $0xc28] sm:$0xff]
    %v1971 = vld [vmem:[#allocation8 + $0xc30] sm:$0xff]
    %v1972 = vld [vmem:[#allocation8 + $0xc38] sm:$0xff]
    %v1973 = vld [vmem:[#allocation8 + $0xc40] sm:$0xff]
    %v1974 = vld [vmem:[#allocation8 + $0xc48] sm:$0xff]
    %v1975 = vld [vmem:[#allocation8 + $0xc50] sm:$0xff]
    %v1976 = vld [vmem:[#allocation8 + $0xc58] sm:$0xff]
    %v1977 = vld [vmem:[#allocation8 + $0xc60] sm:$0xff]
    %v1978 = vld [vmem:[#allocation8 + $0xc68] sm:$0xff]
    %v1979 = vld [vmem:[#allocation8 + $0xc70] sm:$0xff]
    %v1980 = vld [vmem:[#allocation8 + $0xc78] sm:$0xff]
    %1981 = vmatprep.subr.mxu0 0.0
    %1982 = vmatpush1.msra.mxu0 %v1581
    %1983 = vmatprep.subr.mxu0 0.0
    %1984 = vmatpush1.msra.mxu0 %v1582
    %1985 = vmatprep.subr.mxu0 0.0
    %1986 = vmatpush1.msra.mxu0 %v1583
    %1987 = vmatprep.subr.mxu0 0.0
    %1988 = vmatpush1.msra.mxu0 %v1584
    %1989 = vmatprep.subr.mxu0 0.0
    %1990 = vmatpush1.msra.mxu0 %v1585
    %1991 = vmatprep.subr.mxu0 0.0
    %1992 = vmatpush1.msra.mxu0 %v1586
    %1993 = vmatprep.subr.mxu0 0.0
    %1994 = vmatpush1.msra.mxu0 %v1587
    %1995 = vmatprep.subr.mxu0 0.0
    %1996 = vmatpush1.msra.mxu0 %v1588
    %1997 = vmatprep.subr.mxu0 0.0
    %1998 = vmatpush1.msra.mxu0 %v1589
    %1999 = vmatprep.subr.mxu0 0.0
    %2000 = vmatpush1.msra.mxu0 %v1590
    %2001 = vmatprep.subr.mxu0 0.0
    %2002 = vmatpush1.msra.mxu0 %v1591
    %2003 = vmatprep.subr.mxu0 0.0
    %2004 = vmatpush1.msra.mxu0 %v1592
    %2005 = vmatprep.subr.mxu0 0.0
    %2006 = vmatpush1.msra.mxu0 %v1593
    %2007 = vmatprep.subr.mxu0 0.0
    %2008 = vmatpush1.msra.mxu0 %v1594
    %2009 = vmatprep.subr.mxu0 0.0
    %2010 = vmatpush1.msra.mxu0 %v1595
    %2011 = vmatprep.subr.mxu0 0.0
    %2012 = vmatpush1.msra.mxu0 %v1596
    %2013 = vmatprep.subr.mxu0 0.0
    %2014 = vmatpush1.msra.mxu0 %v1597
    %2015 = vmatprep.subr.mxu0 0.0
    %2016 = vmatpush1.msra.mxu0 %v1598
    %2017 = vmatprep.subr.mxu0 0.0
    %2018 = vmatpush1.msra.mxu0 %v1599
    %2019 = vmatprep.subr.mxu0 0.0
    %2020 = vmatpush1.msra.mxu0 %v1600
    %2021 = vmatprep.subr.mxu0 0.0
    %2022 = vmatpush1.msra.mxu0 %v1601
    %2023 = vmatprep.subr.mxu0 0.0
    %2024 = vmatpush1.msra.mxu0 %v1602
    %2025 = vmatprep.subr.mxu0 0.0
    %2026 = vmatpush1.msra.mxu0 %v1603
    %2027 = vmatprep.subr.mxu0 0.0
    %2028 = vmatpush1.msra.mxu0 %v1604
    %2029 = vmatprep.subr.mxu0 0.0
    %2030 = vmatpush1.msra.mxu0 %v1605
    %2031 = vmatprep.subr.mxu0 0.0
    %2032 = vmatpush1.msra.mxu0 %v1606
    %2033 = vmatprep.subr.mxu0 0.0
    %2034 = vmatpush1.msra.mxu0 %v1607
    %2035 = vmatprep.subr.mxu0 0.0
    %2036 = vmatpush1.msra.mxu0 %v1608
    %2037 = vmatprep.subr.mxu0 0.0
    %2038 = vmatpush1.msra.mxu0 %v1609
    %2039 = vmatprep.subr.mxu0 0.0
    %2040 = vmatpush1.msra.mxu0 %v1610
    %2041 = vmatprep.subr.mxu0 0.0
    %2042 = vmatpush1.msra.mxu0 %v1611
    %2043 = vmatprep.subr.mxu0 0.0
    %2044 = vmatpush1.msra.mxu0 %v1612
    %2045 = vmatprep.mubr.f32.mxu0 %v1073
    %2046 = vmatmul.mubr.f32.gmra.mrb[0].mxu0 %v1051
    %v2047 = vpop.f32.mrb[0].mxu0
    %v2048 = vadd.f32 0.0, %v2047
    %v2049 = vpop.f32.mrb[0].mxu0
    %2050 = vdwg.mxu0
    %2051 = vmatprep.subr.mxu0 0.0
    %2052 = vmatpush1.msra.mxu0 %v1613
    %2053 = vmatprep.subr.mxu0 0.0
    %2054 = vmatpush1.msra.mxu0 %v1614
    %2055 = vmatprep.subr.mxu0 0.0
    %2056 = vmatpush1.msra.mxu0 %v1615
    %2057 = vmatprep.subr.mxu0 0.0
    %2058 = vmatpush1.msra.mxu0 %v1616
    %2059 = vmatprep.subr.mxu0 0.0
    %2060 = vmatpush1.msra.mxu0 %v1617
    %2061 = vmatprep.subr.mxu0 0.0
    %2062 = vmatpush1.msra.mxu0 %v1618
    %2063 = vmatprep.subr.mxu0 0.0
    %2064 = vmatpush1.msra.mxu0 %v1619
    %2065 = vmatprep.subr.mxu0 0.0
    %2066 = vmatpush1.msra.mxu0 %v1620
    %2067 = vmatprep.subr.mxu0 0.0
    %2068 = vmatpush1.msra.mxu0 %v1621
    %2069 = vmatprep.subr.mxu0 0.0
    %2070 = vmatpush1.msra.mxu0 %v1622
    %2071 = vmatprep.subr.mxu0 0.0
    %2072 = vmatpush1.msra.mxu0 %v1623
    %2073 = vmatprep.subr.mxu0 0.0
    %2074 = vmatpush1.msra.mxu0 %v1624
    %2075 = vmatprep.subr.mxu0 0.0
    %2076 = vmatpush1.msra.mxu0 %v1625
    %2077 = vmatprep.subr.mxu0 0.0
    %2078 = vmatpush1.msra.mxu0 %v1626
    %2079 = vmatprep.subr.mxu0 0.0
    %2080 = vmatpush1.msra.mxu0 %v1627
    %2081 = vmatprep.subr.mxu0 0.0
    %2082 = vmatpush1.msra.mxu0 %v1628
    %2083 = vmatprep.subr.mxu0 0.0
    %2084 = vmatpush1.msra.mxu0 %v1629
    %2085 = vmatprep.subr.mxu0 0.0
    %2086 = vmatpush1.msra.mxu0 %v1630
    %2087 = vmatprep.subr.mxu0 0.0
    %2088 = vmatpush1.msra.mxu0 %v1631
    %2089 = vmatprep.subr.mxu0 0.0
    %2090 = vmatpush1.msra.mxu0 %v1632
    %2091 = vmatprep.subr.mxu0 0.0
    %2092 = vmatpush1.msra.mxu0 %v1633
    %2093 = vmatprep.subr.mxu0 0.0
    %2094 = vmatpush1.msra.mxu0 %v1634
    %2095 = vmatprep.subr.mxu0 0.0
    %2096 = vmatpush1.msra.mxu0 %v1635
    %2097 = vmatprep.subr.mxu0 0.0
    %2098 = vmatpush1.msra.mxu0 %v1636
    %2099 = vmatprep.subr.mxu0 0.0
    %2100 = vmatpush1.msra.mxu0 %v1637
    %2101 = vmatprep.subr.mxu0 0.0
    %2102 = vmatpush1.msra.mxu0 %v1638
    %2103 = vmatprep.subr.mxu0 0.0
    %2104 = vmatpush1.msra.mxu0 %v1639
    %2105 = vmatprep.subr.mxu0 0.0
    %2106 = vmatpush1.msra.mxu0 %v1640
    %2107 = vmatprep.subr.mxu0 0.0
    %2108 = vmatpush1.msra.mxu0 %v1641
    %2109 = vmatprep.subr.mxu0 0.0
    %2110 = vmatpush1.msra.mxu0 %v1642
    %2111 = vmatprep.subr.mxu0 0.0
    %2112 = vmatpush1.msra.mxu0 %v1643
    %2113 = vmatprep.subr.mxu0 0.0
    %2114 = vmatpush1.msra.mxu0 %v1644
    %2115 = vmatprep.mubr.f32.mxu0 %v1117
    %2116 = vmatmul.mubr.f32.gmra.mrb[0].mxu0 %v1095
    %v2117 = vpop.f32.mrb[0].mxu0
    %v2118 = vadd.f32 %v2048, %v2117
    %v2119 = vpop.f32.mrb[0].mxu0
    %2120 = vdwg.mxu0
    %2121 = vmatprep.subr.mxu0 0.0
    %2122 = vmatpush1.msra.mxu0 %v1645
    %2123 = vmatprep.subr.mxu0 0.0
    %2124 = vmatpush1.msra.mxu0 %v1646
    %2125 = vmatprep.subr.mxu0 0.0
    %2126 = vmatpush1.msra.mxu0 %v1647
    %2127 = vmatprep.subr.mxu0 0.0
    %2128 = vmatpush1.msra.mxu0 %v1648
    %2129 = vmatprep.subr.mxu0 0.0
    %2130 = vmatpush1.msra.mxu0 %v1649
    %2131 = vmatprep.subr.mxu0 0.0
    %2132 = vmatpush1.msra.mxu0 %v1650
    %2133 = vmatprep.subr.mxu0 0.0
    %2134 = vmatpush1.msra.mxu0 %v1651
    %2135 = vmatprep.subr.mxu0 0.0
    %2136 = vmatpush1.msra.mxu0 %v1652
    %2137 = vmatprep.subr.mxu0 0.0
    %2138 = vmatpush1.msra.mxu0 %v1653
    %2139 = vmatprep.subr.mxu0 0.0
    %2140 = vmatpush1.msra.mxu0 %v1654
    %2141 = vmatprep.subr.mxu0 0.0
    %2142 = vmatpush1.msra.mxu0 %v1655
    %2143 = vmatprep.subr.mxu0 0.0
    %2144 = vmatpush1.msra.mxu0 %v1656
    %2145 = vmatprep.subr.mxu0 0.0
    %2146 = vmatpush1.msra.mxu0 %v1657
    %2147 = vmatprep.subr.mxu0 0.0
    %2148 = vmatpush1.msra.mxu0 %v1658
    %2149 = vmatprep.subr.mxu0 0.0
    %2150 = vmatpush1.msra.mxu0 %v1659
    %2151 = vmatprep.subr.mxu0 0.0
    %2152 = vmatpush1.msra.mxu0 %v1660
    %2153 = vmatprep.subr.mxu0 0.0
    %2154 = vmatpush1.msra.mxu0 %v1661
    %2155 = vmatprep.subr.mxu0 0.0
    %2156 = vmatpush1.msra.mxu0 %v1662
    %2157 = vmatprep.subr.mxu0 0.0
    %2158 = vmatpush1.msra.mxu0 %v1663
    %2159 = vmatprep.subr.mxu0 0.0
    %2160 = vmatpush1.msra.mxu0 %v1664
    %2161 = vmatprep.subr.mxu0 0.0
    %2162 = vmatpush1.msra.mxu0 %v1665
    %2163 = vmatprep.subr.mxu0 0.0
    %2164 = vmatpush1.msra.mxu0 %v1666
    %2165 = vmatprep.subr.mxu0 0.0
    %2166 = vmatpush1.msra.mxu0 %v1667
    %2167 = vmatprep.subr.mxu0 0.0
    %2168 = vmatpush1.msra.mxu0 %v1668
    %2169 = vmatprep.subr.mxu0 0.0
    %2170 = vmatpush1.msra.mxu0 %v1669
    %2171 = vmatprep.subr.mxu0 0.0
    %2172 = vmatpush1.msra.mxu0 %v1670
    %2173 = vmatprep.subr.mxu0 0.0
    %2174 = vmatpush1.msra.mxu0 %v1671
    %2175 = vmatprep.subr.mxu0 0.0
    %2176 = vmatpush1.msra.mxu0 %v1672
    %2177 = vmatprep.subr.mxu0 0.0
    %2178 = vmatpush1.msra.mxu0 %v1673
    %2179 = vmatprep.subr.mxu0 0.0
    %2180 = vmatpush1.msra.mxu0 %v1674
    %2181 = vmatprep.subr.mxu0 0.0
    %2182 = vmatpush1.msra.mxu0 %v1675
    %2183 = vmatprep.subr.mxu0 0.0
    %2184 = vmatpush1.msra.mxu0 %v1676
    %2185 = vmatprep.mubr.f32.mxu0 %v1161
    %2186 = vmatmul.mubr.f32.gmra.mrb[0].mxu0 %v1139
    %v2187 = vpop.f32.mrb[0].mxu0
    %v2188 = vadd.f32 %v2118, %v2187
    %v2189 = vpop.f32.mrb[0].mxu0
    %2190 = vdwg.mxu0
    %2191 = vmatprep.subr.mxu0 0.0
    %2192 = vmatpush1.msra.mxu0 %v1677
    %2193 = vmatprep.subr.mxu0 0.0
    %2194 = vmatpush1.msra.mxu0 %v1678
    %2195 = vmatprep.subr.mxu0 0.0
    %2196 = vmatpush1.msra.mxu0 %v1679
    %2197 = vmatprep.subr.mxu0 0.0
    %2198 = vmatpush1.msra.mxu0 %v1680
    %2199 = vmatprep.subr.mxu0 0.0
    %2200 = vmatpush1.msra.mxu0 %v1681
    %2201 = vmatprep.subr.mxu0 0.0
    %2202 = vmatpush1.msra.mxu0 %v1682
    %2203 = vmatprep.subr.mxu0 0.0
    %2204 = vmatpush1.msra.mxu0 %v1683
    %2205 = vmatprep.subr.mxu0 0.0
    %2206 = vmatpush1.msra.mxu0 %v1684
    %2207 = vmatprep.subr.mxu0 0.0
    %2208 = vmatpush1.msra.mxu0 %v1685
    %2209 = vmatprep.subr.mxu0 0.0
    %2210 = vmatpush1.msra.mxu0 %v1686
    %2211 = vmatprep.subr.mxu0 0.0
    %2212 = vmatpush1.msra.mxu0 %v1687
    %2213 = vmatprep.subr.mxu0 0.0
    %2214 = vmatpush1.msra.mxu0 %v1688
    %2215 = vmatprep.subr.mxu0 0.0
    %2216 = vmatpush1.msra.mxu0 %v1689
    %2217 = vmatprep.subr.mxu0 0.0
    %2218 = vmatpush1.msra.mxu0 %v1690
    %2219 = vmatprep.subr.mxu0 0.0
    %2220 = vmatpush1.msra.mxu0 %v1691
    %2221 = vmatprep.subr.mxu0 0.0
    %2222 = vmatpush1.msra.mxu0 %v1692
    %2223 = vmatprep.subr.mxu0 0.0
    %2224 = vmatpush1.msra.mxu0 %v1693
    %2225 = vmatprep.subr.mxu0 0.0
    %2226 = vmatpush1.msra.mxu0 %v1694
    %2227 = vmatprep.subr.mxu0 0.0
    %2228 = vmatpush1.msra.mxu0 %v1695
    %2229 = vmatprep.subr.mxu0 0.0
    %2230 = vmatpush1.msra.mxu0 %v1696
    %2231 = vmatprep.subr.mxu0 0.0
    %2232 = vmatpush1.msra.mxu0 %v1697
    %2233 = vmatprep.subr.mxu0 0.0
    %2234 = vmatpush1.msra.mxu0 %v1698
    %2235 = vmatprep.subr.mxu0 0.0
    %2236 = vmatpush1.msra.mxu0 %v1699
    %2237 = vmatprep.subr.mxu0 0.0
    %2238 = vmatpush1.msra.mxu0 %v1700
    %2239 = vmatprep.subr.mxu0 0.0
    %2240 = vmatpush1.msra.mxu0 %v1701
    %2241 = vmatprep.subr.mxu0 0.0
    %2242 = vmatpush1.msra.mxu0 %v1702
    %2243 = vmatprep.subr.mxu0 0.0
    %2244 = vmatpush1.msra.mxu0 %v1703
    %2245 = vmatprep.subr.mxu0 0.0
    %2246 = vmatpush1.msra.mxu0 %v1704
    %2247 = vmatprep.subr.mxu0 0.0
    %2248 = vmatpush1.msra.mxu0 %v1705
    %2249 = vmatprep.subr.mxu0 0.0
    %2250 = vmatpush1.msra.mxu0 %v1706
    %2251 = vmatprep.subr.mxu0 0.0
    %2252 = vmatpush1.msra.mxu0 %v1707
    %2253 = vmatprep.subr.mxu0 0.0
    %2254 = vmatpush1.msra.mxu0 %v1708
    %2255 = vmatprep.mubr.f32.mxu0 %v1205
    %2256 = vmatmul.mubr.f32.gmra.mrb[0].mxu0 %v1183
    %v2257 = vpop.f32.mrb[0].mxu0
    %v2258 = vadd.f32 %v2188, %v2257
    %v2259 = vpop.f32.mrb[0].mxu0
    %2260 = vdwg.mxu0
    %2261 = vmatprep.subr.mxu0 0.0
    %2262 = vmatpush1.msra.mxu0 %v1709
    %2263 = vmatprep.subr.mxu0 0.0
    %2264 = vmatpush1.msra.mxu0 %v1710
    %2265 = vmatprep.subr.mxu0 0.0
    %2266 = vmatpush1.msra.mxu0 %v1711
    %2267 = vmatprep.subr.mxu0 0.0
    %2268 = vmatpush1.msra.mxu0 %v1712
    %2269 = vmatprep.subr.mxu0 0.0
    %2270 = vmatpush1.msra.mxu0 %v1713
    %2271 = vmatprep.subr.mxu0 0.0
    %2272 = vmatpush1.msra.mxu0 %v1714
    %2273 = vmatprep.subr.mxu0 0.0
    %2274 = vmatpush1.msra.mxu0 %v1715
    %2275 = vmatprep.subr.mxu0 0.0
    %2276 = vmatpush1.msra.mxu0 %v1716
    %2277 = vmatprep.subr.mxu0 0.0
    %2278 = vmatpush1.msra.mxu0 %v1717
    %2279 = vmatprep.subr.mxu0 0.0
    %2280 = vmatpush1.msra.mxu0 %v1718
    %2281 = vmatprep.subr.mxu0 0.0
    %2282 = vmatpush1.msra.mxu0 %v1719
    %2283 = vmatprep.subr.mxu0 0.0
    %2284 = vmatpush1.msra.mxu0 %v1720
    %2285 = vmatprep.subr.mxu0 0.0
    %2286 = vmatpush1.msra.mxu0 %v1721
    %2287 = vmatprep.subr.mxu0 0.0
    %2288 = vmatpush1.msra.mxu0 %v1722
    %2289 = vmatprep.subr.mxu0 0.0
    %2290 = vmatpush1.msra.mxu0 %v1723
    %2291 = vmatprep.subr.mxu0 0.0
    %2292 = vmatpush1.msra.mxu0 %v1724
    %2293 = vmatprep.subr.mxu0 0.0
    %2294 = vmatpush1.msra.mxu0 %v1725
    %2295 = vmatprep.subr.mxu0 0.0
    %2296 = vmatpush1.msra.mxu0 %v1726
    %2297 = vmatprep.subr.mxu0 0.0
    %2298 = vmatpush1.msra.mxu0 %v1727
    %2299 = vmatprep.subr.mxu0 0.0
    %2300 = vmatpush1.msra.mxu0 %v1728
    %2301 = vmatprep.subr.mxu0 0.0
    %2302 = vmatpush1.msra.mxu0 %v1729
    %2303 = vmatprep.subr.mxu0 0.0
    %2304 = vmatpush1.msra.mxu0 %v1730
    %2305 = vmatprep.subr.mxu0 0.0
    %2306 = vmatpush1.msra.mxu0 %v1731
    %2307 = vmatprep.subr.mxu0 0.0
    %2308 = vmatpush1.msra.mxu0 %v1732
    %2309 = vmatprep.subr.mxu0 0.0
    %2310 = vmatpush1.msra.mxu0 %v1733
    %2311 = vmatprep.subr.mxu0 0.0
    %2312 = vmatpush1.msra.mxu0 %v1734
    %2313 = vmatprep.subr.mxu0 0.0
    %2314 = vmatpush1.msra.mxu0 %v1735
    %2315 = vmatprep.subr.mxu0 0.0
    %2316 = vmatpush1.msra.mxu0 %v1736
    %2317 = vmatprep.subr.mxu0 0.0
    %2318 = vmatpush1.msra.mxu0 %v1737
    %2319 = vmatprep.subr.mxu0 0.0
    %2320 = vmatpush1.msra.mxu0 %v1738
    %2321 = vmatprep.subr.mxu0 0.0
    %2322 = vmatpush1.msra.mxu0 %v1739
    %2323 = vmatprep.subr.mxu0 0.0
    %2324 = vmatpush1.msra.mxu0 %v1740
    %2325 = vmatprep.mubr.f32.mxu0 %v1249
    %2326 = vmatmul.mubr.f32.gmra.mrb[0].mxu0 %v1227
    %v2327 = vpop.f32.mrb[0].mxu0
    %v2328 = vadd.f32 %v2258, %v2327
    %v2329 = vpop.f32.mrb[0].mxu0
    %2330 = vdwg.mxu0
    %2331 = vmatprep.subr.mxu0 0.0
    %2332 = vmatpush1.msra.mxu0 %v1741
    %2333 = vmatprep.subr.mxu0 0.0
    %2334 = vmatpush1.msra.mxu0 %v1742
    %2335 = vmatprep.subr.mxu0 0.0
    %2336 = vmatpush1.msra.mxu0 %v1743
    %2337 = vmatprep.subr.mxu0 0.0
    %2338 = vmatpush1.msra.mxu0 %v1744
    %2339 = vmatprep.subr.mxu0 0.0
    %2340 = vmatpush1.msra.mxu0 %v1745
    %2341 = vmatprep.subr.mxu0 0.0
    %2342 = vmatpush1.msra.mxu0 %v1746
    %2343 = vmatprep.subr.mxu0 0.0
    %2344 = vmatpush1.msra.mxu0 %v1747
    %2345 = vmatprep.subr.mxu0 0.0
    %2346 = vmatpush1.msra.mxu0 %v1748
    %2347 = vmatprep.subr.mxu0 0.0
    %2348 = vmatpush1.msra.mxu0 %v1749
    %2349 = vmatprep.subr.mxu0 0.0
    %2350 = vmatpush1.msra.mxu0 %v1750
    %2351 = vmatprep.subr.mxu0 0.0
    %2352 = vmatpush1.msra.mxu0 %v1751
    %2353 = vmatprep.subr.mxu0 0.0
    %2354 = vmatpush1.msra.mxu0 %v1752
    %2355 = vmatprep.subr.mxu0 0.0
    %2356 = vmatpush1.msra.mxu0 %v1753
    %2357 = vmatprep.subr.mxu0 0.0
    %2358 = vmatpush1.msra.mxu0 %v1754
    %2359 = vmatprep.subr.mxu0 0.0
    %2360 = vmatpush1.msra.mxu0 %v1755
    %2361 = vmatprep.subr.mxu0 0.0
    %2362 = vmatpush1.msra.mxu0 %v1756
    %2363 = vmatprep.subr.mxu0 0.0
    %2364 = vmatpush1.msra.mxu0 %v1757
    %2365 = vmatprep.subr.mxu0 0.0
    %2366 = vmatpush1.msra.mxu0 %v1758
    %2367 = vmatprep.subr.mxu0 0.0
    %2368 = vmatpush1.msra.mxu0 %v1759
    %2369 = vmatprep.subr.mxu0 0.0
    %2370 = vmatpush1.msra.mxu0 %v1760
    %2371 = vmatprep.subr.mxu0 0.0
    %2372 = vmatpush1.msra.mxu0 %v1761
    %2373 = vmatprep.subr.mxu0 0.0
    %2374 = vmatpush1.msra.mxu0 %v1762
    %2375 = vmatprep.subr.mxu0 0.0
    %2376 = vmatpush1.msra.mxu0 %v1763
    %2377 = vmatprep.subr.mxu0 0.0
    %2378 = vmatpush1.msra.mxu0 %v1764
    %2379 = vmatprep.subr.mxu0 0.0
    %2380 = vmatpush1.msra.mxu0 %v1765
    %2381 = vmatprep.subr.mxu0 0.0
    %2382 = vmatpush1.msra.mxu0 %v1766
    %2383 = vmatprep.subr.mxu0 0.0
    %2384 = vmatpush1.msra.mxu0 %v1767
    %2385 = vmatprep.subr.mxu0 0.0
    %2386 = vmatpush1.msra.mxu0 %v1768
    %2387 = vmatprep.subr.mxu0 0.0
    %2388 = vmatpush1.msra.mxu0 %v1769
    %2389 = vmatprep.subr.mxu0 0.0
    %2390 = vmatpush1.msra.mxu0 %v1770
    %2391 = vmatprep.subr.mxu0 0.0
    %2392 = vmatpush1.msra.mxu0 %v1771
    %2393 = vmatprep.subr.mxu0 0.0
    %2394 = vmatpush1.msra.mxu0 %v1772
    %2395 = vmatprep.mubr.f32.mxu0 %v1293
    %2396 = vmatmul.mubr.f32.gmra.mrb[0].mxu0 %v1271
    %v2397 = vpop.f32.mrb[0].mxu0
    %v2398 = vadd.f32 %v2328, %v2397
    %v2399 = vpop.f32.mrb[0].mxu0
    %2400 = vdwg.mxu0
    %2401 = vmatprep.subr.mxu0 0.0
    %2402 = vmatpush1.msra.mxu0 %v1773
    %2403 = vmatprep.subr.mxu0 0.0
    %2404 = vmatpush1.msra.mxu0 %v1774
    %2405 = vmatprep.subr.mxu0 0.0
    %2406 = vmatpush1.msra.mxu0 %v1775
    %2407 = vmatprep.subr.mxu0 0.0
    %2408 = vmatpush1.msra.mxu0 %v1776
    %2409 = vmatprep.subr.mxu0 0.0
    %2410 = vmatpush1.msra.mxu0 %v1777
    %2411 = vmatprep.subr.mxu0 0.0
    %2412 = vmatpush1.msra.mxu0 %v1778
    %2413 = vmatprep.subr.mxu0 0.0
    %2414 = vmatpush1.msra.mxu0 %v1779
    %2415 = vmatprep.subr.mxu0 0.0
    %2416 = vmatpush1.msra.mxu0 %v1780
    %2417 = vmatprep.subr.mxu0 0.0
    %2418 = vmatpush1.msra.mxu0 %v1781
    %2419 = vmatprep.subr.mxu0 0.0
    %2420 = vmatpush1.msra.mxu0 %v1782
    %2421 = vmatprep.subr.mxu0 0.0
    %2422 = vmatpush1.msra.mxu0 %v1783
    %2423 = vmatprep.subr.mxu0 0.0
    %2424 = vmatpush1.msra.mxu0 %v1784
    %2425 = vmatprep.subr.mxu0 0.0
    %2426 = vmatpush1.msra.mxu0 %v1785
    %2427 = vmatprep.subr.mxu0 0.0
    %2428 = vmatpush1.msra.mxu0 %v1786
    %2429 = vmatprep.subr.mxu0 0.0
    %2430 = vmatpush1.msra.mxu0 %v1787
    %2431 = vmatprep.subr.mxu0 0.0
    %2432 = vmatpush1.msra.mxu0 %v1788
    %2433 = vmatprep.subr.mxu0 0.0
    %2434 = vmatpush1.msra.mxu0 %v1789
    %2435 = vmatprep.subr.mxu0 0.0
    %2436 = vmatpush1.msra.mxu0 %v1790
    %2437 = vmatprep.subr.mxu0 0.0
    %2438 = vmatpush1.msra.mxu0 %v1791
    %2439 = vmatprep.subr.mxu0 0.0
    %2440 = vmatpush1.msra.mxu0 %v1792
    %2441 = vmatprep.subr.mxu0 0.0
    %2442 = vmatpush1.msra.mxu0 %v1793
    %2443 = vmatprep.subr.mxu0 0.0
    %2444 = vmatpush1.msra.mxu0 %v1794
    %2445 = vmatprep.subr.mxu0 0.0
    %2446 = vmatpush1.msra.mxu0 %v1795
    %2447 = vmatprep.subr.mxu0 0.0
    %2448 = vmatpush1.msra.mxu0 %v1796
    %2449 = vmatprep.subr.mxu0 0.0
    %2450 = vmatpush1.msra.mxu0 %v1797
    %2451 = vmatprep.subr.mxu0 0.0
    %2452 = vmatpush1.msra.mxu0 %v1798
    %2453 = vmatprep.subr.mxu0 0.0
    %2454 = vmatpush1.msra.mxu0 %v1799
    %2455 = vmatprep.subr.mxu0 0.0
    %2456 = vmatpush1.msra.mxu0 %v1800
    %2457 = vmatprep.subr.mxu0 0.0
    %2458 = vmatpush1.msra.mxu0 %v1801
    %2459 = vmatprep.subr.mxu0 0.0
    %2460 = vmatpush1.msra.mxu0 %v1802
    %2461 = vmatprep.subr.mxu0 0.0
    %2462 = vmatpush1.msra.mxu0 %v1803
    %2463 = vmatprep.subr.mxu0 0.0
    %2464 = vmatpush1.msra.mxu0 %v1804
    %2465 = vmatprep.mubr.f32.mxu0 %v1337
    %2466 = vmatmul.mubr.f32.gmra.mrb[0].mxu0 %v1315
    %v2467 = vpop.f32.mrb[0].mxu0
    %v2468 = vadd.f32 %v2398, %v2467
    %v2469 = vpop.f32.mrb[0].mxu0
    %2470 = vdwg.mxu0
    %2471 = vmatprep.subr.mxu0 0.0
    %2472 = vmatpush1.msra.mxu0 %v1805
    %2473 = vmatprep.subr.mxu0 0.0
    %2474 = vmatpush1.msra.mxu0 %v1806
    %2475 = vmatprep.subr.mxu0 0.0
    %2476 = vmatpush1.msra.mxu0 %v1807
    %2477 = vmatprep.subr.mxu0 0.0
    %2478 = vmatpush1.msra.mxu0 %v1808
    %2479 = vmatprep.subr.mxu0 0.0
    %2480 = vmatpush1.msra.mxu0 %v1809
    %2481 = vmatprep.subr.mxu0 0.0
    %2482 = vmatpush1.msra.mxu0 %v1810
    %2483 = vmatprep.subr.mxu0 0.0
    %2484 = vmatpush1.msra.mxu0 %v1811
    %2485 = vmatprep.subr.mxu0 0.0
    %2486 = vmatpush1.msra.mxu0 %v1812
    %2487 = vmatprep.subr.mxu0 0.0
    %2488 = vmatpush1.msra.mxu0 %v1813
    %2489 = vmatprep.subr.mxu0 0.0
    %2490 = vmatpush1.msra.mxu0 %v1814
    %2491 = vmatprep.subr.mxu0 0.0
    %2492 = vmatpush1.msra.mxu0 %v1815
    %2493 = vmatprep.subr.mxu0 0.0
    %2494 = vmatpush1.msra.mxu0 %v1816
    %2495 = vmatprep.subr.mxu0 0.0
    %2496 = vmatpush1.msra.mxu0 %v1817
    %2497 = vmatprep.subr.mxu0 0.0
    %2498 = vmatpush1.msra.mxu0 %v1818
    %2499 = vmatprep.subr.mxu0 0.0
    %2500 = vmatpush1.msra.mxu0 %v1819
    %2501 = vmatprep.subr.mxu0 0.0
    %2502 = vmatpush1.msra.mxu0 %v1820
    %2503 = vmatprep.subr.mxu0 0.0
    %2504 = vmatpush1.msra.mxu0 %v1821
    %2505 = vmatprep.subr.mxu0 0.0
    %2506 = vmatpush1.msra.mxu0 %v1822
    %2507 = vmatprep.subr.mxu0 0.0
    %2508 = vmatpush1.msra.mxu0 %v1823
    %2509 = vmatprep.subr.mxu0 0.0
    %2510 = vmatpush1.msra.mxu0 %v1824
    %2511 = vmatprep.subr.mxu0 0.0
    %2512 = vmatpush1.msra.mxu0 %v1825
    %2513 = vmatprep.subr.mxu0 0.0
    %2514 = vmatpush1.msra.mxu0 %v1826
    %2515 = vmatprep.subr.mxu0 0.0
    %2516 = vmatpush1.msra.mxu0 %v1827
    %2517 = vmatprep.subr.mxu0 0.0
    %2518 = vmatpush1.msra.mxu0 %v1828
    %2519 = vmatprep.subr.mxu0 0.0
    %2520 = vmatpush1.msra.mxu0 %v1829
    %2521 = vmatprep.subr.mxu0 0.0
    %2522 = vmatpush1.msra.mxu0 %v1830
    %2523 = vmatprep.subr.mxu0 0.0
    %2524 = vmatpush1.msra.mxu0 %v1831
    %2525 = vmatprep.subr.mxu0 0.0
    %2526 = vmatpush1.msra.mxu0 %v1832
    %2527 = vmatprep.subr.mxu0 0.0
    %2528 = vmatpush1.msra.mxu0 %v1833
    %2529 = vmatprep.subr.mxu0 0.0
    %2530 = vmatpush1.msra.mxu0 %v1834
    %2531 = vmatprep.subr.mxu0 0.0
    %2532 = vmatpush1.msra.mxu0 %v1835
    %2533 = vmatprep.subr.mxu0 0.0
    %2534 = vmatpush1.msra.mxu0 %v1836
    %2535 = vmatprep.mubr.f32.mxu0 %v1381
    %2536 = vmatmul.mubr.f32.gmra.mrb[0].mxu0 %v1359
    %v2537 = vpop.f32.mrb[0].mxu0
    %v2538 = vadd.f32 %v2468, %v2537
    %v2539 = vpop.f32.mrb[0].mxu0
    %2540 = vdwg.mxu0
    %2541 = vmatprep.subr.mxu0 0.0
    %2542 = vmatpush1.msra.mxu0 %v1837
    %2543 = vmatprep.subr.mxu0 0.0
    %2544 = vmatpush1.msra.mxu0 %v1838
    %2545 = vmatprep.subr.mxu0 0.0
    %2546 = vmatpush1.msra.mxu0 %v1839
    %2547 = vmatprep.subr.mxu0 0.0
    %2548 = vmatpush1.msra.mxu0 %v1840
    %2549 = vmatprep.subr.mxu0 0.0
    %2550 = vmatpush1.msra.mxu0 %v1841
    %2551 = vmatprep.subr.mxu0 0.0
    %2552 = vmatpush1.msra.mxu0 %v1842
    %2553 = vmatprep.subr.mxu0 0.0
    %2554 = vmatpush1.msra.mxu0 %v1843
    %2555 = vmatprep.subr.mxu0 0.0
    %2556 = vmatpush1.msra.mxu0 %v1844
    %2557 = vmatprep.subr.mxu0 0.0
    %2558 = vmatpush1.msra.mxu0 %v1845
    %2559 = vmatprep.subr.mxu0 0.0
    %2560 = vmatpush1.msra.mxu0 %v1846
    %2561 = vmatprep.subr.mxu0 0.0
    %2562 = vmatpush1.msra.mxu0 %v1847
    %2563 = vmatprep.subr.mxu0 0.0
    %2564 = vmatpush1.msra.mxu0 %v1848
    %2565 = vmatprep.subr.mxu0 0.0
    %2566 = vmatpush1.msra.mxu0 %v1849
    %2567 = vmatprep.subr.mxu0 0.0
    %2568 = vmatpush1.msra.mxu0 %v1850
    %2569 = vmatprep.subr.mxu0 0.0
    %2570 = vmatpush1.msra.mxu0 %v1851
    %2571 = vmatprep.subr.mxu0 0.0
    %2572 = vmatpush1.msra.mxu0 %v1852
    %2573 = vmatprep.subr.mxu0 0.0
    %2574 = vmatpush1.msra.mxu0 %v1853
    %2575 = vmatprep.subr.mxu0 0.0
    %2576 = vmatpush1.msra.mxu0 %v1854
    %2577 = vmatprep.subr.mxu0 0.0
    %2578 = vmatpush1.msra.mxu0 %v1855
    %2579 = vmatprep.subr.mxu0 0.0
    %2580 = vmatpush1.msra.mxu0 %v1856
    %2581 = vmatprep.subr.mxu0 0.0
    %2582 = vmatpush1.msra.mxu0 %v1857
    %2583 = vmatprep.subr.mxu0 0.0
    %2584 = vmatpush1.msra.mxu0 %v1858
    %2585 = vmatprep.subr.mxu0 0.0
    %2586 = vmatpush1.msra.mxu0 %v1859
    %2587 = vmatprep.subr.mxu0 0.0
    %2588 = vmatpush1.msra.mxu0 %v1860
    %2589 = vmatprep.subr.mxu0 0.0
    %2590 = vmatpush1.msra.mxu0 %v1861
    %2591 = vmatprep.subr.mxu0 0.0
    %2592 = vmatpush1.msra.mxu0 %v1862
    %2593 = vmatprep.subr.mxu0 0.0
    %2594 = vmatpush1.msra.mxu0 %v1863
    %2595 = vmatprep.subr.mxu0 0.0
    %2596 = vmatpush1.msra.mxu0 %v1864
    %2597 = vmatprep.subr.mxu0 0.0
    %2598 = vmatpush1.msra.mxu0 %v1865
    %2599 = vmatprep.subr.mxu0 0.0
    %2600 = vmatpush1.msra.mxu0 %v1866
    %2601 = vmatprep.subr.mxu0 0.0
    %2602 = vmatpush1.msra.mxu0 %v1867
    %2603 = vmatprep.subr.mxu0 0.0
    %2604 = vmatpush1.msra.mxu0 %v1868
    %2605 = vmatprep.mubr.f32.mxu0 %v1425
    %2606 = vmatmul.mubr.f32.gmra.mrb[0].mxu0 %v1403
    %v2607 = vpop.f32.mrb[0].mxu0
    %v2608 = vadd.f32 %v2538, %v2607
    %v2609 = vpop.f32.mrb[0].mxu0
    %2610 = vdwg.mxu0
    %2611 = vmatprep.subr.mxu0 0.0
    %2612 = vmatpush1.msra.mxu0 %v1869
    %2613 = vmatprep.subr.mxu0 0.0
    %2614 = vmatpush1.msra.mxu0 %v1870
    %2615 = vmatprep.subr.mxu0 0.0
    %2616 = vmatpush1.msra.mxu0 %v1871
    %2617 = vmatprep.subr.mxu0 0.0
    %2618 = vmatpush1.msra.mxu0 %v1872
    %2619 = vmatprep.subr.mxu0 0.0
    %2620 = vmatpush1.msra.mxu0 %v1873
    %2621 = vmatprep.subr.mxu0 0.0
    %2622 = vmatpush1.msra.mxu0 %v1874
    %2623 = vmatprep.subr.mxu0 0.0
    %2624 = vmatpush1.msra.mxu0 %v1875
    %2625 = vmatprep.subr.mxu0 0.0
    %2626 = vmatpush1.msra.mxu0 %v1876
    %2627 = vmatprep.subr.mxu0 0.0
    %2628 = vmatpush1.msra.mxu0 %v1877
    %2629 = vmatprep.subr.mxu0 0.0
    %2630 = vmatpush1.msra.mxu0 %v1878
    %2631 = vmatprep.subr.mxu0 0.0
    %2632 = vmatpush1.msra.mxu0 %v1879
    %2633 = vmatprep.subr.mxu0 0.0
    %2634 = vmatpush1.msra.mxu0 %v1880
    %2635 = vmatprep.subr.mxu0 0.0
    %2636 = vmatpush1.msra.mxu0 %v1881
    %2637 = vmatprep.subr.mxu0 0.0
    %2638 = vmatpush1.msra.mxu0 %v1882
    %2639 = vmatprep.subr.mxu0 0.0
    %2640 = vmatpush1.msra.mxu0 %v1883
    %2641 = vmatprep.subr.mxu0 0.0
    %2642 = vmatpush1.msra.mxu0 %v1884
    %2643 = vmatprep.subr.mxu0 0.0
    %2644 = vmatpush1.msra.mxu0 %v1885
    %2645 = vmatprep.subr.mxu0 0.0
    %2646 = vmatpush1.msra.mxu0 %v1886
    %2647 = vmatprep.subr.mxu0 0.0
    %2648 = vmatpush1.msra.mxu0 %v1887
    %2649 = vmatprep.subr.mxu0 0.0
    %2650 = vmatpush1.msra.mxu0 %v1888
    %2651 = vmatprep.subr.mxu0 0.0
    %2652 = vmatpush1.msra.mxu0 %v1889
    %2653 = vmatprep.subr.mxu0 0.0
    %2654 = vmatpush1.msra.mxu0 %v1890
    %2655 = vmatprep.subr.mxu0 0.0
    %2656 = vmatpush1.msra.mxu0 %v1891
    %2657 = vmatprep.subr.mxu0 0.0
    %2658 = vmatpush1.msra.mxu0 %v1892
    %2659 = vmatprep.subr.mxu0 0.0
    %2660 = vmatpush1.msra.mxu0 %v1893
    %2661 = vmatprep.subr.mxu0 0.0
    %2662 = vmatpush1.msra.mxu0 %v1894
    %2663 = vmatprep.subr.mxu0 0.0
    %2664 = vmatpush1.msra.mxu0 %v1895
    %2665 = vmatprep.subr.mxu0 0.0
    %2666 = vmatpush1.msra.mxu0 %v1896
    %2667 = vmatprep.subr.mxu0 0.0
    %2668 = vmatpush1.msra.mxu0 %v1897
    %2669 = vmatprep.subr.mxu0 0.0
    %2670 = vmatpush1.msra.mxu0 %v1898
    %2671 = vmatprep.subr.mxu0 0.0
    %2672 = vmatpush1.msra.mxu0 %v1899
    %2673 = vmatprep.subr.mxu0 0.0
    %2674 = vmatpush1.msra.mxu0 %v1900
    %2675 = vmatprep.mubr.f32.mxu0 %v1469
    %2676 = vmatmul.mubr.f32.gmra.mrb[0].mxu0 %v1447
    %v2677 = vpop.f32.mrb[0].mxu0
    %v2678 = vadd.f32 %v2608, %v2677
    %v2679 = vpop.f32.mrb[0].mxu0
    %2680 = vdwg.mxu0
    %2681 = vmatprep.subr.mxu0 0.0
    %2682 = vmatpush1.msra.mxu0 %v1901
    %2683 = vmatprep.subr.mxu0 0.0
    %2684 = vmatpush1.msra.mxu0 %v1902
    %2685 = vmatprep.subr.mxu0 0.0
    %2686 = vmatpush1.msra.mxu0 %v1903
    %2687 = vmatprep.subr.mxu0 0.0
    %2688 = vmatpush1.msra.mxu0 %v1904
    %2689 = vmatprep.subr.mxu0 0.0
    %2690 = vmatpush1.msra.mxu0 %v1905
    %2691 = vmatprep.subr.mxu0 0.0
    %2692 = vmatpush1.msra.mxu0 %v1906
    %2693 = vmatprep.subr.mxu0 0.0
    %2694 = vmatpush1.msra.mxu0 %v1907
    %2695 = vmatprep.subr.mxu0 0.0
    %2696 = vmatpush1.msra.mxu0 %v1908
    %2697 = vmatprep.subr.mxu0 0.0
    %2698 = vmatpush1.msra.mxu0 %v1909
    %2699 = vmatprep.subr.mxu0 0.0
    %2700 = vmatpush1.msra.mxu0 %v1910
    %2701 = vmatprep.subr.mxu0 0.0
    %2702 = vmatpush1.msra.mxu0 %v1911
    %2703 = vmatprep.subr.mxu0 0.0
    %2704 = vmatpush1.msra.mxu0 %v1912
    %2705 = vmatprep.subr.mxu0 0.0
    %2706 = vmatpush1.msra.mxu0 %v1913
    %2707 = vmatprep.subr.mxu0 0.0
    %2708 = vmatpush1.msra.mxu0 %v1914
    %2709 = vmatprep.subr.mxu0 0.0
    %2710 = vmatpush1.msra.mxu0 %v1915
    %2711 = vmatprep.subr.mxu0 0.0
    %2712 = vmatpush1.msra.mxu0 %v1916
    %2713 = vmatprep.subr.mxu0 0.0
    %2714 = vmatpush1.msra.mxu0 %v1917
    %2715 = vmatprep.subr.mxu0 0.0
    %2716 = vmatpush1.msra.mxu0 %v1918
    %2717 = vmatprep.subr.mxu0 0.0
    %2718 = vmatpush1.msra.mxu0 %v1919
    %2719 = vmatprep.subr.mxu0 0.0
    %2720 = vmatpush1.msra.mxu0 %v1920
    %2721 = vmatprep.subr.mxu0 0.0
    %2722 = vmatpush1.msra.mxu0 %v1921
    %2723 = vmatprep.subr.mxu0 0.0
    %2724 = vmatpush1.msra.mxu0 %v1922
    %2725 = vmatprep.subr.mxu0 0.0
    %2726 = vmatpush1.msra.mxu0 %v1923
    %2727 = vmatprep.subr.mxu0 0.0
    %2728 = vmatpush1.msra.mxu0 %v1924
    %2729 = vmatprep.subr.mxu0 0.0
    %2730 = vmatpush1.msra.mxu0 %v1925
    %2731 = vmatprep.subr.mxu0 0.0
    %2732 = vmatpush1.msra.mxu0 %v1926
    %2733 = vmatprep.subr.mxu0 0.0
    %2734 = vmatpush1.msra.mxu0 %v1927
    %2735 = vmatprep.subr.mxu0 0.0
    %2736 = vmatpush1.msra.mxu0 %v1928
    %2737 = vmatprep.subr.mxu0 0.0
    %2738 = vmatpush1.msra.mxu0 %v1929
    %2739 = vmatprep.subr.mxu0 0.0
    %2740 = vmatpush1.msra.mxu0 %v1930
    %2741 = vmatprep.subr.mxu0 0.0
    %2742 = vmatpush1.msra.mxu0 %v1931
    %2743 = vmatprep.subr.mxu0 0.0
    %2744 = vmatpush1.msra.mxu0 %v1932
    %2745 = vmatprep.mubr.f32.mxu0 %v1513
    %2746 = vmatmul.mubr.f32.gmra.mrb[0].mxu0 %v1491
    %v2747 = vpop.f32.mrb[0].mxu0
    %v2748 = vadd.f32 %v2678, %v2747
    %v2749 = vpop.f32.mrb[0].mxu0
    %2750 = vdwg.mxu0
    %2751 = vmatprep.subr.mxu0 0.0
    %2752 = vmatpush1.msra.mxu0 %v1933
    %2753 = vmatprep.subr.mxu0 0.0
    %2754 = vmatpush1.msra.mxu0 %v1934
    %2755 = vmatprep.subr.mxu0 0.0
    %2756 = vmatpush1.msra.mxu0 %v1935
    %2757 = vmatprep.subr.mxu0 0.0
    %2758 = vmatpush1.msra.mxu0 %v1936
    %2759 = vmatprep.subr.mxu0 0.0
    %2760 = vmatpush1.msra.mxu0 %v1937
    %2761 = vmatprep.subr.mxu0 0.0
    %2762 = vmatpush1.msra.mxu0 %v1938
    %2763 = vmatprep.subr.mxu0 0.0
    %2764 = vmatpush1.msra.mxu0 %v1939
    %2765 = vmatprep.subr.mxu0 0.0
    %2766 = vmatpush1.msra.mxu0 %v1940
    %2767 = vmatprep.subr.mxu0 0.0
    %2768 = vmatpush1.msra.mxu0 %v1941
    %2769 = vmatprep.subr.mxu0 0.0
    %2770 = vmatpush1.msra.mxu0 %v1942
    %2771 = vmatprep.subr.mxu0 0.0
    %2772 = vmatpush1.msra.mxu0 %v1943
    %2773 = vmatprep.subr.mxu0 0.0
    %2774 = vmatpush1.msra.mxu0 %v1944
    %2775 = vmatprep.subr.mxu0 0.0
    %2776 = vmatpush1.msra.mxu0 %v1945
    %2777 = vmatprep.subr.mxu0 0.0
    %2778 = vmatpush1.msra.mxu0 %v1946
    %2779 = vmatprep.subr.mxu0 0.0
    %2780 = vmatpush1.msra.mxu0 %v1947
    %2781 = vmatprep.subr.mxu0 0.0
    %2782 = vmatpush1.msra.mxu0 %v1948
    %2783 = vmatprep.subr.mxu0 0.0
    %2784 = vmatpush1.msra.mxu0 %v1949
    %2785 = vmatprep.subr.mxu0 0.0
    %2786 = vmatpush1.msra.mxu0 %v1950
    %2787 = vmatprep.subr.mxu0 0.0
    %2788 = vmatpush1.msra.mxu0 %v1951
    %2789 = vmatprep.subr.mxu0 0.0
    %2790 = vmatpush1.msra.mxu0 %v1952
    %2791 = vmatprep.subr.mxu0 0.0
    %2792 = vmatpush1.msra.mxu0 %v1953
    %2793 = vmatprep.subr.mxu0 0.0
    %2794 = vmatpush1.msra.mxu0 %v1954
    %2795 = vmatprep.subr.mxu0 0.0
    %2796 = vmatpush1.msra.mxu0 %v1955
    %2797 = vmatprep.subr.mxu0 0.0
    %2798 = vmatpush1.msra.mxu0 %v1956
    %2799 = vmatprep.subr.mxu0 0.0
    %2800 = vmatpush1.msra.mxu0 %v1957
    %2801 = vmatprep.subr.mxu0 0.0
    %2802 = vmatpush1.msra.mxu0 %v1958
    %2803 = vmatprep.subr.mxu0 0.0
    %2804 = vmatpush1.msra.mxu0 %v1959
    %2805 = vmatprep.subr.mxu0 0.0
    %2806 = vmatpush1.msra.mxu0 %v1960
    %2807 = vmatprep.subr.mxu0 0.0
    %2808 = vmatpush1.msra.mxu0 %v1961
    %2809 = vmatprep.subr.mxu0 0.0
    %2810 = vmatpush1.msra.mxu0 %v1962
    %2811 = vmatprep.subr.mxu0 0.0
    %2812 = vmatpush1.msra.mxu0 %v1963
    %2813 = vmatprep.subr.mxu0 0.0
    %2814 = vmatpush1.msra.mxu0 %v1964
    %2815 = vmatprep.mubr.f32.mxu0 %v1557
    %2816 = vmatmul.mubr.f32.gmra.mrb[0].mxu0 %v1535
    %v2817 = vpop.f32.mrb[0].mxu0
    %v2818 = vadd.f32 %v2748, %v2817
    %v2819 = vpop.f32.mrb[0].mxu0
    %2820 = vdwg.mxu0
    %2821 = vmatprep.subr.mxu0 0.0
    %2822 = vmatpush1.msra.mxu0 %v1965
    %2823 = vmatprep.subr.mxu0 0.0
    %2824 = vmatpush1.msra.mxu0 %v1966
    %2825 = vmatprep.subr.mxu0 0.0
    %2826 = vmatpush1.msra.mxu0 %v1967
    %2827 = vmatprep.subr.mxu0 0.0
    %2828 = vmatpush1.msra.mxu0 %v1968
    %2829 = vmatprep.subr.mxu0 0.0
    %2830 = vmatpush1.msra.mxu0 %v1969
    %2831 = vmatprep.subr.mxu0 0.0
    %2832 = vmatpush1.msra.mxu0 %v1970
    %2833 = vmatprep.subr.mxu0 0.0
    %2834 = vmatpush1.msra.mxu0 %v1971
    %2835 = vmatprep.subr.mxu0 0.0
    %2836 = vmatpush1.msra.mxu0 %v1972
    %2837 = vmatprep.subr.mxu0 0.0
    %2838 = vmatpush1.msra.mxu0 %v1973
    %2839 = vmatprep.subr.mxu0 0.0
    %2840 = vmatpush1.msra.mxu0 %v1974
    %2841 = vmatprep.subr.mxu0 0.0
    %2842 = vmatpush1.msra.mxu0 %v1975
    %2843 = vmatprep.subr.mxu0 0.0
    %2844 = vmatpush1.msra.mxu0 %v1976
    %2845 = vmatprep.subr.mxu0 0.0
    %2846 = vmatpush1.msra.mxu0 %v1977
    %2847 = vmatprep.subr.mxu0 0.0
    %2848 = vmatpush1.msra.mxu0 %v1978
    %2849 = vmatprep.subr.mxu0 0.0
    %2850 = vmatpush1.msra.mxu0 %v1979
    %2851 = vmatprep.subr.mxu0 0.0
    %2852 = vmatpush1.msra.mxu0 %v1980
    %2853 = vmatprep.subr.mxu0 0.0
    %2854 = vmatpush1.msra.mxu0 0.0
    %2855 = vmatprep.subr.mxu0 0.0
    %2856 = vmatpush1.msra.mxu0 0.0
    %2857 = vmatprep.subr.mxu0 0.0
    %2858 = vmatpush1.msra.mxu0 0.0
    %2859 = vmatprep.subr.mxu0 0.0
    %2860 = vmatpush1.msra.mxu0 0.0
    %2861 = vmatprep.subr.mxu0 0.0
    %2862 = vmatpush1.msra.mxu0 0.0
    %2863 = vmatprep.subr.mxu0 0.0
    %2864 = vmatpush1.msra.mxu0 0.0
    %2865 = vmatprep.subr.mxu0 0.0
    %2866 = vmatpush1.msra.mxu0 0.0
    %2867 = vmatprep.subr.mxu0 0.0
    %2868 = vmatpush1.msra.mxu0 0.0
    %2869 = vmatprep.subr.mxu0 0.0
    %2870 = vmatpush1.msra.mxu0 0.0
    %2871 = vmatprep.subr.mxu0 0.0
    %2872 = vmatpush1.msra.mxu0 0.0
    %2873 = vmatprep.subr.mxu0 0.0
    %2874 = vmatpush1.msra.mxu0 0.0
    %2875 = vmatprep.subr.mxu0 0.0
    %2876 = vmatpush1.msra.mxu0 0.0
    %2877 = vmatprep.subr.mxu0 0.0
    %2878 = vmatpush1.msra.mxu0 0.0
    %2879 = vmatprep.subr.mxu0 0.0
    %2880 = vmatpush1.msra.mxu0 0.0
    %2881 = vmatprep.subr.mxu0 0.0
    %2882 = vmatpush1.msra.mxu0 0.0
    %2883 = vmatprep.subr.mxu0 0.0
    %2884 = vmatpush1.msra.mxu0 0.0
    %2885 = vmatprep.mubr.f32.mxu0 0.0
    %2886 = vmatmul.mubr.f32.gmra.mrb[0].mxu0 %v1579
    %v2887 = vpop.f32.mrb[0].mxu0
    %v2888 = vadd.f32 %v2818, %v2887
    %v2889 = vpop.f32.mrb[0].mxu0
    %2890 = vdwg.mxu0
    %v2891 = vld [vmem:[#allocation12] sm:$0x1]
    %v2892 = vld [vmem:[#allocation14] sm:$0x1]
    %v2894 = vlaneseq
    %v2895 = vshrl.u32 %v2894, 7
    %v2896 = vsub.s32 0, %v2895
    %v2897 = vrot.slane %v2891, %v2896
    %v2899 = vmul.f32 %v2888, %v2897
    %v2901 = vlaneseq
    %v2902 = vshrl.u32 %v2901, 7
    %v2903 = vsub.s32 0, %v2902
    %v2904 = vrot.slane %v2892, %v2903
    %v2906 = vadd.f32 %v2899, %v2904
    %v2907 = vmax.f32 %v2906, 0.0
    %s2908 = scalar_lea.vmem [#allocation2], 8
    %2909 = vst [vmem:[%s2908] sm:$0xff] %v2907
    %v2910 = vld [vmem:[#allocation2] sm:$0xff]
    %v2911 = vld [vmem:[%s2908] sm:$0xff]
    %v2912 = vadd.f32 %v2910, %v2911
    %vm2913 = vcmask 1043456
    %v2914 = vsel %vm2913, %v2912, 0.0
    %v2915 = vrot.slane %v2914, 4
    %v2916 = vadd.f32 %v2914, %v2915
    %v2917 = vrot.slane %v2916, 2
    %v2918 = vadd.f32 %v2916, %v2917
    %v2919 = vrot.slane %v2918, 1
    %v2920 = vadd.f32 %v2918, %v2919
    %v2922 = vrot.slane %v2912, 4
    %v2924 = vsel %vm2913, %v2922, 0.0
    %v2925 = vrot.slane %v2924, 4
    %v2926 = vadd.f32 %v2924, %v2925
    %v2927 = vrot.slane %v2926, 2
    %v2928 = vadd.f32 %v2926, %v2927
    %v2929 = vrot.slane %v2928, 1
    %v2930 = vadd.f32 %v2928, %v2929
    %vm2931 = vcmask 1040384
    %v2932 = vsel %vm2931, %v2920, %v2930
    %v2933 = vmul.f32 %v2932, 0.25
    %v2934 = vld [vmem:[#allocation15] sm:$0xff]
    %v2935 = vld [vmem:[#allocation15 + $0x8] sm:$0xff]
    %v2936 = vld [vmem:[#allocation15 + $0x10] sm:$0xff]
    %v2937 = vld [vmem:[#allocation15 + $0x18] sm:$0xff]
    %v2938 = vld [vmem:[#allocation15 + $0x20] sm:$0xff]
    %v2939 = vld [vmem:[#allocation15 + $0x28] sm:$0xff]
    %v2940 = vld [vmem:[#allocation15 + $0x30] sm:$0xff]
    %v2941 = vld [vmem:[#allocation15 + $0x38] sm:$0xff]
    %v2942 = vld [vmem:[#allocation15 + $0x40] sm:$0xff]
    %v2943 = vld [vmem:[#allocation15 + $0x48] sm:$0xff]
    %v2944 = vld [vmem:[#allocation15 + $0x50] sm:$0xff]
    %v2945 = vld [vmem:[#allocation15 + $0x58] sm:$0xff]
    %v2946 = vld [vmem:[#allocation15 + $0x60] sm:$0xff]
    %v2947 = vld [vmem:[#allocation15 + $0x68] sm:$0xff]
    %v2948 = vld [vmem:[#allocation15 + $0x70] sm:$0xff]
    %v2949 = vld [vmem:[#allocation15 + $0x78] sm:$0xff]
    %v2950 = vld [vmem:[#allocation17] sm:$0x1]
    %v2952 = vlaneseq
    %v2953 = vshrl.u32 %v2952, 7
    %v2954 = vsub.s32 0, %v2953
    %v2955 = vrot.slane %v2950, %v2954
    %2957 = vmatprep.subr.mxu0 0.0
    %2958 = vmatpush1.msra.mxu0 %v2934
    %2959 = vmatprep.subr.mxu0 0.0
    %2960 = vmatpush1.msra.mxu0 %v2935
    %2961 = vmatprep.subr.mxu0 0.0
    %2962 = vmatpush1.msra.mxu0 %v2936
    %2963 = vmatprep.subr.mxu0 0.0
    %2964 = vmatpush1.msra.mxu0 %v2937
    %2965 = vmatprep.subr.mxu0 0.0
    %2966 = vmatpush1.msra.mxu0 %v2938
    %2967 = vmatprep.subr.mxu0 0.0
    %2968 = vmatpush1.msra.mxu0 %v2939
    %2969 = vmatprep.subr.mxu0 0.0
    %2970 = vmatpush1.msra.mxu0 %v2940
    %2971 = vmatprep.subr.mxu0 0.0
    %2972 = vmatpush1.msra.mxu0 %v2941
    %2973 = vmatprep.subr.mxu0 0.0
    %2974 = vmatpush1.msra.mxu0 %v2942
    %2975 = vmatprep.subr.mxu0 0.0
    %2976 = vmatpush1.msra.mxu0 %v2943
    %2977 = vmatprep.subr.mxu0 0.0
    %2978 = vmatpush1.msra.mxu0 %v2944
    %2979 = vmatprep.subr.mxu0 0.0
    %2980 = vmatpush1.msra.mxu0 %v2945
    %2981 = vmatprep.subr.mxu0 0.0
    %2982 = vmatpush1.msra.mxu0 %v2946
    %2983 = vmatprep.subr.mxu0 0.0
    %2984 = vmatpush1.msra.mxu0 %v2947
    %2985 = vmatprep.subr.mxu0 0.0
    %2986 = vmatpush1.msra.mxu0 %v2948
    %2987 = vmatprep.subr.mxu0 0.0
    %2988 = vmatpush1.msra.mxu0 %v2949
    %2989 = vmatprep.subr.mxu0 0.0
    %2990 = vmatpush1.msra.mxu0 0.0
    %2991 = vmatprep.subr.mxu0 0.0
    %2992 = vmatpush1.msra.mxu0 0.0
    %2993 = vmatprep.subr.mxu0 0.0
    %2994 = vmatpush1.msra.mxu0 0.0
    %2995 = vmatprep.subr.mxu0 0.0
    %2996 = vmatpush1.msra.mxu0 0.0
    %2997 = vmatprep.subr.mxu0 0.0
    %2998 = vmatpush1.msra.mxu0 0.0
    %2999 = vmatprep.subr.mxu0 0.0
    %3000 = vmatpush1.msra.mxu0 0.0
    %3001 = vmatprep.subr.mxu0 0.0
    %3002 = vmatpush1.msra.mxu0 0.0
    %3003 = vmatprep.subr.mxu0 0.0
    %3004 = vmatpush1.msra.mxu0 0.0
    %3005 = vmatprep.subr.mxu0 0.0
    %3006 = vmatpush1.msra.mxu0 0.0
    %3007 = vmatprep.subr.mxu0 0.0
    %3008 = vmatpush1.msra.mxu0 0.0
    %3009 = vmatprep.subr.mxu0 0.0
    %3010 = vmatpush1.msra.mxu0 0.0
    %3011 = vmatprep.subr.mxu0 0.0
    %3012 = vmatpush1.msra.mxu0 0.0
    %3013 = vmatprep.subr.mxu0 0.0
    %3014 = vmatpush1.msra.mxu0 0.0
    %3015 = vmatprep.subr.mxu0 0.0
    %3016 = vmatpush1.msra.mxu0 0.0
    %3017 = vmatprep.subr.mxu0 0.0
    %3018 = vmatpush1.msra.mxu0 0.0
    %3019 = vmatprep.subr.mxu0 0.0
    %3020 = vmatpush1.msra.mxu0 0.0
    %3021 = vmatprep.mubr.f32.mxu0 0.0
    %3022 = vmatmul.mubr.f32.gmra.mrb[0].mxu0 %v2933
    %v3023 = vpop.f32.mrb[0].mxu0
    %v3024 = vadd.f32 %v2955, %v3023
    %v3025 = vpop.f32.mrb[0].mxu0
    %3026 = vdwg.mxu0
    %v3027 = vld [vmem:[#allocation18] sm:$0xff]
    %v3028 = vld [vmem:[#allocation18 + $0x8] sm:$0xff]
    %v3029 = vld [vmem:[#allocation18 + $0x10] sm:$0xff]
    %v3030 = vld [vmem:[#allocation18 + $0x18] sm:$0xff]
    %v3031 = vld [vmem:[#allocation18 + $0x20] sm:$0xff]
    %v3032 = vld [vmem:[#allocation18 + $0x28] sm:$0xff]
    %v3033 = vld [vmem:[#allocation18 + $0x30] sm:$0xff]
    %v3034 = vld [vmem:[#allocation18 + $0x38] sm:$0xff]
    %v3035 = vld [vmem:[#allocation18 + $0x40] sm:$0xff]
    %v3036 = vld [vmem:[#allocation18 + $0x48] sm:$0xff]
    %v3037 = vld [vmem:[#allocation18 + $0x50] sm:$0xff]
    %v3038 = vld [vmem:[#allocation18 + $0x58] sm:$0xff]
    %v3039 = vld [vmem:[#allocation18 + $0x60] sm:$0xff]
    %v3040 = vld [vmem:[#allocation18 + $0x68] sm:$0xff]
    %v3041 = vld [vmem:[#allocation18 + $0x70] sm:$0xff]
    %v3042 = vld [vmem:[#allocation18 + $0x78] sm:$0xff]
    %v3043 = vld [vmem:[#allocation18 + $0x80] sm:$0xff]
    %v3044 = vld [vmem:[#allocation18 + $0x88] sm:$0xff]
    %v3045 = vld [vmem:[#allocation18 + $0x90] sm:$0xff]
    %v3046 = vld [vmem:[#allocation18 + $0x98] sm:$0xff]
    %v3047 = vld [vmem:[#allocation18 + $0xa0] sm:$0xff]
    %v3048 = vld [vmem:[#allocation18 + $0xa8] sm:$0xff]
    %v3049 = vld [vmem:[#allocation18 + $0xb0] sm:$0xff]
    %v3050 = vld [vmem:[#allocation18 + $0xb8] sm:$0xff]
    %v3051 = vld [vmem:[#allocation18 + $0xc0] sm:$0xff]
    %v3052 = vld [vmem:[#allocation18 + $0xc8] sm:$0xff]
    %v3053 = vld [vmem:[#allocation18 + $0xd0] sm:$0xff]
    %v3054 = vld [vmem:[#allocation18 + $0xd8] sm:$0xff]
    %v3055 = vld [vmem:[#allocation18 + $0xe0] sm:$0xff]
    %v3056 = vld [vmem:[#allocation18 + $0xe8] sm:$0xff]
    %v3057 = vld [vmem:[#allocation18 + $0xf0] sm:$0xff]
    %v3058 = vld [vmem:[#allocation18 + $0xf8] sm:$0xff]
    %v3059 = vld [vmem:[#allocation20] sm:$0x3]
    %v3061 = vlaneseq
    %v3062 = vshrl.u32 %v3061, 7
    %v3063 = vsub.s32 0, %v3062
    %v3064 = vrot.slane %v3059, %v3063
    %v3065 = vlaneseq
    %v3066 = vshrl.u32 %v3065, 7
    %v3067 = vsub.s32 1, %v3066
    %v3068 = vrot.slane %v3059, %v3067
    %3071 = vmatprep.subr.mxu0 %v3028
    %3072 = vmatpush1.msra.mxu0 %v3027
    %3073 = vmatprep.subr.mxu0 %v3030
    %3074 = vmatpush1.msra.mxu0 %v3029
    %3075 = vmatprep.subr.mxu0 %v3032
    %3076 = vmatpush1.msra.mxu0 %v3031
    %3077 = vmatprep.subr.mxu0 %v3034
    %3078 = vmatpush1.msra.mxu0 %v3033
    %3079 = vmatprep.subr.mxu0 %v3036
    %3080 = vmatpush1.msra.mxu0 %v3035
    %3081 = vmatprep.subr.mxu0 %v3038
    %3082 = vmatpush1.msra.mxu0 %v3037
    %3083 = vmatprep.subr.mxu0 %v3040
    %3084 = vmatpush1.msra.mxu0 %v3039
    %3085 = vmatprep.subr.mxu0 %v3042
    %3086 = vmatpush1.msra.mxu0 %v3041
    %3087 = vmatprep.subr.mxu0 %v3044
    %3088 = vmatpush1.msra.mxu0 %v3043
    %3089 = vmatprep.subr.mxu0 %v3046
    %3090 = vmatpush1.msra.mxu0 %v3045
    %3091 = vmatprep.subr.mxu0 %v3048
    %3092 = vmatpush1.msra.mxu0 %v3047
    %3093 = vmatprep.subr.mxu0 %v3050
    %3094 = vmatpush1.msra.mxu0 %v3049
    %3095 = vmatprep.subr.mxu0 %v3052
    %3096 = vmatpush1.msra.mxu0 %v3051
    %3097 = vmatprep.subr.mxu0 %v3054
    %3098 = vmatpush1.msra.mxu0 %v3053
    %3099 = vmatprep.subr.mxu0 %v3056
    %3100 = vmatpush1.msra.mxu0 %v3055
    %3101 = vmatprep.subr.mxu0 %v3058
    %3102 = vmatpush1.msra.mxu0 %v3057
    %3103 = vmatprep.subr.mxu0 0.0
    %3104 = vmatpush1.msra.mxu0 0.0
    %3105 = vmatprep.subr.mxu0 0.0
    %3106 = vmatpush1.msra.mxu0 0.0
    %3107 = vmatprep.subr.mxu0 0.0
    %3108 = vmatpush1.msra.mxu0 0.0
    %3109 = vmatprep.subr.mxu0 0.0
    %3110 = vmatpush1.msra.mxu0 0.0
    %3111 = vmatprep.subr.mxu0 0.0
    %3112 = vmatpush1.msra.mxu0 0.0
    %3113 = vmatprep.subr.mxu0 0.0
    %3114 = vmatpush1.msra.mxu0 0.0
    %3115 = vmatprep.subr.mxu0 0.0
    %3116 = vmatpush1.msra.mxu0 0.0
    %3117 = vmatprep.subr.mxu0 0.0
    %3118 = vmatpush1.msra.mxu0 0.0
    %3119 = vmatprep.subr.mxu0 0.0
    %3120 = vmatpush1.msra.mxu0 0.0
    %3121 = vmatprep.subr.mxu0 0.0
    %3122 = vmatpush1.msra.mxu0 0.0
    %3123 = vmatprep.subr.mxu0 0.0
    %3124 = vmatpush1.msra.mxu0 0.0
    %3125 = vmatprep.subr.mxu0 0.0
    %3126 = vmatpush1.msra.mxu0 0.0
    %3127 = vmatprep.subr.mxu0 0.0
    %3128 = vmatpush1.msra.mxu0 0.0
    %3129 = vmatprep.subr.mxu0 0.0
    %3130 = vmatpush1.msra.mxu0 0.0
    %3131 = vmatprep.subr.mxu0 0.0
    %3132 = vmatpush1.msra.mxu0 0.0
    %3133 = vmatprep.subr.mxu0 0.0
    %3134 = vmatpush1.msra.mxu0 0.0
    %3135 = vmatprep.mubr.f32.mxu0 0.0
    %3136 = vmatmul.mubr.f32.gmra.mrb[0].mxu0 %v3024
    %v3137 = vpop.f32.mrb[0].mxu0
    %v3138 = vadd.f32 %v3064, %v3137
    %v3139 = vpop.f32.mrb[0].mxu0
    %v3140 = vadd.f32 %v3068, %v3139
    %3141 = vdwg.mxu0
    %v3142 = vmax.f32 %v3138, %v3140
    %v3143 = vsub.f32 %v3138, %v3142
    %v3144 = vmul.f32 %v3143, 1.442695
    %v3145 = vpow.pop %v3144
    %v3146 = vsub.f32 %v3140, %v3142
    %v3147 = vmul.f32 %v3146, 1.442695
    %v3148 = vpow.pop %v3147
    %v3149 = vadd.f32 %v3145, %v3148
    %v3150 = vrcp.pop %v3149
    %v3151 = vmul.f32 %v3145, %v3150
    %v3152 = vmul.f32 %v3148, %v3150
    %v3153 = vld [vmem:[#allocation2] sm:$0xf]
    %v3154 = vlaneseq
    %v3155 = vshrl.u32 %v3154, 7
    %v3156 = vsub.s32 0, %v3155
    %v3157 = vrot.slane %v3151, %v3156
    %v3158 = vmul.f32 %v3153, %v3157
    %v3159 = vld [vmem:[%s2908] sm:$0xf]
    %v3160 = vlaneseq
    %v3161 = vshrl.u32 %v3160, 7
    %v3162 = vsub.s32 0, %v3161
    %v3163 = vrot.slane %v3152, %v3162
    %v3164 = vmul.f32 %v3159, %v3163
    %v3165 = vadd.f32 %v3158, %v3164
    %v3166 = vld [vmem:[#allocation2 + $0x4] sm:$0xf]
    %v3167 = vlaneseq
    %v3168 = vshrl.u32 %v3167, 7
    %v3169 = vsub.s32 1, %v3168
    %v3170 = vrot.slane %v3151, %v3169
    %v3171 = vmul.f32 %v3166, %v3170
    %v3172 = vld [vmem:[%s2908 + $0x4] sm:$0xf]
    %v3173 = vlaneseq
    %v3174 = vshrl.u32 %v3173, 7
    %v3175 = vsub.s32 1, %v3174
    %v3176 = vrot.slane %v3152, %v3175
    %v3177 = vmul.f32 %v3172, %v3176
    %v3178 = vadd.f32 %v3171, %v3177
    %v3180 = vrot.slane %v3178, 4
    %v3182 = vsel %vm2913, %v3165, %v3180
    %3183 = vst [vmem:[#allocation21] sm:$0xff] %v3182
    // Predicated region
    $region90: #{tpu_custom_call.1} parent=1 // pred_check
      _
    $region91: #{tpu_custom_call.1} parent=1 // pred_check_branch
      %3185 = sbr.rel (0) target = $region93
    $region92: #{tpu_custom_call.1} parent=1 // pred_region
      %s3187 = ssub.s32 128, 128
      %3188 = vsyncadd [#allocation5], %s3187
      %s3190 = sshll.u32 [#allocation21], 4
      %s3191 = int_to_ptr.vmem [resolvable:$true] %s3190
      %3193 = dma.vmem_to_hbm [thread:$0]  %s3191, 128, %s11, [#allocation5]
    $region93: #{tpu_custom_call.1} parent=1 // pred_fallthru
      _
    // Predicated region
    $region94: #{tpu_custom_call.1} parent=1 // pred_check
      _
    $region95: #{tpu_custom_call.1} parent=1 // pred_check_branch
      %3195 = sbr.rel (0) target = $region97
    $region96: #{tpu_custom_call.1} parent=1 // pred_region
      %3196 = dma.done [#allocation5], 128
    $region97: #{tpu_custom_call.1} parent=1 // pred_fallthru
      _
    %3197 = vsyncpa [#allocation4], 1
    %3198 = vsyncpa [#allocation7], 1
    %3199 = vsyncpa [#allocation10], 1
    %3200 = vsyncpa [#allocation13], 1
    %3201 = vsyncpa [#allocation16], 1
    %3202 = vsyncpa [#allocation19], 1
    %3203 = vsyncpa [#allocation5], 1

</llo_original>
